<compile_context>
chip_gen: v7x
topology: tpu7x:2x2x1
jax: 0.10.0
libtpu: 0.0.40
codegen_flags: <defaults>
</compile_context>

<pallas_src>
import functools
import math

import jax
import jax.numpy as jnp
from jax import lax
from jax.experimental import pallas as pl
from jax.experimental.pallas import tpu as pltpu

NEG_BIG = -1e30  # finite "-inf": avoids NaN for masked rows


def _layernorm(x, g, b, eps=1e-5):
    mu = jnp.mean(x, axis=-1, keepdims=True)
    var = jnp.mean((x - mu) ** 2, axis=-1, keepdims=True)
    return (x - mu) * lax.rsqrt(var + eps) * g + b


def _gelu(x):
    return 0.5 * x * (1.0 + jnp.tanh(math.sqrt(2.0 / math.pi)
                                     * (x + 0.044715 * x ** 3)))


# ----------------------------------------------------------------------------
# Fused kernel: grid = (batch_tile, layer); one TransformerBlock per grid step.
# Residual stream stays resident in the acc_ref VMEM scratch across the layer
# axis; per-layer weights are DMA'd once per batch tile and pipelined by the
# BlockSpec machinery while the current layer computes.
# ----------------------------------------------------------------------------
def transformer_stack_kernel(
    x_ref,        # [Bt, S, D]  embedded tokens (consumed at layer 0 only), f32
    pad_ref,      # [Bt, 1, S]  additive key-padding bias (0 / NEG_BIG), f32
    allpad_ref,   # [Bt, 1, 1]  1.0 if the whole sequence is padding else 0.0
    wqkv_ref,     # [1, D, 3D]  bf16
    bqkv_ref,     # [1, 1, 3D]  f32
    wout_ref,     # [1, D, D]   bf16
    bout_ref,     # [1, 1, D]   f32
    g1_ref,       # [1, 1, D]   attn_norm gamma
    be1_ref,      # [1, 1, D]   attn_norm beta
    w1_ref,       # [1, D, 4D]  bf16
    b1_ref,       # [1, 1, 4D]  f32
    w2_ref,       # [1, 4D, D]  bf16
    b2_ref,       # [1, 1, D]   f32
    g2_ref,       # [1, 1, D]   ff_norm gamma
    be2_ref,      # [1, 1, D]   ff_norm beta
    out_ref,      # [Bt, S, D]  f32
    acc_ref,      # VMEM scratch [Bt, S, D] f32 — residual stream across layers
    *,
    n_heads: int,
):
    layer = pl.program_id(1)
    n_layers = pl.num_programs(1)

    @pl.when(layer == 0)
    def _():
        acc_ref[...] = x_ref[...]

    Bt, S, D = acc_ref.shape
    H = n_heads
    Dh = D // H
    BS = Bt * S
    scale = 1.0 / math.sqrt(Dh)
    cdt = wqkv_ref.dtype                      # bf16 matmul-operand dtype

    x = acc_ref[...]                          # [Bt,S,D] f32
    x2 = x.reshape(BS, D)

    # ---- multi-head self attention ------------------------------------------
    qkv = jnp.dot(x2.astype(cdt), wqkv_ref[0],
                  preferred_element_type=jnp.float32) + bqkv_ref[0]   # [BS,3D] f32
    # pre-scale q: O(S*D) instead of O(H*S*S); head split via reshape+minor
    # transpose (same relayout an einsum with two batch dims would need).
    q = (qkv[:, :D] * scale).astype(cdt).reshape(Bt, S, H, Dh)
    k = qkv[:, D:2 * D].astype(cdt).reshape(Bt, S, H, Dh)
    v = qkv[:, 2 * D:].astype(cdt).reshape(Bt, S, H, Dh)
    qh = jnp.transpose(q, (0, 2, 1, 3)).reshape(Bt * H, S, Dh)
    kh = jnp.transpose(k, (0, 2, 1, 3)).reshape(Bt * H, S, Dh)
    vh = jnp.transpose(v, (0, 2, 1, 3)).reshape(Bt * H, S, Dh)

    # scores: head-batched, k-transpose folded into the contraction (bf16 MXU).
    scores = jnp.einsum("nqd,nkd->nqk", qh, kh,
                        preferred_element_type=jnp.float32)           # [Bt*H,S,S]
    scores = scores.reshape(Bt, H, S, S)

    # masks: causal generated in-kernel (two VPU compares), padding broadcast.
    row = lax.broadcasted_iota(jnp.int32, (S, S), 0)
    col = lax.broadcasted_iota(jnp.int32, (S, S), 1)
    causal = jnp.where(col > row, NEG_BIG, 0.0).astype(jnp.float32)   # [S,S]
    pad4 = pad_ref[...][:, :, None, :]                                # [Bt,1,1,S]
    scores = scores + causal[None, None] + pad4

    m = jnp.max(scores, axis=-1, keepdims=True)
    e = jnp.exp(scores - m)
    denom = jnp.sum(e, axis=-1, keepdims=True)
    p = e * pl.reciprocal(denom, approx=True)                         # EUP slot

    ctx = jnp.einsum("nqk,nkd->nqd",
                     p.reshape(Bt * H, S, S).astype(cdt), vh,
                     preferred_element_type=jnp.float32)              # [Bt*H,S,Dh]
    # zero fully-padded sequences on the small [.,S,Dh] context, not on p.
    ctx = ctx.reshape(Bt, H, S, Dh) * (1.0 - allpad_ref[...][:, :, :, None])
    merged = jnp.transpose(ctx, (0, 2, 1, 3)).reshape(BS, D)
    attn = jnp.dot(merged.astype(cdt), wout_ref[0],
                   preferred_element_type=jnp.float32) + bout_ref[0]

    # n_attn == 1 (self-attention only) => full_attn = attn.  LayerNorm in f32.
    h1 = _layernorm(x2 + attn, g1_ref[0], be1_ref[0])

    # ---- feed forward --------------------------------------------------------
    # TODO(synk): chunk the 4D hidden dim for production sizes (v7x VMEM).
    f = jnp.dot(h1.astype(cdt), w1_ref[0],
                preferred_element_type=jnp.float32) + b1_ref[0]
    f = _gelu(f)
    f = jnp.dot(f.astype(cdt), w2_ref[0],
                preferred_element_type=jnp.float32) + b2_ref[0]

    y = _layernorm(h1 + f, g2_ref[0], be2_ref[0])
    acc_ref[...] = y.reshape(Bt, S, D)        # residual stream stays in VMEM

    @pl.when(layer == n_layers - 1)
    def _():
        out_ref[...] = y.reshape(Bt, S, D)    # single HBM writeback per tile


# ----------------------------------------------------------------------------
# Wrapper: a single pallas_call for the whole layer stack
# ----------------------------------------------------------------------------
_WEIGHT_NAMES = ["wqkv", "bqkv", "wout", "bout", "g1", "be1",
                 "w1", "b1", "w2", "b2", "g2", "be2"]
_MATMUL_WEIGHTS = {"wqkv", "wout", "w1", "w2"}


def transformer_stack(x, pad_bias, allpad, params, n_heads,
                      compute_dtype=jnp.bfloat16):
    B, S, D = x.shape
    L = params["wqkv"].shape[0]
    Bt = B  # TODO(synk): tile the batch for large B so each tile fits VMEM.

    weights = []
    for name in _WEIGHT_NAMES:
        w = params[name]
        if name in _MATMUL_WEIGHTS:
            w = w.astype(compute_dtype)       # halve weight DMA + MXU bf16 path
        weights.append(w)

    def wspec(arr):
        return pl.BlockSpec((1,) + arr.shape[1:], lambda b, l: (l, 0, 0))

    in_specs = [
        pl.BlockSpec((Bt, S, D), lambda b, l: (b, 0, 0)),   # x (layer-0 input)
        pl.BlockSpec((Bt, 1, S), lambda b, l: (b, 0, 0)),   # padding bias
        pl.BlockSpec((Bt, 1, 1), lambda b, l: (b, 0, 0)),   # all-padded flag
    ] + [wspec(w) for w in weights]

    # Explicit scoped-VMEM limit per generation (default is only 16/32 MiB).
    try:
        vmem_limit = int(pltpu.get_tpu_info().vmem_capacity_bytes * 7 // 8)
    except Exception:  # pragma: no cover - conservative fallback
        vmem_limit = 48 * 1024 * 1024

    kernel = functools.partial(transformer_stack_kernel, n_heads=n_heads)
    return pl.pallas_call(
        kernel,
        out_shape=jax.ShapeDtypeStruct((B, S, D), jnp.float32),
        grid_spec=pltpu.PrefetchScalarGridSpec(
            num_scalar_prefetch=0,
            grid=(pl.cdiv(B, Bt), L),   # layer axis innermost: weights pipelined,
            in_specs=in_specs,          # activations resident in VMEM scratch
            out_specs=pl.BlockSpec((Bt, S, D), lambda b, l: (b, 0, 0)),
            scratch_shapes=[pltpu.VMEM((Bt, S, D), jnp.float32)],
        ),
        compiler_params=pltpu.CompilerParams(
            dimension_semantics=("parallel", "arbitrary"),
            vmem_limit_bytes=vmem_limit),
    )(x, pad_bias, allpad, *weights)


def transformer_module_forward(tokens, params, *, n_heads, padding_idx):
    # Plain-JAX glue: embedding gather + positions (cumsum over non-padding).
    padding_mask = tokens == padding_idx                       # [B, S] bool
    positions = jnp.cumsum((~padding_mask).astype(jnp.int32), axis=-1)
    positions = jnp.where(padding_mask, 0, positions)          # pos padding_idx=0

    D = params["tok_emb"].shape[1]
    x = (params["tok_emb"][tokens] * math.sqrt(D)
         + params["pos_emb"][positions]).astype(jnp.float32)

    pad_bias = jnp.where(padding_mask, NEG_BIG, 0.0).astype(jnp.float32)[:, None, :]
    allpad = jnp.all(padding_mask, axis=-1).astype(jnp.float32)[:, None, None]

    x = transformer_stack(x, pad_bias, allpad, params, n_heads)
    return x, padding_mask


# ----------------------------------------------------------------------------
# Pure-JAX f32 reference (same math, no Pallas) for validation
# ----------------------------------------------------------------------------
def reference_forward(tokens, params, *, n_heads, padding_idx):
    padding_mask = tokens == padding_idx
    positions = jnp.cumsum((~padding_mask).astype(jnp.int32), axis=-1)
    positions = jnp.where(padding_mask, 0, positions)
    D = params["tok_emb"].shape[1]
    x = params["tok_emb"][tokens] * math.sqrt(D) + params["pos_emb"][positions]

    B, S, _ = x.shape
    H = n_heads
    Dh = D // H
    L = params["wqkv"].shape[0]
    fut = jnp.triu(jnp.ones((S, S), bool), 1)

    def ln(z, g, b):
        mu = z.mean(-1, keepdims=True)
        var = ((z - mu) ** 2).mean(-1, keepdims=True)
        return (z - mu) / jnp.sqrt(var + 1e-5) * g + b

    for l in range(L):
        qkv = x @ params["wqkv"][l] + params["bqkv"][l]
        q, k, v = jnp.split(qkv, 3, axis=-1)
        q = q.reshape(B, S, H, Dh).transpose(0, 2, 1, 3)
        k = k.reshape(B, S, H, Dh).transpose(0, 2, 1, 3)
        v = v.reshape(B, S, H, Dh).transpose(0, 2, 1, 3)
        w = jnp.einsum("bhqd,bhkd->bhqk", q, k) / math.sqrt(Dh)
        w = jnp.where(fut[None, None], NEG_BIG, w)
        w = jnp.where(padding_mask[:, None, None, :], NEG_BIG, w)
        w = jax.nn.softmax(w, axis=-1)
        w = jnp.where(jnp.all(padding_mask, -1)[:, None, None, None], 0.0, w)
        a = jnp.einsum("bhqk,bhkd->bhqd", w, v)
        a = a.transpose(0, 2, 1, 3).reshape(B, S, D)
        a = a @ params["wout"][l] + params["bout"][l]
        x = ln(x + a, params["g1"][l], params["be1"][l])
        f = x @ params["w1"][l] + params["b1"][l]
        f = 0.5 * f * (1 + jnp.tanh(math.sqrt(2 / math.pi) * (f + 0.044715 * f ** 3)))
        f = f @ params["w2"][l] + params["b2"][l]
        x = ln(x + f, params["g2"][l], params["be2"][l])
    return x, padding_mask


# ----------------------------------------------------------------------------
# Deterministic parameter init (mirrors module shapes; std=0.02 like PyTorch),
# per-layer weights stacked along a leading layer axis, stored as [in, out].
# ----------------------------------------------------------------------------
def init_params(key, *, n_layers, n_embeddings, n_pos_embeddings,
                embeddings_size, padding_idx):
    D = embeddings_size
    L = n_layers
    ks = jax.random.split(key, 10)

    def nrm(k, shape):
        return 0.02 * jax.random.normal(k, shape, jnp.float32)

    tok_emb = nrm(ks[0], (n_embeddings, D)).at[padding_idx].set(0.0)
    pos_emb = nrm(ks[1], (n_pos_embeddings + 1, D)).at[0].set(0.0)
    return {
        "tok_emb": tok_emb,
        "pos_emb": pos_emb,
        "wqkv": nrm(ks[2], (L, D, 3 * D)),
        "bqkv": nrm(ks[3], (L, 1, 3 * D)),
        "wout": nrm(ks[4], (L, D, D)),
        "bout": nrm(ks[5], (L, 1, D)),
        "g1": jnp.ones((L, 1, D), jnp.float32),
        "be1": jnp.zeros((L, 1, D), jnp.float32),
        "w1": nrm(ks[6], (L, D, 4 * D)),
        "b1": nrm(ks[7], (L, 1, 4 * D)),
        "w2": nrm(ks[8], (L, 4 * D, D)),
        "b2": nrm(ks[9], (L, 1, D)),
        "g2": jnp.ones((L, 1, D), jnp.float32),
        "be2": jnp.zeros((L, 1, D), jnp.float32),
    }


if __name__ == "__main__":
    # Small shapes consistent with the module.
    B, S, D = 2, 8, 32
    n_heads = 4
    n_layers = 2
    n_embeddings = 50
    n_pos_embeddings = 16
    padding_idx = 0

    key = jax.random.PRNGKey(0)
    pkey, tkey = jax.random.split(key)
    params = init_params(pkey, n_layers=n_layers, n_embeddings=n_embeddings,
                         n_pos_embeddings=n_pos_embeddings, embeddings_size=D,
                         padding_idx=padding_idx)

    # Tokens in [1, n_embeddings); pad the tail of the second sequence.
    tokens = jax.random.randint(tkey, (B, S), 1, n_embeddings, dtype=jnp.int32)
    tokens = tokens.at[1, 5:].set(padding_idx)

    out, pad_mask = transformer_module_forward(
        tokens, params, n_heads=n_heads, padding_idx=padding_idx)
    out = jax.block_until_ready(out)

    ref_out, ref_mask = reference_forward(
        tokens, params, n_heads=n_heads, padding_idx=padding_idx)

    assert out.shape == (B, S, D) and pad_mask.shape == (B, S)
    assert bool(jnp.all(pad_mask == ref_mask))
    max_err = float(jnp.max(jnp.abs(out - ref_out)))
    # bf16 matmul operands vs f32 reference => relaxed tolerance.
    assert bool(jnp.allclose(out, ref_out, atol=2e-2, rtol=2e-2)), max_err

    print("KERNEL_OK")
</pallas_src>

<mosaic_0001>
module attributes {stable_mosaic.version = 11 : i64} {
  func.func @transformer_stack_kernel(%arg0: i32, %arg1: i32, %arg2: memref<2x8x32xf32, #tpu.memory_space<vmem>>, %arg3: memref<2x1x8xf32, #tpu.memory_space<vmem>>, %arg4: memref<2x1x1xf32, #tpu.memory_space<vmem>>, %arg5: memref<1x32x96xbf16, #tpu.memory_space<vmem>>, %arg6: memref<1x1x96xf32, #tpu.memory_space<vmem>>, %arg7: memref<1x32x32xbf16, #tpu.memory_space<vmem>>, %arg8: memref<1x1x32xf32, #tpu.memory_space<vmem>>, %arg9: memref<1x1x32xf32, #tpu.memory_space<vmem>>, %arg10: memref<1x1x32xf32, #tpu.memory_space<vmem>>, %arg11: memref<1x32x128xbf16, #tpu.memory_space<vmem>>, %arg12: memref<1x1x128xf32, #tpu.memory_space<vmem>>, %arg13: memref<1x128x32xbf16, #tpu.memory_space<vmem>>, %arg14: memref<1x1x32xf32, #tpu.memory_space<vmem>>, %arg15: memref<1x1x32xf32, #tpu.memory_space<vmem>>, %arg16: memref<1x1x32xf32, #tpu.memory_space<vmem>>, %arg17: memref<2x8x32xf32, #tpu.memory_space<vmem>>, %arg18: memref<2x8x32xf32, #tpu.memory_space<vmem>>) attributes {dimension_semantics = [#tpu.dimension_semantics<parallel>, #tpu.dimension_semantics<arbitrary>], iteration_bounds = array<i64: 1, 2>, scalar_prefetch = 0 : i64, scratch_operands = 1 : i64, tpu.core_type = #tpu.core_type<tc>, window_params = [{transform_indices = @transform_0, window_bounds = array<i64: 2, 8, 32>}, {transform_indices = @transform_1, window_bounds = array<i64: 2, 1, 8>}, {transform_indices = @transform_2, window_bounds = array<i64: 2, 1, 1>}, {transform_indices = @transform_3, window_bounds = array<i64: 1, 32, 96>}, {transform_indices = @transform_4, window_bounds = array<i64: 1, 1, 96>}, {transform_indices = @transform_5, window_bounds = array<i64: 1, 32, 32>}, {transform_indices = @transform_6, window_bounds = array<i64: 1, 1, 32>}, {transform_indices = @transform_7, window_bounds = array<i64: 1, 1, 32>}, {transform_indices = @transform_8, window_bounds = array<i64: 1, 1, 32>}, {transform_indices = @transform_9, window_bounds = array<i64: 1, 32, 128>}, {transform_indices = @transform_10, window_bounds = array<i64: 1, 1, 128>}, {transform_indices = @transform_11, window_bounds = array<i64: 1, 128, 32>}, {transform_indices = @transform_12, window_bounds = array<i64: 1, 1, 32>}, {transform_indices = @transform_13, window_bounds = array<i64: 1, 1, 32>}, {transform_indices = @transform_14, window_bounds = array<i64: 1, 1, 32>}, {transform_indices = @transform_15, window_bounds = array<i64: 2, 8, 32>}]} {
    %c0_i32 = arith.constant 0 : i32
    %0 = arith.cmpi eq, %arg1, %c0_i32 : i32
    %1 = arith.extui %0 : i1 to i32
    %c0_i32_0 = arith.constant 0 : i32
    %2 = arith.cmpi ne, %1, %c0_i32_0 : i32
    scf.if %2 {
      %c0_74 = arith.constant 0 : index
      %c0_75 = arith.constant 0 : index
      %c0_76 = arith.constant 0 : index
      %163 = vector.load %arg2[%c0_74, %c0_75, %c0_76] : memref<2x8x32xf32, #tpu.memory_space<vmem>>, vector<2x8x32xf32>
      %c0_77 = arith.constant 0 : index
      %c0_78 = arith.constant 0 : index
      %c0_79 = arith.constant 0 : index
      %164 = vector.load %arg18[%c0_77, %c0_78, %c0_79] : memref<2x8x32xf32, #tpu.memory_space<vmem>>, vector<2x8x32xf32>
      tpu.vector_store %arg18[%c0_77, %c0_78, %c0_79], %163 {strides = array<i32>} : memref<2x8x32xf32, #tpu.memory_space<vmem>>, vector<2x8x32xf32>,
    } else {
    }
    %c0 = arith.constant 0 : index
    %c0_1 = arith.constant 0 : index
    %c0_2 = arith.constant 0 : index
    %3 = vector.load %arg18[%c0, %c0_1, %c0_2] : memref<2x8x32xf32, #tpu.memory_space<vmem>>, vector<2x8x32xf32>
    %4 = vector.shape_cast %3 : vector<2x8x32xf32> to vector<16x32xf32>
    %5 = arith.truncf %4 : vector<16x32xf32> to vector<16x32xbf16>
    %c0_3 = arith.constant 0 : index
    %c0_4 = arith.constant 0 : index
    %c0_5 = arith.constant 0 : index
    %6 = vector.load %arg5[%c0_3, %c0_4, %c0_5] : memref<1x32x96xbf16, #tpu.memory_space<vmem>>, vector<1x32x96xbf16>
    %7 = vector.shape_cast %6 : vector<1x32x96xbf16> to vector<32x96xbf16>
    %cst = arith.constant dense<0.000000e+00> : vector<16x96xf32>
    %8 = tpu.matmul %5, %7, %cst {dimension_numbers = #tpu.dot_dimension_numbers<[1], [0], [0], [1], [0, 0, 1, 1], [], []>} : vector<16x32xbf16>, vector<32x96xbf16>, vector<16x96xf32> -> vector<16x96xf32>
    %c0_6 = arith.constant 0 : index
    %c0_7 = arith.constant 0 : index
    %c0_8 = arith.constant 0 : index
    %9 = vector.load %arg6[%c0_6, %c0_7, %c0_8] : memref<1x1x96xf32, #tpu.memory_space<vmem>>, vector<1x1x96xf32>
    %10 = vector.shape_cast %9 : vector<1x1x96xf32> to vector<1x96xf32>
    %11 = vector.broadcast %10 : vector<1x96xf32> to vector<16x96xf32>
    %12 = arith.addf %8, %11 : vector<16x96xf32>
    %13 = vector.extract_strided_slice %12 {offsets = [0, 0], sizes = [16, 32], strides = [1, 1]} : vector<16x96xf32> to vector<16x32xf32>
    %cst_9 = arith.constant 0.353553385 : f32
    %14 = vector.broadcast %cst_9 : f32 to vector<16x32xf32>
    %15 = arith.mulf %13, %14 : vector<16x32xf32>
    %16 = arith.truncf %15 : vector<16x32xf32> to vector<16x32xbf16>
    %17 = vector.shape_cast %16 : vector<16x32xbf16> to vector<2x8x4x8xbf16>
    %18 = vector.extract_strided_slice %12 {offsets = [0, 32], sizes = [16, 32], strides = [1, 1]} : vector<16x96xf32> to vector<16x32xf32>
    %19 = arith.truncf %18 : vector<16x32xf32> to vector<16x32xbf16>
    %20 = vector.shape_cast %19 : vector<16x32xbf16> to vector<2x8x4x8xbf16>
    %21 = vector.extract_strided_slice %12 {offsets = [0, 64], sizes = [16, 32], strides = [1, 1]} : vector<16x96xf32> to vector<16x32xf32>
    %22 = arith.truncf %21 : vector<16x32xf32> to vector<16x32xbf16>
    %23 = vector.shape_cast %22 : vector<16x32xbf16> to vector<2x8x4x8xbf16>
    %24 = tpu.transpose %17, [0, 2, 1, 3] : vector<2x8x4x8xbf16> -> vector<2x4x8x8xbf16>
    %25 = vector.shape_cast %24 : vector<2x4x8x8xbf16> to vector<8x8x8xbf16>
    %26 = tpu.transpose %20, [0, 2, 1, 3] : vector<2x8x4x8xbf16> -> vector<2x4x8x8xbf16>
    %27 = vector.shape_cast %26 : vector<2x4x8x8xbf16> to vector<8x8x8xbf16>
    %28 = tpu.transpose %23, [0, 2, 1, 3] : vector<2x8x4x8xbf16> -> vector<2x4x8x8xbf16>
    %29 = vector.shape_cast %28 : vector<2x4x8x8xbf16> to vector<8x8x8xbf16>
    "tpu.trace_start"() <{level = 10 : i32, message = "nqd,nkd->nqk"}> : () -> ()
    %cst_10 = arith.constant dense<0.000000e+00> : vector<8x8x8xf32>
    %30 = tpu.matmul %25, %27, %cst_10 {dimension_numbers = #tpu.dot_dimension_numbers<[2], [2], [1], [1], [0, 0, 0, 1, 1, 1], [0], [0]>} : vector<8x8x8xbf16>, vector<8x8x8xbf16>, vector<8x8x8xf32> -> vector<8x8x8xf32>
    "tpu.trace_stop"() : () -> ()
    %31 = vector.shape_cast %30 : vector<8x8x8xf32> to vector<2x4x8x8xf32>
    %32 = tpu.iota {dimensions = array<i32: 0>} : vector<8x8xi32>
    %33 = tpu.iota {dimensions = array<i32: 1>} : vector<8x8xi32>
    %34 = arith.cmpi sgt, %33, %32 : vector<8x8xi32>
    %cst_11 = arith.constant -1.000000e+30 : f32
    %cst_12 = arith.constant 0.000000e+00 : f32
    %35 = vector.broadcast %cst_11 : f32 to vector<8x8xf32>
    %36 = vector.broadcast %cst_12 : f32 to vector<8x8xf32>
    %37 = arith.select %34, %35, %36 : vector<8x8xi1>, vector<8x8xf32>
    %c0_13 = arith.constant 0 : index
    %c0_14 = arith.constant 0 : index
    %c0_15 = arith.constant 0 : index
    %38 = vector.load %arg3[%c0_13, %c0_14, %c0_15] : memref<2x1x8xf32, #tpu.memory_space<vmem>>, vector<2x1x8xf32>
    %39 = vector.shape_cast %38 : vector<2x1x8xf32> to vector<2x1x1x8xf32>
    %40 = vector.shape_cast %37 : vector<8x8xf32> to vector<1x1x8x8xf32>
    %41 = vector.broadcast %40 : vector<1x1x8x8xf32> to vector<2x4x8x8xf32>
    %42 = arith.addf %31, %41 : vector<2x4x8x8xf32>
    %43 = vector.broadcast %39 : vector<2x1x1x8xf32> to vector<2x4x8x8xf32>
    %44 = arith.addf %42, %43 : vector<2x4x8x8xf32>
    %cst_16 = arith.constant dense<0xFF800000> : vector<2x4x8xf32>
    %45 = vector.multi_reduction <maximumf>, %44, %cst_16 [3] : vector<2x4x8x8xf32> to vector<2x4x8xf32>
    %46 = vector.shape_cast %45 : vector<2x4x8xf32> to vector<2x4x8x1xf32>
    %47 = vector.broadcast %46 : vector<2x4x8x1xf32> to vector<2x4x8x8xf32>
    %48 = arith.subf %44, %47 : vector<2x4x8x8xf32>
    %49 = math.exp %48 : vector<2x4x8x8xf32>
    %cst_17 = arith.constant dense<0.000000e+00> : vector<2x4x8xf32>
    %50 = vector.multi_reduction <add>, %49, %cst_17 [3] : vector<2x4x8x8xf32> to vector<2x4x8xf32>
    %51 = vector.shape_cast %50 : vector<2x4x8xf32> to vector<2x4x8x1xf32>
    %52 = tpu.reciprocal %51 {approx = true} : vector<2x4x8x1xf32> -> vector<2x4x8x1xf32>
    %53 = vector.broadcast %52 : vector<2x4x8x1xf32> to vector<2x4x8x8xf32>
    %54 = arith.mulf %49, %53 : vector<2x4x8x8xf32>
    %55 = vector.shape_cast %54 : vector<2x4x8x8xf32> to vector<8x8x8xf32>
    %56 = arith.truncf %55 : vector<8x8x8xf32> to vector<8x8x8xbf16>
    "tpu.trace_start"() <{level = 10 : i32, message = "nqk,nkd->nqd"}> : () -> ()
    %cst_18 = arith.constant dense<0.000000e+00> : vector<8x8x8xf32>
    %57 = tpu.matmul %56, %29, %cst_18 {dimension_numbers = #tpu.dot_dimension_numbers<[2], [1], [1], [2], [0, 0, 0, 1, 1, 2], [0], [0]>} : vector<8x8x8xbf16>, vector<8x8x8xbf16>, vector<8x8x8xf32> -> vector<8x8x8xf32>
    "tpu.trace_stop"() : () -> ()
    %58 = vector.shape_cast %57 : vector<8x8x8xf32> to vector<2x4x8x8xf32>
    %c0_19 = arith.constant 0 : index
    %c0_20 = arith.constant 0 : index
    %c0_21 = arith.constant 0 : index
    %59 = vector.load %arg4[%c0_19, %c0_20, %c0_21] : memref<2x1x1xf32, #tpu.memory_space<vmem>>, vector<2x1x1xf32>
    %60 = vector.shape_cast %59 : vector<2x1x1xf32> to vector<2x1x1x1xf32>
    %cst_22 = arith.constant 1.000000e+00 : f32
    %61 = vector.broadcast %cst_22 : f32 to vector<2x1x1x1xf32>
    %62 = arith.subf %61, %60 : vector<2x1x1x1xf32>
    %63 = vector.broadcast %62 : vector<2x1x1x1xf32> to vector<2x4x8x8xf32>
    %64 = arith.mulf %58, %63 : vector<2x4x8x8xf32>
    %65 = tpu.transpose %64, [0, 2, 1, 3] : vector<2x4x8x8xf32> -> vector<2x8x4x8xf32>
    %66 = vector.shape_cast %65 : vector<2x8x4x8xf32> to vector<16x32xf32>
    %67 = arith.truncf %66 : vector<16x32xf32> to vector<16x32xbf16>
    %c0_23 = arith.constant 0 : index
    %c0_24 = arith.constant 0 : index
    %c0_25 = arith.constant 0 : index
    %68 = vector.load %arg7[%c0_23, %c0_24, %c0_25] : memref<1x32x32xbf16, #tpu.memory_space<vmem>>, vector<1x32x32xbf16>
    %69 = vector.shape_cast %68 : vector<1x32x32xbf16> to vector<32x32xbf16>
    %cst_26 = arith.constant dense<0.000000e+00> : vector<16x32xf32>
    %70 = tpu.matmul %67, %69, %cst_26 {dimension_numbers = #tpu.dot_dimension_numbers<[1], [0], [0], [1], [0, 0, 1, 1], [], []>} : vector<16x32xbf16>, vector<32x32xbf16>, vector<16x32xf32> -> vector<16x32xf32>
    %c0_27 = arith.constant 0 : index
    %c0_28 = arith.constant 0 : index
    %c0_29 = arith.constant 0 : index
    %71 = vector.load %arg8[%c0_27, %c0_28, %c0_29] : memref<1x1x32xf32, #tpu.memory_space<vmem>>, vector<1x1x32xf32>
    %72 = vector.shape_cast %71 : vector<1x1x32xf32> to vector<1x32xf32>
    %73 = vector.broadcast %72 : vector<1x32xf32> to vector<16x32xf32>
    %74 = arith.addf %70, %73 : vector<16x32xf32>
    %75 = arith.addf %4, %74 : vector<16x32xf32>
    %c0_30 = arith.constant 0 : index
    %c0_31 = arith.constant 0 : index
    %c0_32 = arith.constant 0 : index
    %76 = vector.load %arg9[%c0_30, %c0_31, %c0_32] : memref<1x1x32xf32, #tpu.memory_space<vmem>>, vector<1x1x32xf32>
    %77 = vector.shape_cast %76 : vector<1x1x32xf32> to vector<1x32xf32>
    %c0_33 = arith.constant 0 : index
    %c0_34 = arith.constant 0 : index
    %c0_35 = arith.constant 0 : index
    %78 = vector.load %arg10[%c0_33, %c0_34, %c0_35] : memref<1x1x32xf32, #tpu.memory_space<vmem>>, vector<1x1x32xf32>
    %79 = vector.shape_cast %78 : vector<1x1x32xf32> to vector<1x32xf32>
    %cst_36 = arith.constant dense<0.000000e+00> : vector<16xf32>
    %80 = vector.multi_reduction <add>, %75, %cst_36 [1] : vector<16x32xf32> to vector<16xf32>
    %81 = vector.shape_cast %80 : vector<16xf32> to vector<16x1xf32>
    %cst_37 = arith.constant 3.200000e+01 : f32
    %82 = vector.broadcast %cst_37 : f32 to vector<16x1xf32>
    %83 = arith.divf %81, %82 : vector<16x1xf32>
    %84 = vector.broadcast %83 : vector<16x1xf32> to vector<16x32xf32>
    %85 = arith.subf %75, %84 : vector<16x32xf32>
    %86 = arith.mulf %85, %85 : vector<16x32xf32>
    %cst_38 = arith.constant dense<0.000000e+00> : vector<16xf32>
    %87 = vector.multi_reduction <add>, %86, %cst_38 [1] : vector<16x32xf32> to vector<16xf32>
    %88 = vector.shape_cast %87 : vector<16xf32> to vector<16x1xf32>
    %cst_39 = arith.constant 3.200000e+01 : f32
    %89 = vector.broadcast %cst_39 : f32 to vector<16x1xf32>
    %90 = arith.divf %88, %89 : vector<16x1xf32>
    %91 = vector.broadcast %83 : vector<16x1xf32> to vector<16x32xf32>
    %92 = arith.subf %75, %91 : vector<16x32xf32>
    %cst_40 = arith.constant 9.99999974E-6 : f32
    %93 = vector.broadcast %cst_40 : f32 to vector<16x1xf32>
    %94 = arith.addf %90, %93 : vector<16x1xf32>
    %95 = math.rsqrt %94 : vector<16x1xf32>
    %96 = vector.broadcast %95 : vector<16x1xf32> to vector<16x32xf32>
    %97 = arith.mulf %92, %96 : vector<16x32xf32>
    %98 = vector.broadcast %77 : vector<1x32xf32> to vector<16x32xf32>
    %99 = arith.mulf %97, %98 : vector<16x32xf32>
    %100 = vector.broadcast %79 : vector<1x32xf32> to vector<16x32xf32>
    %101 = arith.addf %99, %100 : vector<16x32xf32>
    %102 = arith.truncf %101 : vector<16x32xf32> to vector<16x32xbf16>
    %c0_41 = arith.constant 0 : index
    %c0_42 = arith.constant 0 : index
    %c0_43 = arith.constant 0 : index
    %103 = vector.load %arg11[%c0_41, %c0_42, %c0_43] : memref<1x32x128xbf16, #tpu.memory_space<vmem>>, vector<1x32x128xbf16>
    %104 = vector.shape_cast %103 : vector<1x32x128xbf16> to vector<32x128xbf16>
    %cst_44 = arith.constant dense<0.000000e+00> : vector<16x128xf32>
    %105 = tpu.matmul %102, %104, %cst_44 {dimension_numbers = #tpu.dot_dimension_numbers<[1], [0], [0], [1], [0, 0, 1, 1], [], []>} : vector<16x32xbf16>, vector<32x128xbf16>, vector<16x128xf32> -> vector<16x128xf32>
    %c0_45 = arith.constant 0 : index
    %c0_46 = arith.constant 0 : index
    %c0_47 = arith.constant 0 : index
    %106 = vector.load %arg12[%c0_45, %c0_46, %c0_47] : memref<1x1x128xf32, #tpu.memory_space<vmem>>, vector<1x1x128xf32>
    %107 = vector.shape_cast %106 : vector<1x1x128xf32> to vector<1x128xf32>
    %108 = vector.broadcast %107 : vector<1x128xf32> to vector<16x128xf32>
    %109 = arith.addf %105, %108 : vector<16x128xf32>
    %cst_48 = arith.constant 5.000000e-01 : f32
    %110 = vector.broadcast %cst_48 : f32 to vector<16x128xf32>
    %111 = arith.mulf %110, %109 : vector<16x128xf32>
    %112 = arith.mulf %109, %109 : vector<16x128xf32>
    %113 = arith.mulf %109, %112 : vector<16x128xf32>
    %cst_49 = arith.constant 4.471500e-02 : f32
    %114 = vector.broadcast %cst_49 : f32 to vector<16x128xf32>
    %115 = arith.mulf %114, %113 : vector<16x128xf32>
    %116 = arith.addf %109, %115 : vector<16x128xf32>
    %cst_50 = arith.constant 0.797884583 : f32
    %117 = vector.broadcast %cst_50 : f32 to vector<16x128xf32>
    %118 = arith.mulf %117, %116 : vector<16x128xf32>
    %119 = math.tanh %118 : vector<16x128xf32>
    %cst_51 = arith.constant 1.000000e+00 : f32
    %120 = vector.broadcast %cst_51 : f32 to vector<16x128xf32>
    %121 = arith.addf %120, %119 : vector<16x128xf32>
    %122 = arith.mulf %111, %121 : vector<16x128xf32>
    %123 = arith.truncf %122 : vector<16x128xf32> to vector<16x128xbf16>
    %c0_52 = arith.constant 0 : index
    %c0_53 = arith.constant 0 : index
    %c0_54 = arith.constant 0 : index
    %124 = vector.load %arg13[%c0_52, %c0_53, %c0_54] : memref<1x128x32xbf16, #tpu.memory_space<vmem>>, vector<1x128x32xbf16>
    %125 = vector.shape_cast %124 : vector<1x128x32xbf16> to vector<128x32xbf16>
    %cst_55 = arith.constant dense<0.000000e+00> : vector<16x32xf32>
    %126 = tpu.matmul %123, %125, %cst_55 {dimension_numbers = #tpu.dot_dimension_numbers<[1], [0], [0], [1], [0, 0, 1, 1], [], []>} : vector<16x128xbf16>, vector<128x32xbf16>, vector<16x32xf32> -> vector<16x32xf32>
    %c0_56 = arith.constant 0 : index
    %c0_57 = arith.constant 0 : index
    %c0_58 = arith.constant 0 : index
    %127 = vector.load %arg14[%c0_56, %c0_57, %c0_58] : memref<1x1x32xf32, #tpu.memory_space<vmem>>, vector<1x1x32xf32>
    %128 = vector.shape_cast %127 : vector<1x1x32xf32> to vector<1x32xf32>
    %129 = vector.broadcast %128 : vector<1x32xf32> to vector<16x32xf32>
    %130 = arith.addf %126, %129 : vector<16x32xf32>
    %131 = arith.addf %101, %130 : vector<16x32xf32>
    %c0_59 = arith.constant 0 : index
    %c0_60 = arith.constant 0 : index
    %c0_61 = arith.constant 0 : index
    %132 = vector.load %arg15[%c0_59, %c0_60, %c0_61] : memref<1x1x32xf32, #tpu.memory_space<vmem>>, vector<1x1x32xf32>
    %133 = vector.shape_cast %132 : vector<1x1x32xf32> to vector<1x32xf32>
    %c0_62 = arith.constant 0 : index
    %c0_63 = arith.constant 0 : index
    %c0_64 = arith.constant 0 : index
    %134 = vector.load %arg16[%c0_62, %c0_63, %c0_64] : memref<1x1x32xf32, #tpu.memory_space<vmem>>, vector<1x1x32xf32>
    %135 = vector.shape_cast %134 : vector<1x1x32xf32> to vector<1x32xf32>
    %cst_65 = arith.constant dense<0.000000e+00> : vector<16xf32>
    %136 = vector.multi_reduction <add>, %131, %cst_65 [1] : vector<16x32xf32> to vector<16xf32>
    %137 = vector.shape_cast %136 : vector<16xf32> to vector<16x1xf32>
    %cst_66 = arith.constant 3.200000e+01 : f32
    %138 = vector.broadcast %cst_66 : f32 to vector<16x1xf32>
    %139 = arith.divf %137, %138 : vector<16x1xf32>
    %140 = vector.broadcast %139 : vector<16x1xf32> to vector<16x32xf32>
    %141 = arith.subf %131, %140 : vector<16x32xf32>
    %142 = arith.mulf %141, %141 : vector<16x32xf32>
    %cst_67 = arith.constant dense<0.000000e+00> : vector<16xf32>
    %143 = vector.multi_reduction <add>, %142, %cst_67 [1] : vector<16x32xf32> to vector<16xf32>
    %144 = vector.shape_cast %143 : vector<16xf32> to vector<16x1xf32>
    %cst_68 = arith.constant 3.200000e+01 : f32
    %145 = vector.broadcast %cst_68 : f32 to vector<16x1xf32>
    %146 = arith.divf %144, %145 : vector<16x1xf32>
    %147 = vector.broadcast %139 : vector<16x1xf32> to vector<16x32xf32>
    %148 = arith.subf %131, %147 : vector<16x32xf32>
    %cst_69 = arith.constant 9.99999974E-6 : f32
    %149 = vector.broadcast %cst_69 : f32 to vector<16x1xf32>
    %150 = arith.addf %146, %149 : vector<16x1xf32>
    %151 = math.rsqrt %150 : vector<16x1xf32>
    %152 = vector.broadcast %151 : vector<16x1xf32> to vector<16x32xf32>
    %153 = arith.mulf %148, %152 : vector<16x32xf32>
    %154 = vector.broadcast %133 : vector<1x32xf32> to vector<16x32xf32>
    %155 = arith.mulf %153, %154 : vector<16x32xf32>
    %156 = vector.broadcast %135 : vector<1x32xf32> to vector<16x32xf32>
    %157 = arith.addf %155, %156 : vector<16x32xf32>
    %158 = vector.shape_cast %157 : vector<16x32xf32> to vector<2x8x32xf32>
    %c0_70 = arith.constant 0 : index
    %c0_71 = arith.constant 0 : index
    %c0_72 = arith.constant 0 : index
    %159 = vector.load %arg18[%c0_70, %c0_71, %c0_72] : memref<2x8x32xf32, #tpu.memory_space<vmem>>, vector<2x8x32xf32>
    tpu.vector_store %arg18[%c0_70, %c0_71, %c0_72], %158 {strides = array<i32>} : memref<2x8x32xf32, #tpu.memory_space<vmem>>, vector<2x8x32xf32>,
    %c1_i32 = arith.constant 1 : i32
    %160 = arith.cmpi eq, %arg1, %c1_i32 : i32
    %161 = arith.extui %160 : i1 to i32
    %c0_i32_73 = arith.constant 0 : i32
    %162 = arith.cmpi ne, %161, %c0_i32_73 : i32
    scf.if %162 {
      %163 = vector.shape_cast %157 : vector<16x32xf32> to vector<2x8x32xf32>
      %c0_74 = arith.constant 0 : index
      %c0_75 = arith.constant 0 : index
      %c0_76 = arith.constant 0 : index
      %164 = vector.load %arg17[%c0_74, %c0_75, %c0_76] : memref<2x8x32xf32, #tpu.memory_space<vmem>>, vector<2x8x32xf32>
      tpu.vector_store %arg17[%c0_74, %c0_75, %c0_76], %163 {strides = array<i32>} : memref<2x8x32xf32, #tpu.memory_space<vmem>>, vector<2x8x32xf32>,
    } else {
    }
    return
  }
  func.func @transform_0(%arg0: i32, %arg1: i32) -> (i32, i32, i32) {
    %c0_i32 = arith.constant 0 : i32
    %c0_i32_0 = arith.constant 0 : i32
    %c0_i32_1 = arith.constant 0 : i32
    return %arg0, %c0_i32, %c0_i32_0 : i32, i32, i32
  }
  func.func @transform_1(%arg0: i32, %arg1: i32) -> (i32, i32, i32) {
    %c0_i32 = arith.constant 0 : i32
    %c0_i32_0 = arith.constant 0 : i32
    %c0_i32_1 = arith.constant 0 : i32
    return %arg0, %c0_i32, %c0_i32_0 : i32, i32, i32
  }
  func.func @transform_2(%arg0: i32, %arg1: i32) -> (i32, i32, i32) {
    %c0_i32 = arith.constant 0 : i32
    %c0_i32_0 = arith.constant 0 : i32
    %c0_i32_1 = arith.constant 0 : i32
    return %arg0, %c0_i32, %c0_i32_0 : i32, i32, i32
  }
  func.func @transform_3(%arg0: i32, %arg1: i32) -> (i32, i32, i32) {
    %c0_i32 = arith.constant 0 : i32
    %c0_i32_0 = arith.constant 0 : i32
    %c0_i32_1 = arith.constant 0 : i32
    return %arg1, %c0_i32, %c0_i32_0 : i32, i32, i32
  }
  func.func @transform_4(%arg0: i32, %arg1: i32) -> (i32, i32, i32) {
    %c0_i32 = arith.constant 0 : i32
    %c0_i32_0 = arith.constant 0 : i32
    %c0_i32_1 = arith.constant 0 : i32
    return %arg1, %c0_i32, %c0_i32_0 : i32, i32, i32
  }
  func.func @transform_5(%arg0: i32, %arg1: i32) -> (i32, i32, i32) {
    %c0_i32 = arith.constant 0 : i32
    %c0_i32_0 = arith.constant 0 : i32
    %c0_i32_1 = arith.constant 0 : i32
    return %arg1, %c0_i32, %c0_i32_0 : i32, i32, i32
  }
  func.func @transform_6(%arg0: i32, %arg1: i32) -> (i32, i32, i32) {
    %c0_i32 = arith.constant 0 : i32
    %c0_i32_0 = arith.constant 0 : i32
    %c0_i32_1 = arith.constant 0 : i32
    return %arg1, %c0_i32, %c0_i32_0 : i32, i32, i32
  }
  func.func @transform_7(%arg0: i32, %arg1: i32) -> (i32, i32, i32) {
    %c0_i32 = arith.constant 0 : i32
    %c0_i32_0 = arith.constant 0 : i32
    %c0_i32_1 = arith.constant 0 : i32
    return %arg1, %c0_i32, %c0_i32_0 : i32, i32, i32
  }
  func.func @transform_8(%arg0: i32, %arg1: i32) -> (i32, i32, i32) {
    %c0_i32 = arith.constant 0 : i32
    %c0_i32_0 = arith.constant 0 : i32
    %c0_i32_1 = arith.constant 0 : i32
    return %arg1, %c0_i32, %c0_i32_0 : i32, i32, i32
  }
  func.func @transform_9(%arg0: i32, %arg1: i32) -> (i32, i32, i32) {
    %c0_i32 = arith.constant 0 : i32
    %c0_i32_0 = arith.constant 0 : i32
    %c0_i32_1 = arith.constant 0 : i32
    return %arg1, %c0_i32, %c0_i32_0 : i32, i32, i32
  }
  func.func @transform_10(%arg0: i32, %arg1: i32) -> (i32, i32, i32) {
    %c0_i32 = arith.constant 0 : i32
    %c0_i32_0 = arith.constant 0 : i32
    %c0_i32_1 = arith.constant 0 : i32
    return %arg1, %c0_i32, %c0_i32_0 : i32, i32, i32
  }
  func.func @transform_11(%arg0: i32, %arg1: i32) -> (i32, i32, i32) {
    %c0_i32 = arith.constant 0 : i32
    %c0_i32_0 = arith.constant 0 : i32
    %c0_i32_1 = arith.constant 0 : i32
    return %arg1, %c0_i32, %c0_i32_0 : i32, i32, i32
  }
  func.func @transform_12(%arg0: i32, %arg1: i32) -> (i32, i32, i32) {
    %c0_i32 = arith.constant 0 : i32
    %c0_i32_0 = arith.constant 0 : i32
    %c0_i32_1 = arith.constant 0 : i32
    return %arg1, %c0_i32, %c0_i32_0 : i32, i32, i32
  }
  func.func @transform_13(%arg0: i32, %arg1: i32) -> (i32, i32, i32) {
    %c0_i32 = arith.constant 0 : i32
    %c0_i32_0 = arith.constant 0 : i32
    %c0_i32_1 = arith.constant 0 : i32
    return %arg1, %c0_i32, %c0_i32_0 : i32, i32, i32
  }
  func.func @transform_14(%arg0: i32, %arg1: i32) -> (i32, i32, i32) {
    %c0_i32 = arith.constant 0 : i32
    %c0_i32_0 = arith.constant 0 : i32
    %c0_i32_1 = arith.constant 0 : i32
    return %arg1, %c0_i32, %c0_i32_0 : i32, i32, i32
  }
  func.func @transform_15(%arg0: i32, %arg1: i32) -> (i32, i32, i32) {
    %c0_i32 = arith.constant 0 : i32
    %c0_i32_0 = arith.constant 0 : i32
    %c0_i32_1 = arith.constant 0 : i32
    return %arg0, %c0_i32, %c0_i32_0 : i32, i32, i32
  }
}

</mosaic_0001>

<llo_original>
// kernel: tpu_custom_call.1
$region0: #{tpu_custom_call.1}
  #allocation0 [shape = 'u32[]', space=smem, size = 0x4, offset = 0x4, fixed_abs, tag = 'smem constant byte address 0x4 - core index']
  #allocation1 [shape = 'u32[144,128]{1,0:T(1,128)}', space=vmem, size = 0x12000, scoped, tag = 'internal scratch']
  #allocation2 [shape = 'f32[2,8,32]{2,1,0:T(8,128)}', space=vmem, size = 0x2000, scoped, tag = 'scratch operand']
  %s0 = inlined_call_operand.vmem [shape: f32[2,8,32], index: 0, kind: input, shape index: {}]
  %s1 = inlined_call_operand.vmem [shape: f32[2,1,8], index: 1, kind: input, shape index: {}]
  %s2 = inlined_call_operand.vmem [shape: f32[2,1,1], index: 2, kind: input, shape index: {}]
  %s3 = inlined_call_operand.vmem [shape: bf16[2,32,96], index: 3, kind: input, shape index: {}]
  %s4 = inlined_call_operand.vmem [shape: f32[2,1,96], index: 4, kind: input, shape index: {}]
  %s5 = inlined_call_operand.vmem [shape: bf16[2,32,32], index: 5, kind: input, shape index: {}]
  %s6 = inlined_call_operand.vmem [shape: f32[2,1,32], index: 6, kind: input, shape index: {}]
  %s7 = inlined_call_operand.vmem [shape: f32[2,1,32], index: 7, kind: input, shape index: {}]
  %s8 = inlined_call_operand.vmem [shape: f32[2,1,32], index: 8, kind: input, shape index: {}]
  %s9 = inlined_call_operand.vmem [shape: bf16[2,32,128], index: 9, kind: input, shape index: {}]
  %s10 = inlined_call_operand.vmem [shape: f32[2,1,128], index: 10, kind: input, shape index: {}]
  %s11 = inlined_call_operand.vmem [shape: bf16[2,128,32], index: 11, kind: input, shape index: {}]
  %s12 = inlined_call_operand.vmem [shape: f32[2,1,32], index: 12, kind: input, shape index: {}]
  %s13 = inlined_call_operand.vmem [shape: f32[2,1,32], index: 13, kind: input, shape index: {}]
  %s14 = inlined_call_operand.vmem [shape: f32[2,1,32], index: 14, kind: input, shape index: {}]
  %s15 = inlined_call_operand.hbm [shape: f32[2,8,32], index: 15, kind: output, shape index: {}]
  %s16 = sld [smem:[#allocation0]]
  $region101: #{tpu_custom_call.1} parent=0
    _
  %s18 = ssub.s32 1, %s16
  %s19 = scalar_select 0, %s18, %s16
  $region1: #{tpu_custom_call.1} parent=0
    #allocation3 [shape = 'u8[8192]{0}', space=vmem, size = 0x2000, scoped, tag = 'output window, operand 0, single buffered']
    #allocation4 [shape = 's32[2]{0}', space=sflag, size = 0x8, scoped, tag = 'scoped memory for tpu_custom_call.1']
    %20 = vsyncpa [#allocation4], 0
    loop: start=0, step=1, limit=4
    $region2: #{tpu_custom_call.1} parent=1 // loop_pre_header
      _
    $region3: #{tpu_custom_call.1} parent=1 // loop_header
      %s22 = sphi 0, %s26
      %p23 = scmp.ge.s32.totalorder %s22, 4
      %s29 = sphi 0, %s41
      %s30 = sphi 0, %s37
      %s31 = sphi 0, %s29
      %s32 = sphi 0, %s30
      %s33 = sphi 0, %s31
      %s34 = sphi 0, %s32
      %s44 = sphi 0, %s46
      %s47 = sphi 0, %s44
      %s48 = sphi 0, %s47
      %s64 = sphi 0, %s48
      %s70 = sphi 0, %s72
      %s73 = sphi 0, %s70
      %s74 = sphi 0, %s73
      %s90 = sphi 0, %s74
      %s96 = sphi 0, %s98
      %s99 = sphi 0, %s96
      %s100 = sphi 0, %s99
      %s116 = sphi 0, %s100
      %s122 = sphi 0, %s124
      %s125 = sphi 0, %s122
      %s126 = sphi 0, %s125
      %s142 = sphi 0, %s126
      %s148 = sphi 0, %s150
      %s151 = sphi 0, %s148
      %s152 = sphi 0, %s151
      %s168 = sphi 0, %s152
      %s174 = sphi 0, %s176
      %s177 = sphi 0, %s174
      %s178 = sphi 0, %s177
      %s194 = sphi 0, %s178
      %s200 = sphi 0, %s202
      %s203 = sphi 0, %s200
      %s204 = sphi 0, %s203
      %s220 = sphi 0, %s204
      %s226 = sphi 0, %s228
      %s229 = sphi 0, %s226
      %s230 = sphi 0, %s229
      %s246 = sphi 0, %s230
      %s252 = sphi 0, %s254
      %s255 = sphi 0, %s252
      %s256 = sphi 0, %s255
      %s272 = sphi 0, %s256
      %s278 = sphi 0, %s280
      %s281 = sphi 0, %s278
      %s282 = sphi 0, %s281
      %s298 = sphi 0, %s282
      %s304 = sphi 0, %s306
      %s307 = sphi 0, %s304
      %s308 = sphi 0, %s307
      %s324 = sphi 0, %s308
      %s330 = sphi 0, %s332
      %s333 = sphi 0, %s330
      %s334 = sphi 0, %s333
      %s350 = sphi 0, %s334
      %s356 = sphi 0, %s358
      %s359 = sphi 0, %s356
      %s360 = sphi 0, %s359
      %s376 = sphi 0, %s360
      %s382 = sphi 0, %s384
      %s385 = sphi 0, %s382
      %s386 = sphi 0, %s385
      %s402 = sphi 0, %s386
      %s408 = sphi 0, %s410
      %s411 = sphi 0, %s408
      %s412 = sphi 0, %s411
      %s428 = sphi 0, %s412
      %s434 = sphi 0, %s436
      %s437 = sphi 0, %s434
      %s438 = sphi 0, %s437
      %s454 = sphi 0, %s438
    $region4: #{tpu_custom_call.1} parent=1 // loop_header_branch
      %25 = sbr.rel (%p23) target = $region8
    $region5: #{tpu_custom_call.1} parent=1 // loop_body
      %s27 = ssub.s32 %s22, 1
      %s28 = ssub.s32 %s22, 2
      %s35 = sadd.s32 1, %s30
      %p36 = scmp.ge.s32.totalorder %s35, 2
      %s37 = scalar_select %p36, 0, %s35
      %s38 = sadd.s32 1, %s29
      %s39 = scalar_select %p36, %s38, %s29
      %p40 = scmp.ge.s32.totalorder %s39, 1
      %s41 = scalar_select %p40, 0, %s39
      %s42 = ssub.s32 %s29, %s41
      %p43 = scmp.eq.s32.totalorder %s42, 0
      %s45 = sadd.s32 %s44, 1
      %s46 = scalar_select %p43, %s44, %s45
      %p49 = pneg %p43
      %p50 = scmp.eq.s32.totalorder %s22, 1
      %p51 = por %p49, %p50
      %p52 = scmp.ne.s32.totalorder %s44, %s47
      %p53 = scmp.eq.s32.totalorder %s22, 0
      %p54 = por %p52, %p53
      %p55 = scmp.ne.s32.totalorder %s44, %s47
      %p56 = scmp.eq.s32.totalorder %s27, 1
      %p57 = por %p55, %p56
      %p58 = scmp.ne.s32.totalorder %s47, %s48
      %p59 = scmp.eq.s32.totalorder %s27, 0
      %p60 = por %p58, %p59
      %p61 = scmp.ne.s32.totalorder %s47, %s48
      %p62 = scmp.eq.s32.totalorder %s28, 1
      %p63 = por %p61, %p62
      %p65 = scmp.ne.s32.totalorder %s48, %s64
      %p66 = scmp.eq.s32.totalorder %s28, 0
      %p67 = por %p65, %p66
      %s68 = ssub.s32 %s29, %s41
      %p69 = scmp.eq.s32.totalorder %s68, 0
      %s71 = sadd.s32 %s70, 1
      %s72 = scalar_select %p69, %s70, %s71
      %p75 = pneg %p69
      %p76 = scmp.eq.s32.totalorder %s22, 1
      %p77 = por %p75, %p76
      %p78 = scmp.ne.s32.totalorder %s70, %s73
      %p79 = scmp.eq.s32.totalorder %s22, 0
      %p80 = por %p78, %p79
      %p81 = scmp.ne.s32.totalorder %s70, %s73
      %p82 = scmp.eq.s32.totalorder %s27, 1
      %p83 = por %p81, %p82
      %p84 = scmp.ne.s32.totalorder %s73, %s74
      %p85 = scmp.eq.s32.totalorder %s27, 0
      %p86 = por %p84, %p85
      %p87 = scmp.ne.s32.totalorder %s73, %s74
      %p88 = scmp.eq.s32.totalorder %s28, 1
      %p89 = por %p87, %p88
      %p91 = scmp.ne.s32.totalorder %s74, %s90
      %p92 = scmp.eq.s32.totalorder %s28, 0
      %p93 = por %p91, %p92
      %s94 = ssub.s32 %s29, %s41
      %p95 = scmp.eq.s32.totalorder %s94, 0
      %s97 = sadd.s32 %s96, 1
      %s98 = scalar_select %p95, %s96, %s97
      %p101 = pneg %p95
      %p102 = scmp.eq.s32.totalorder %s22, 1
      %p103 = por %p101, %p102
      %p104 = scmp.ne.s32.totalorder %s96, %s99
      %p105 = scmp.eq.s32.totalorder %s22, 0
      %p106 = por %p104, %p105
      %p107 = scmp.ne.s32.totalorder %s96, %s99
      %p108 = scmp.eq.s32.totalorder %s27, 1
      %p109 = por %p107, %p108
      %p110 = scmp.ne.s32.totalorder %s99, %s100
      %p111 = scmp.eq.s32.totalorder %s27, 0
      %p112 = por %p110, %p111
      %p113 = scmp.ne.s32.totalorder %s99, %s100
      %p114 = scmp.eq.s32.totalorder %s28, 1
      %p115 = por %p113, %p114
      %p117 = scmp.ne.s32.totalorder %s100, %s116
      %p118 = scmp.eq.s32.totalorder %s28, 0
      %p119 = por %p117, %p118
      %s120 = ssub.s32 %s30, %s37
      %p121 = scmp.eq.s32.totalorder %s120, 0
      %s123 = sadd.s32 %s122, 1
      %s124 = scalar_select %p121, %s122, %s123
      %p127 = pneg %p121
      %p128 = scmp.eq.s32.totalorder %s22, 1
      %p129 = por %p127, %p128
      %p130 = scmp.ne.s32.totalorder %s122, %s125
      %p131 = scmp.eq.s32.totalorder %s22, 0
      %p132 = por %p130, %p131
      %p133 = scmp.ne.s32.totalorder %s122, %s125
      %p134 = scmp.eq.s32.totalorder %s27, 1
      %p135 = por %p133, %p134
      %p136 = scmp.ne.s32.totalorder %s125, %s126
      %p137 = scmp.eq.s32.totalorder %s27, 0
      %p138 = por %p136, %p137
      %p139 = scmp.ne.s32.totalorder %s125, %s126
      %p140 = scmp.eq.s32.totalorder %s28, 1
      %p141 = por %p139, %p140
      %p143 = scmp.ne.s32.totalorder %s126, %s142
      %p144 = scmp.eq.s32.totalorder %s28, 0
      %p145 = por %p143, %p144
      %s146 = ssub.s32 %s30, %s37
      %p147 = scmp.eq.s32.totalorder %s146, 0
      %s149 = sadd.s32 %s148, 1
      %s150 = scalar_select %p147, %s148, %s149
      %p153 = pneg %p147
      %p154 = scmp.eq.s32.totalorder %s22, 1
      %p155 = por %p153, %p154
      %p156 = scmp.ne.s32.totalorder %s148, %s151
      %p157 = scmp.eq.s32.totalorder %s22, 0
      %p158 = por %p156, %p157
      %p159 = scmp.ne.s32.totalorder %s148, %s151
      %p160 = scmp.eq.s32.totalorder %s27, 1
      %p161 = por %p159, %p160
      %p162 = scmp.ne.s32.totalorder %s151, %s152
      %p163 = scmp.eq.s32.totalorder %s27, 0
      %p164 = por %p162, %p163
      %p165 = scmp.ne.s32.totalorder %s151, %s152
      %p166 = scmp.eq.s32.totalorder %s28, 1
      %p167 = por %p165, %p166
      %p169 = scmp.ne.s32.totalorder %s152, %s168
      %p170 = scmp.eq.s32.totalorder %s28, 0
      %p171 = por %p169, %p170
      %s172 = ssub.s32 %s30, %s37
      %p173 = scmp.eq.s32.totalorder %s172, 0
      %s175 = sadd.s32 %s174, 1
      %s176 = scalar_select %p173, %s174, %s175
      %p179 = pneg %p173
      %p180 = scmp.eq.s32.totalorder %s22, 1
      %p181 = por %p179, %p180
      %p182 = scmp.ne.s32.totalorder %s174, %s177
      %p183 = scmp.eq.s32.totalorder %s22, 0
      %p184 = por %p182, %p183
      %p185 = scmp.ne.s32.totalorder %s174, %s177
      %p186 = scmp.eq.s32.totalorder %s27, 1
      %p187 = por %p185, %p186
      %p188 = scmp.ne.s32.totalorder %s177, %s178
      %p189 = scmp.eq.s32.totalorder %s27, 0
      %p190 = por %p188, %p189
      %p191 = scmp.ne.s32.totalorder %s177, %s178
      %p192 = scmp.eq.s32.totalorder %s28, 1
      %p193 = por %p191, %p192
      %p195 = scmp.ne.s32.totalorder %s178, %s194
      %p196 = scmp.eq.s32.totalorder %s28, 0
      %p197 = por %p195, %p196
      %s198 = ssub.s32 %s30, %s37
      %p199 = scmp.eq.s32.totalorder %s198, 0
      %s201 = sadd.s32 %s200, 1
      %s202 = scalar_select %p199, %s200, %s201
      %p205 = pneg %p199
      %p206 = scmp.eq.s32.totalorder %s22, 1
      %p207 = por %p205, %p206
      %p208 = scmp.ne.s32.totalorder %s200, %s203
      %p209 = scmp.eq.s32.totalorder %s22, 0
      %p210 = por %p208, %p209
      %p211 = scmp.ne.s32.totalorder %s200, %s203
      %p212 = scmp.eq.s32.totalorder %s27, 1
      %p213 = por %p211, %p212
      %p214 = scmp.ne.s32.totalorder %s203, %s204
      %p215 = scmp.eq.s32.totalorder %s27, 0
      %p216 = por %p214, %p215
      %p217 = scmp.ne.s32.totalorder %s203, %s204
      %p218 = scmp.eq.s32.totalorder %s28, 1
      %p219 = por %p217, %p218
      %p221 = scmp.ne.s32.totalorder %s204, %s220
      %p222 = scmp.eq.s32.totalorder %s28, 0
      %p223 = por %p221, %p222
      %s224 = ssub.s32 %s30, %s37
      %p225 = scmp.eq.s32.totalorder %s224, 0
      %s227 = sadd.s32 %s226, 1
      %s228 = scalar_select %p225, %s226, %s227
      %p231 = pneg %p225
      %p232 = scmp.eq.s32.totalorder %s22, 1
      %p233 = por %p231, %p232
      %p234 = scmp.ne.s32.totalorder %s226, %s229
      %p235 = scmp.eq.s32.totalorder %s22, 0
      %p236 = por %p234, %p235
      %p237 = scmp.ne.s32.totalorder %s226, %s229
      %p238 = scmp.eq.s32.totalorder %s27, 1
      %p239 = por %p237, %p238
      %p240 = scmp.ne.s32.totalorder %s229, %s230
      %p241 = scmp.eq.s32.totalorder %s27, 0
      %p242 = por %p240, %p241
      %p243 = scmp.ne.s32.totalorder %s229, %s230
      %p244 = scmp.eq.s32.totalorder %s28, 1
      %p245 = por %p243, %p244
      %p247 = scmp.ne.s32.totalorder %s230, %s246
      %p248 = scmp.eq.s32.totalorder %s28, 0
      %p249 = por %p247, %p248
      %s250 = ssub.s32 %s30, %s37
      %p251 = scmp.eq.s32.totalorder %s250, 0
      %s253 = sadd.s32 %s252, 1
      %s254 = scalar_select %p251, %s252, %s253
      %p257 = pneg %p251
      %p258 = scmp.eq.s32.totalorder %s22, 1
      %p259 = por %p257, %p258
      %p260 = scmp.ne.s32.totalorder %s252, %s255
      %p261 = scmp.eq.s32.totalorder %s22, 0
      %p262 = por %p260, %p261
      %p263 = scmp.ne.s32.totalorder %s252, %s255
      %p264 = scmp.eq.s32.totalorder %s27, 1
      %p265 = por %p263, %p264
      %p266 = scmp.ne.s32.totalorder %s255, %s256
      %p267 = scmp.eq.s32.totalorder %s27, 0
      %p268 = por %p266, %p267
      %p269 = scmp.ne.s32.totalorder %s255, %s256
      %p270 = scmp.eq.s32.totalorder %s28, 1
      %p271 = por %p269, %p270
      %p273 = scmp.ne.s32.totalorder %s256, %s272
      %p274 = scmp.eq.s32.totalorder %s28, 0
      %p275 = por %p273, %p274
      %s276 = ssub.s32 %s30, %s37
      %p277 = scmp.eq.s32.totalorder %s276, 0
      %s279 = sadd.s32 %s278, 1
      %s280 = scalar_select %p277, %s278, %s279
      %p283 = pneg %p277
      %p284 = scmp.eq.s32.totalorder %s22, 1
      %p285 = por %p283, %p284
      %p286 = scmp.ne.s32.totalorder %s278, %s281
      %p287 = scmp.eq.s32.totalorder %s22, 0
      %p288 = por %p286, %p287
      %p289 = scmp.ne.s32.totalorder %s278, %s281
      %p290 = scmp.eq.s32.totalorder %s27, 1
      %p291 = por %p289, %p290
      %p292 = scmp.ne.s32.totalorder %s281, %s282
      %p293 = scmp.eq.s32.totalorder %s27, 0
      %p294 = por %p292, %p293
      %p295 = scmp.ne.s32.totalorder %s281, %s282
      %p296 = scmp.eq.s32.totalorder %s28, 1
      %p297 = por %p295, %p296
      %p299 = scmp.ne.s32.totalorder %s282, %s298
      %p300 = scmp.eq.s32.totalorder %s28, 0
      %p301 = por %p299, %p300
      %s302 = ssub.s32 %s30, %s37
      %p303 = scmp.eq.s32.totalorder %s302, 0
      %s305 = sadd.s32 %s304, 1
      %s306 = scalar_select %p303, %s304, %s305
      %p309 = pneg %p303
      %p310 = scmp.eq.s32.totalorder %s22, 1
      %p311 = por %p309, %p310
      %p312 = scmp.ne.s32.totalorder %s304, %s307
      %p313 = scmp.eq.s32.totalorder %s22, 0
      %p314 = por %p312, %p313
      %p315 = scmp.ne.s32.totalorder %s304, %s307
      %p316 = scmp.eq.s32.totalorder %s27, 1
      %p317 = por %p315, %p316
      %p318 = scmp.ne.s32.totalorder %s307, %s308
      %p319 = scmp.eq.s32.totalorder %s27, 0
      %p320 = por %p318, %p319
      %p321 = scmp.ne.s32.totalorder %s307, %s308
      %p322 = scmp.eq.s32.totalorder %s28, 1
      %p323 = por %p321, %p322
      %p325 = scmp.ne.s32.totalorder %s308, %s324
      %p326 = scmp.eq.s32.totalorder %s28, 0
      %p327 = por %p325, %p326
      %s328 = ssub.s32 %s30, %s37
      %p329 = scmp.eq.s32.totalorder %s328, 0
      %s331 = sadd.s32 %s330, 1
      %s332 = scalar_select %p329, %s330, %s331
      %p335 = pneg %p329
      %p336 = scmp.eq.s32.totalorder %s22, 1
      %p337 = por %p335, %p336
      %p338 = scmp.ne.s32.totalorder %s330, %s333
      %p339 = scmp.eq.s32.totalorder %s22, 0
      %p340 = por %p338, %p339
      %p341 = scmp.ne.s32.totalorder %s330, %s333
      %p342 = scmp.eq.s32.totalorder %s27, 1
      %p343 = por %p341, %p342
      %p344 = scmp.ne.s32.totalorder %s333, %s334
      %p345 = scmp.eq.s32.totalorder %s27, 0
      %p346 = por %p344, %p345
      %p347 = scmp.ne.s32.totalorder %s333, %s334
      %p348 = scmp.eq.s32.totalorder %s28, 1
      %p349 = por %p347, %p348
      %p351 = scmp.ne.s32.totalorder %s334, %s350
      %p352 = scmp.eq.s32.totalorder %s28, 0
      %p353 = por %p351, %p352
      %s354 = ssub.s32 %s30, %s37
      %p355 = scmp.eq.s32.totalorder %s354, 0
      %s357 = sadd.s32 %s356, 1
      %s358 = scalar_select %p355, %s356, %s357
      %p361 = pneg %p355
      %p362 = scmp.eq.s32.totalorder %s22, 1
      %p363 = por %p361, %p362
      %p364 = scmp.ne.s32.totalorder %s356, %s359
      %p365 = scmp.eq.s32.totalorder %s22, 0
      %p366 = por %p364, %p365
      %p367 = scmp.ne.s32.totalorder %s356, %s359
      %p368 = scmp.eq.s32.totalorder %s27, 1
      %p369 = por %p367, %p368
      %p370 = scmp.ne.s32.totalorder %s359, %s360
      %p371 = scmp.eq.s32.totalorder %s27, 0
      %p372 = por %p370, %p371
      %p373 = scmp.ne.s32.totalorder %s359, %s360
      %p374 = scmp.eq.s32.totalorder %s28, 1
      %p375 = por %p373, %p374
      %p377 = scmp.ne.s32.totalorder %s360, %s376
      %p378 = scmp.eq.s32.totalorder %s28, 0
      %p379 = por %p377, %p378
      %s380 = ssub.s32 %s30, %s37
      %p381 = scmp.eq.s32.totalorder %s380, 0
      %s383 = sadd.s32 %s382, 1
      %s384 = scalar_select %p381, %s382, %s383
      %p387 = pneg %p381
      %p388 = scmp.eq.s32.totalorder %s22, 1
      %p389 = por %p387, %p388
      %p390 = scmp.ne.s32.totalorder %s382, %s385
      %p391 = scmp.eq.s32.totalorder %s22, 0
      %p392 = por %p390, %p391
      %p393 = scmp.ne.s32.totalorder %s382, %s385
      %p394 = scmp.eq.s32.totalorder %s27, 1
      %p395 = por %p393, %p394
      %p396 = scmp.ne.s32.totalorder %s385, %s386
      %p397 = scmp.eq.s32.totalorder %s27, 0
      %p398 = por %p396, %p397
      %p399 = scmp.ne.s32.totalorder %s385, %s386
      %p400 = scmp.eq.s32.totalorder %s28, 1
      %p401 = por %p399, %p400
      %p403 = scmp.ne.s32.totalorder %s386, %s402
      %p404 = scmp.eq.s32.totalorder %s28, 0
      %p405 = por %p403, %p404
      %s406 = ssub.s32 %s30, %s37
      %p407 = scmp.eq.s32.totalorder %s406, 0
      %s409 = sadd.s32 %s408, 1
      %s410 = scalar_select %p407, %s408, %s409
      %p413 = pneg %p407
      %p414 = scmp.eq.s32.totalorder %s22, 1
      %p415 = por %p413, %p414
      %p416 = scmp.ne.s32.totalorder %s408, %s411
      %p417 = scmp.eq.s32.totalorder %s22, 0
      %p418 = por %p416, %p417
      %p419 = scmp.ne.s32.totalorder %s408, %s411
      %p420 = scmp.eq.s32.totalorder %s27, 1
      %p421 = por %p419, %p420
      %p422 = scmp.ne.s32.totalorder %s411, %s412
      %p423 = scmp.eq.s32.totalorder %s27, 0
      %p424 = por %p422, %p423
      %p425 = scmp.ne.s32.totalorder %s411, %s412
      %p426 = scmp.eq.s32.totalorder %s28, 1
      %p427 = por %p425, %p426
      %p429 = scmp.ne.s32.totalorder %s412, %s428
      %p430 = scmp.eq.s32.totalorder %s28, 0
      %p431 = por %p429, %p430
      %s432 = ssub.s32 %s29, %s41
      %p433 = scmp.eq.s32.totalorder %s432, 0
      %s435 = sadd.s32 %s434, 1
      %s436 = scalar_select %p433, %s434, %s435
      %p439 = pneg %p433
      %p440 = scmp.eq.s32.totalorder %s22, 1
      %p441 = por %p439, %p440
      %p442 = scmp.ne.s32.totalorder %s434, %s437
      %p443 = scmp.eq.s32.totalorder %s22, 0
      %p444 = por %p442, %p443
      %p445 = scmp.ne.s32.totalorder %s434, %s437
      %p446 = scmp.eq.s32.totalorder %s27, 1
      %p447 = por %p445, %p446
      %p448 = scmp.ne.s32.totalorder %s437, %s438
      %p449 = scmp.eq.s32.totalorder %s27, 0
      %p450 = por %p448, %p449
      %p451 = scmp.ne.s32.totalorder %s437, %s438
      %p452 = scmp.eq.s32.totalorder %s28, 1
      %p453 = por %p451, %p452
      %p455 = scmp.ne.s32.totalorder %s438, %s454
      %p456 = scmp.eq.s32.totalorder %s28, 0
      %p457 = por %p455, %p456
      %p458 = scmp.le.s32.totalorder 1, %s22
      %p459 = scmp.lt.s32.totalorder %s22, 3
      %p460 = pnand %p458, %p459
      %p461 = pneg %p460
      // Predicated region
      $region9: #{tpu_custom_call.1} parent=5 // pred_check
        _
      $region10: #{tpu_custom_call.1} parent=5 // pred_check_branch
        %463 = sbr.rel (%p460) target = $region12
      $region11: #{tpu_custom_call.1} parent=5 // pred_region
        %s464 = ssub.s32 %s22, 1
        // Predicated region
        $region13: #{tpu_custom_call.1} parent=11 // pred_check
          %p465 = pneg %p60
        $region14: #{tpu_custom_call.1} parent=11 // pred_check_branch
          %467 = sbr.rel (%p465) target = $region16
        $region15: #{tpu_custom_call.1} parent=11 // pred_region
          %s468 = smul.u32 2, %s31
          %p469 = scmp.lt.s32.totalorder %s468, 1
          %s470 = scalar_select %p469, %s468, 1
          %s471 = smul.addr %s470, 8
          %s472 = scalar_lea.vmem %s0, %s471
          %s473 = smul.u32 2, %s31
        $region16: #{tpu_custom_call.1} parent=11 // pred_fallthru
          _
        // Predicated region
        $region17: #{tpu_custom_call.1} parent=11 // pred_check
          %p474 = pneg %p86
        $region18: #{tpu_custom_call.1} parent=11 // pred_check_branch
          %476 = sbr.rel (%p474) target = $region20
        $region19: #{tpu_custom_call.1} parent=11 // pred_region
          %s477 = smul.u32 2, %s31
          %p478 = scmp.lt.s32.totalorder %s477, 1
          %s479 = scalar_select %p478, %s477, 1
          %s480 = scalar_lea.vmem %s1, %s479
          %s481 = smul.u32 2, %s31
        $region20: #{tpu_custom_call.1} parent=11 // pred_fallthru
          _
        // Predicated region
        $region21: #{tpu_custom_call.1} parent=11 // pred_check
          %p482 = pneg %p112
        $region22: #{tpu_custom_call.1} parent=11 // pred_check_branch
          %484 = sbr.rel (%p482) target = $region24
        $region23: #{tpu_custom_call.1} parent=11 // pred_region
          %s485 = smul.u32 2, %s31
          %p486 = scmp.lt.s32.totalorder %s485, 1
          %s487 = scalar_select %p486, %s485, 1
          %s488 = scalar_lea.vmem %s2, %s487
          %s489 = smul.u32 2, %s31
        $region24: #{tpu_custom_call.1} parent=11 // pred_fallthru
          _
      $region12: #{tpu_custom_call.1} parent=5 // pred_fallthru
        _
      %p490 = scmp.lt.s32.totalorder %s22, 2
      // Predicated region
      $region25: #{tpu_custom_call.1} parent=5 // pred_check
        %p491 = pneg %p490
      $region26: #{tpu_custom_call.1} parent=5 // pred_check_branch
        %493 = sbr.rel (%p491) target = $region28
      $region27: #{tpu_custom_call.1} parent=5 // pred_region
        // Predicated region
        $region29: #{tpu_custom_call.1} parent=27 // pred_check
          %p494 = pneg %p132
        $region30: #{tpu_custom_call.1} parent=27 // pred_check_branch
          %496 = sbr.rel (%p494) target = $region32
        $region31: #{tpu_custom_call.1} parent=27 // pred_region
          %p497 = scmp.lt.s32.totalorder %s30, 1
          %s498 = scalar_select %p497, %s30, 1
          %s499 = smul.addr %s498, 4
          %s500 = smul.addr %s499, 4
          %s501 = scalar_lea.vmem %s3, %s500
        $region32: #{tpu_custom_call.1} parent=27 // pred_fallthru
          _
        // Predicated region
        $region33: #{tpu_custom_call.1} parent=27 // pred_check
          %p502 = pneg %p158
        $region34: #{tpu_custom_call.1} parent=27 // pred_check_branch
          %504 = sbr.rel (%p502) target = $region36
        $region35: #{tpu_custom_call.1} parent=27 // pred_region
          %p505 = scmp.lt.s32.totalorder %s30, 1
          %s506 = scalar_select %p505, %s30, 1
          %s507 = scalar_lea.vmem %s4, %s506
        $region36: #{tpu_custom_call.1} parent=27 // pred_fallthru
          _
        // Predicated region
        $region37: #{tpu_custom_call.1} parent=27 // pred_check
          %p508 = pneg %p184
        $region38: #{tpu_custom_call.1} parent=27 // pred_check_branch
          %510 = sbr.rel (%p508) target = $region40
        $region39: #{tpu_custom_call.1} parent=27 // pred_region
          %p511 = scmp.lt.s32.totalorder %s30, 1
          %s512 = scalar_select %p511, %s30, 1
          %s513 = smul.addr %s512, 4
          %s514 = smul.addr %s513, 4
          %s515 = scalar_lea.vmem %s5, %s514
        $region40: #{tpu_custom_call.1} parent=27 // pred_fallthru
          _
        // Predicated region
        $region41: #{tpu_custom_call.1} parent=27 // pred_check
          %p516 = pneg %p210
        $region42: #{tpu_custom_call.1} parent=27 // pred_check_branch
          %518 = sbr.rel (%p516) target = $region44
        $region43: #{tpu_custom_call.1} parent=27 // pred_region
          %p519 = scmp.lt.s32.totalorder %s30, 1
          %s520 = scalar_select %p519, %s30, 1
          %s521 = scalar_lea.vmem %s6, %s520
        $region44: #{tpu_custom_call.1} parent=27 // pred_fallthru
          _
        // Predicated region
        $region45: #{tpu_custom_call.1} parent=27 // pred_check
          %p522 = pneg %p236
        $region46: #{tpu_custom_call.1} parent=27 // pred_check_branch
          %524 = sbr.rel (%p522) target = $region48
        $region47: #{tpu_custom_call.1} parent=27 // pred_region
          %p525 = scmp.lt.s32.totalorder %s30, 1
          %s526 = scalar_select %p525, %s30, 1
          %s527 = scalar_lea.vmem %s7, %s526
        $region48: #{tpu_custom_call.1} parent=27 // pred_fallthru
          _
        // Predicated region
        $region49: #{tpu_custom_call.1} parent=27 // pred_check
          %p528 = pneg %p262
        $region50: #{tpu_custom_call.1} parent=27 // pred_check_branch
          %530 = sbr.rel (%p528) target = $region52
        $region51: #{tpu_custom_call.1} parent=27 // pred_region
          %p531 = scmp.lt.s32.totalorder %s30, 1
          %s532 = scalar_select %p531, %s30, 1
          %s533 = scalar_lea.vmem %s8, %s532
        $region52: #{tpu_custom_call.1} parent=27 // pred_fallthru
          _
        // Predicated region
        $region53: #{tpu_custom_call.1} parent=27 // pred_check
          %p534 = pneg %p288
        $region54: #{tpu_custom_call.1} parent=27 // pred_check_branch
          %536 = sbr.rel (%p534) target = $region56
        $region55: #{tpu_custom_call.1} parent=27 // pred_region
          %p537 = scmp.lt.s32.totalorder %s30, 1
          %s538 = scalar_select %p537, %s30, 1
          %s539 = smul.addr %s538, 4
          %s540 = smul.addr %s539, 4
          %s541 = scalar_lea.vmem %s9, %s540
        $region56: #{tpu_custom_call.1} parent=27 // pred_fallthru
          _
        // Predicated region
        $region57: #{tpu_custom_call.1} parent=27 // pred_check
          %p542 = pneg %p314
        $region58: #{tpu_custom_call.1} parent=27 // pred_check_branch
          %544 = sbr.rel (%p542) target = $region60
        $region59: #{tpu_custom_call.1} parent=27 // pred_region
          %p545 = scmp.lt.s32.totalorder %s30, 1
          %s546 = scalar_select %p545, %s30, 1
          %s547 = scalar_lea.vmem %s10, %s546
        $region60: #{tpu_custom_call.1} parent=27 // pred_fallthru
          _
        // Predicated region
        $region61: #{tpu_custom_call.1} parent=27 // pred_check
          %p548 = pneg %p340
        $region62: #{tpu_custom_call.1} parent=27 // pred_check_branch
          %550 = sbr.rel (%p548) target = $region64
        $region63: #{tpu_custom_call.1} parent=27 // pred_region
          %p551 = scmp.lt.s32.totalorder %s30, 1
          %s552 = scalar_select %p551, %s30, 1
          %s553 = smul.addr %s552, 16
          %s554 = smul.addr %s553, 4
          %s555 = scalar_lea.vmem %s11, %s554
        $region64: #{tpu_custom_call.1} parent=27 // pred_fallthru
          _
        // Predicated region
        $region65: #{tpu_custom_call.1} parent=27 // pred_check
          %p556 = pneg %p366
        $region66: #{tpu_custom_call.1} parent=27 // pred_check_branch
          %558 = sbr.rel (%p556) target = $region68
        $region67: #{tpu_custom_call.1} parent=27 // pred_region
          %p559 = scmp.lt.s32.totalorder %s30, 1
          %s560 = scalar_select %p559, %s30, 1
          %s561 = scalar_lea.vmem %s12, %s560
        $region68: #{tpu_custom_call.1} parent=27 // pred_fallthru
          _
        // Predicated region
        $region69: #{tpu_custom_call.1} parent=27 // pred_check
          %p562 = pneg %p392
        $region70: #{tpu_custom_call.1} parent=27 // pred_check_branch
          %564 = sbr.rel (%p562) target = $region72
        $region71: #{tpu_custom_call.1} parent=27 // pred_region
          %p565 = scmp.lt.s32.totalorder %s30, 1
          %s566 = scalar_select %p565, %s30, 1
          %s567 = scalar_lea.vmem %s13, %s566
        $region72: #{tpu_custom_call.1} parent=27 // pred_fallthru
          _
        // Predicated region
        $region73: #{tpu_custom_call.1} parent=27 // pred_check
          %p568 = pneg %p418
        $region74: #{tpu_custom_call.1} parent=27 // pred_check_branch
          %570 = sbr.rel (%p568) target = $region76
        $region75: #{tpu_custom_call.1} parent=27 // pred_region
          %p571 = scmp.lt.s32.totalorder %s30, 1
          %s572 = scalar_select %p571, %s30, 1
          %s573 = scalar_lea.vmem %s14, %s572
        $region76: #{tpu_custom_call.1} parent=27 // pred_fallthru
          _
      $region28: #{tpu_custom_call.1} parent=5 // pred_fallthru
        _
      %p574 = scmp.le.s32.totalorder 1, %s22
      %p575 = scmp.lt.s32.totalorder %s22, 3
      %p576 = pnand %p574, %p575
      %p577 = pneg %p576
      // Predicated region
      $region77: #{tpu_custom_call.1} parent=5 // pred_check
        _
      $region78: #{tpu_custom_call.1} parent=5 // pred_check_branch
        %579 = sbr.rel (%p576) target = $region80
      $region79: #{tpu_custom_call.1} parent=5 // pred_region
        %s580 = ssub.s32 %s22, 1
        %s581 = smul.u32 2, %s31
        %p582 = scmp.lt.s32.totalorder %s581, 1
        %s583 = scalar_select %p582, %s581, 1
        %s584 = smul.addr %s583, 8
        %s585 = scalar_lea.vmem %s0, %s584
        %p586 = pneg %p60
        %p587 = pneg %p57
        %s588 = smul.u32 2, %s31
        %p589 = scmp.lt.s32.totalorder %s588, 1
        %s590 = scalar_select %p589, %s588, 1
        %s591 = scalar_lea.vmem %s1, %s590
        %p592 = pneg %p86
        %p593 = pneg %p83
        %s594 = smul.u32 2, %s31
        %p595 = scmp.lt.s32.totalorder %s594, 1
        %s596 = scalar_select %p595, %s594, 1
        %s597 = scalar_lea.vmem %s2, %s596
        %p598 = pneg %p112
        %p599 = pneg %p109
        %p600 = scmp.lt.s32.totalorder %s32, 1
        %s601 = scalar_select %p600, %s32, 1
        %s602 = smul.addr %s601, 4
        %s603 = smul.addr %s602, 4
        %s604 = scalar_lea.vmem %s3, %s603
        %p605 = pneg %p138
        %p606 = pneg %p135
        %p607 = scmp.lt.s32.totalorder %s32, 1
        %s608 = scalar_select %p607, %s32, 1
        %s609 = scalar_lea.vmem %s4, %s608
        %p610 = pneg %p164
        %p611 = pneg %p161
        %p612 = scmp.lt.s32.totalorder %s32, 1
        %s613 = scalar_select %p612, %s32, 1
        %s614 = smul.addr %s613, 4
        %s615 = smul.addr %s614, 4
        %s616 = scalar_lea.vmem %s5, %s615
        %p617 = pneg %p190
        %p618 = pneg %p187
        %p619 = scmp.lt.s32.totalorder %s32, 1
        %s620 = scalar_select %p619, %s32, 1
        %s621 = scalar_lea.vmem %s6, %s620
        %p622 = pneg %p216
        %p623 = pneg %p213
        %p624 = scmp.lt.s32.totalorder %s32, 1
        %s625 = scalar_select %p624, %s32, 1
        %s626 = scalar_lea.vmem %s7, %s625
        %p627 = pneg %p242
        %p628 = pneg %p239
        %p629 = scmp.lt.s32.totalorder %s32, 1
        %s630 = scalar_select %p629, %s32, 1
        %s631 = scalar_lea.vmem %s8, %s630
        %p632 = pneg %p268
        %p633 = pneg %p265
        %p634 = scmp.lt.s32.totalorder %s32, 1
        %s635 = scalar_select %p634, %s32, 1
        %s636 = smul.addr %s635, 4
        %s637 = smul.addr %s636, 4
        %s638 = scalar_lea.vmem %s9, %s637
        %p639 = pneg %p294
        %p640 = pneg %p291
        %p641 = scmp.lt.s32.totalorder %s32, 1
        %s642 = scalar_select %p641, %s32, 1
        %s643 = scalar_lea.vmem %s10, %s642
        %p644 = pneg %p320
        %p645 = pneg %p317
        %p646 = scmp.lt.s32.totalorder %s32, 1
        %s647 = scalar_select %p646, %s32, 1
        %s648 = smul.addr %s647, 16
        %s649 = smul.addr %s648, 4
        %s650 = scalar_lea.vmem %s11, %s649
        %p651 = pneg %p346
        %p652 = pneg %p343
        %p653 = scmp.lt.s32.totalorder %s32, 1
        %s654 = scalar_select %p653, %s32, 1
        %s655 = scalar_lea.vmem %s12, %s654
        %p656 = pneg %p372
        %p657 = pneg %p369
        %p658 = scmp.lt.s32.totalorder %s32, 1
        %s659 = scalar_select %p658, %s32, 1
        %s660 = scalar_lea.vmem %s13, %s659
        %p661 = pneg %p398
        %p662 = pneg %p395
        %p663 = scmp.lt.s32.totalorder %s32, 1
        %s664 = scalar_select %p663, %s32, 1
        %s665 = scalar_lea.vmem %s14, %s664
        %p666 = pneg %p424
        %p667 = pneg %p421
        %p668 = pneg %p450
        %p669 = pneg %p447
        %s670 = smul.u32 2, %s31
        %p671 = scmp.lt.s32.totalorder %s670, 1
        %s672 = scalar_select %p671, %s670, 1
        %s673 = smul.addr %s672, 8
        %s674 = scalar_lea.vmem %s0, %s673
        %s675 = smul.u32 2, %s31
        %s676 = smul.u32 2, %s31
        %p677 = scmp.lt.s32.totalorder %s676, 1
        %s678 = scalar_select %p677, %s676, 1
        %s679 = scalar_lea.vmem %s1, %s678
        %s680 = smul.u32 2, %s31
        %s681 = smul.u32 2, %s31
        %p682 = scmp.lt.s32.totalorder %s681, 1
        %s683 = scalar_select %p682, %s681, 1
        %s684 = scalar_lea.vmem %s2, %s683
        %s685 = smul.u32 2, %s31
        %p686 = scmp.lt.s32.totalorder %s32, 1
        %s687 = scalar_select %p686, %s32, 1
        %s688 = smul.addr %s687, 4
        %s689 = smul.addr %s688, 4
        %s690 = scalar_lea.vmem %s3, %s689
        %p691 = scmp.lt.s32.totalorder %s32, 1
        %s692 = scalar_select %p691, %s32, 1
        %s693 = scalar_lea.vmem %s4, %s692
        %p694 = scmp.lt.s32.totalorder %s32, 1
        %s695 = scalar_select %p694, %s32, 1
        %s696 = smul.addr %s695, 4
        %s697 = smul.addr %s696, 4
        %s698 = scalar_lea.vmem %s5, %s697
        %p699 = scmp.lt.s32.totalorder %s32, 1
        %s700 = scalar_select %p699, %s32, 1
        %s701 = scalar_lea.vmem %s6, %s700
        %p702 = scmp.lt.s32.totalorder %s32, 1
        %s703 = scalar_select %p702, %s32, 1
        %s704 = scalar_lea.vmem %s7, %s703
        %p705 = scmp.lt.s32.totalorder %s32, 1
        %s706 = scalar_select %p705, %s32, 1
        %s707 = scalar_lea.vmem %s8, %s706
        %p708 = scmp.lt.s32.totalorder %s32, 1
        %s709 = scalar_select %p708, %s32, 1
        %s710 = smul.addr %s709, 4
        %s711 = smul.addr %s710, 4
        %s712 = scalar_lea.vmem %s9, %s711
        %p713 = scmp.lt.s32.totalorder %s32, 1
        %s714 = scalar_select %p713, %s32, 1
        %s715 = scalar_lea.vmem %s10, %s714
        %p716 = scmp.lt.s32.totalorder %s32, 1
        %s717 = scalar_select %p716, %s32, 1
        %s718 = smul.addr %s717, 16
        %s719 = smul.addr %s718, 4
        %s720 = scalar_lea.vmem %s11, %s719
        %p721 = scmp.lt.s32.totalorder %s32, 1
        %s722 = scalar_select %p721, %s32, 1
        %s723 = scalar_lea.vmem %s12, %s722
        %p724 = scmp.lt.s32.totalorder %s32, 1
        %s725 = scalar_select %p724, %s32, 1
        %s726 = scalar_lea.vmem %s13, %s725
        %p727 = scmp.lt.s32.totalorder %s32, 1
        %s728 = scalar_select %p727, %s32, 1
        %s729 = scalar_lea.vmem %s14, %s728
        %s730 = smul.u32 2, %s31
        %p732 = scmp.eq.s32.totalorder %s32, 0
        // Predicated region
        $region81: #{tpu_custom_call.1} parent=79 // pred_check
          %p733 = pneg %p732
        $region82: #{tpu_custom_call.1} parent=79 // pred_check_branch
          %735 = sbr.rel (%p733) target = $region84
        $region83: #{tpu_custom_call.1} parent=79 // pred_region
          %v736 = vld [vmem:[%s674] sm:$0xff]
          %v737 = vld [vmem:[%s674 + $0x8] sm:$0xff]
          %vm738 = vcmask 261120
          %739 = vst.msk [vmem:[#allocation2] sm:$0xff] %vm738, %v736
          %740 = vst.msk [vmem:[#allocation2 + $0x8] sm:$0xff] %vm738, %v737
        $region84: #{tpu_custom_call.1} parent=79 // pred_fallthru
          _
        %v741 = vld [vmem:[#allocation2] sm:$0xff]
        %v742 = vld [vmem:[#allocation2 + $0x8] sm:$0xff]
        %v743 = vpack.c.bf16 %v742, %v741
        %v744 = vld [vmem:[%s690] sm:$0xf]
        %v745 = vld [vmem:[%s690 + $0x4] sm:$0xf]
        %v746 = vld [vmem:[%s690 + $0x8] sm:$0xf]
        %v747 = vld [vmem:[%s690 + $0xc] sm:$0xf]
        %v748 = vld [vmem:[%s693] sm:$0x1]
        %v750 = vlaneseq
        %v751 = vshrl.u32 %v750, 7
        %v752 = vsub.s32 0, %v751
        %v753 = vrot.slane %v748, %v752
        %v759 = vunpack.c.l.b16 %v744
        %v760 = vunpack.c.l.b16 %v745
        %v761 = vunpack.c.l.b16 %v746
        %v762 = vunpack.c.l.b16 %v747
        %v763 = vpack.c.b16 %v760, %v759
        %v764 = vpack.c.b16 %v762, %v761
        %vm767 = vcmask 261120
        %v769 = vsel %vm767, %v743, 0
        %771 = vmatprep.subr.bf16.mxu0 0
        %772 = vmatpush1.bf16.msra.mxu0 %v763
        %773 = vmatprep.subr.bf16.mxu0 0
        %774 = vmatpush1.bf16.msra.mxu0 %v764
        %775 = vmatprep.subr.bf16.mxu0 0
        %776 = vmatpush1.bf16.msra.mxu0 0
        %777 = vmatprep.subr.bf16.mxu0 0
        %778 = vmatpush1.bf16.msra.mxu0 0
        %779 = vmatprep.subr.bf16.mxu0 0
        %780 = vmatpush1.bf16.msra.mxu0 0
        %781 = vmatprep.subr.bf16.mxu0 0
        %782 = vmatpush1.bf16.msra.mxu0 0
        %783 = vmatprep.subr.bf16.mxu0 0
        %784 = vmatpush1.bf16.msra.mxu0 0
        %785 = vmatprep.subr.bf16.mxu0 0
        %786 = vmatpush1.bf16.msra.mxu0 0
        %787 = vmatprep.subr.bf16.mxu0 0
        %788 = vmatpush1.bf16.msra.mxu0 0
        %789 = vmatprep.subr.bf16.mxu0 0
        %790 = vmatpush1.bf16.msra.mxu0 0
        %791 = vmatprep.subr.bf16.mxu0 0
        %792 = vmatpush1.bf16.msra.mxu0 0
        %793 = vmatprep.subr.bf16.mxu0 0
        %794 = vmatpush1.bf16.msra.mxu0 0
        %795 = vmatprep.subr.bf16.mxu0 0
        %796 = vmatpush1.bf16.msra.mxu0 0
        %797 = vmatprep.subr.bf16.mxu0 0
        %798 = vmatpush1.bf16.msra.mxu0 0
        %799 = vmatprep.subr.bf16.mxu0 0
        %800 = vmatpush1.bf16.msra.mxu0 0
        %801 = vmatprep.subr.bf16.mxu0 0
        %802 = vmatpush1.bf16.msra.mxu0 0
        %803 = vmatprep.mubr.bf16.mxu0 0
        %804 = vmatmul.mubr.bf16.gmra.mrb[0].mxu0 %v769
        %v805 = vpop.f32.mrb[0].mxu0
        %v806 = vadd.f32 %v753, %v805
        %v807 = vpop.f32.mrb[0].mxu0
        %v808 = vpop.f32.mrb[0].mxu0
        %v809 = vadd.f32 %v753, %v808
        %v810 = vpop.f32.mrb[0].mxu0
        %811 = vdwg.mxu0
        %v812 = vmul.f32 %v806, 0.35355338
        %v813 = vmul.f32 %v809, 0.35355338
        %v814 = vpack.c.bf16 %v813, %v812
        %816 = vrot.lane.b32.xlu0 %v814, 120
        %v817 = vpop.permute.xlu0 %816
        %818 = vrot.lane.b32.xlu0 %v814, 112
        %v819 = vpop.permute.xlu0 %818
        %820 = vrot.lane.b32.xlu0 %v814, 104
        %v821 = vpop.permute.xlu0 %820
        %v824 = vpack.i.b16 %v817, %v814
        %v826 = vshrl.u32 %v814, 16
        %v827 = vshrl.u32 %v817, 16
        %v828 = vpack.i.b16 %v827, %v826
        %v832 = vpack.i.b16 %v821, %v819
        %v834 = vshrl.u32 %v819, 16
        %v835 = vshrl.u32 %v821, 16
        %v836 = vpack.i.b16 %v835, %v834
        %v839 = vpack.i.b16 0, 0
        %v841 = vshrl.u32 0, 16
        %v842 = vpack.i.b16 %v841, %v841
        %v844 = vcombine.high %v824, %v839
        %v846 = vunpack.c.l.s4 1983009808
        %v847 = vunpack.c.0.s8 %v846
        %v848 = vlaneseq
        %v849 = vshrl.u32 %v848, 7
        %v850 = vsub.s32 %v847, %v849
        %v851 = vrot.slane %v824, %v850
        %v853 = vunpack.c.l.s4 1983009808
        %v854 = vunpack.c.0.s8 %v853
        %v855 = vlaneseq
        %v856 = vshrl.u32 %v855, 7
        %v857 = vsub.s32 %v854, %v856
        %v858 = vrot.slane %v844, %v857
        %v859 = vcombine.high %v832, %v839
        %v861 = vunpack.c.l.s4 1983009808
        %v862 = vunpack.c.0.s8 %v861
        %v863 = vlaneseq
        %v864 = vshrl.u32 %v863, 7
        %v865 = vsub.s32 %v862, %v864
        %v866 = vrot.slane %v832, %v865
        %v868 = vunpack.c.l.s4 1983009808
        %v869 = vunpack.c.0.s8 %v868
        %v870 = vlaneseq
        %v871 = vshrl.u32 %v870, 7
        %v872 = vsub.s32 %v869, %v871
        %v873 = vrot.slane %v859, %v872
        %v874 = vcombine.low %v851, %v866
        %v875 = vcombine.high %v851, %v866
        %v877 = vunpack.c.l.s4 1934713408
        %v878 = vunpack.c.0.s8 %v877
        %v879 = vlaneseq
        %v880 = vshrl.u32 %v879, 7
        %v881 = vsub.s32 %v878, %v880
        %v882 = vrot.slane %v874, %v881
        %v884 = vunpack.c.l.s4 1934713408
        %v885 = vunpack.c.0.s8 %v884
        %v886 = vlaneseq
        %v887 = vshrl.u32 %v886, 7
        %v888 = vsub.s32 %v885, %v887
        %v889 = vrot.slane %v875, %v888
        %v890 = vcombine.low %v858, %v873
        %v891 = vcombine.high %v858, %v873
        %v893 = vunpack.c.l.s4 1934713408
        %v894 = vunpack.c.0.s8 %v893
        %v895 = vlaneseq
        %v896 = vshrl.u32 %v895, 7
        %v897 = vsub.s32 %v894, %v896
        %v898 = vrot.slane %v890, %v897
        %v900 = vunpack.c.l.s4 1934713408
        %v901 = vunpack.c.0.s8 %v900
        %v902 = vlaneseq
        %v903 = vshrl.u32 %v902, 7
        %v904 = vsub.s32 %v901, %v903
        %v905 = vrot.slane %v891, %v904
        %v906 = vcombine.high %v882, 0
        %v907 = vcombine.high %v889, 0
        %v908 = vcombine.high %v898, 0
        %v909 = vcombine.high %v905, 0
        %v910 = vcombine.high %v828, %v842
        %v912 = vunpack.c.l.s4 1983009808
        %v913 = vunpack.c.0.s8 %v912
        %v914 = vlaneseq
        %v915 = vshrl.u32 %v914, 7
        %v916 = vsub.s32 %v913, %v915
        %v917 = vrot.slane %v828, %v916
        %v919 = vunpack.c.l.s4 1983009808
        %v920 = vunpack.c.0.s8 %v919
        %v921 = vlaneseq
        %v922 = vshrl.u32 %v921, 7
        %v923 = vsub.s32 %v920, %v922
        %v924 = vrot.slane %v910, %v923
        %v925 = vcombine.high %v836, %v842
        %v927 = vunpack.c.l.s4 1983009808
        %v928 = vunpack.c.0.s8 %v927
        %v929 = vlaneseq
        %v930 = vshrl.u32 %v929, 7
        %v931 = vsub.s32 %v928, %v930
        %v932 = vrot.slane %v836, %v931
        %v934 = vunpack.c.l.s4 1983009808
        %v935 = vunpack.c.0.s8 %v934
        %v936 = vlaneseq
        %v937 = vshrl.u32 %v936, 7
        %v938 = vsub.s32 %v935, %v937
        %v939 = vrot.slane %v925, %v938
        %v940 = vcombine.low %v917, %v932
        %v941 = vcombine.high %v917, %v932
        %v943 = vunpack.c.l.s4 1934713408
        %v944 = vunpack.c.0.s8 %v943
        %v945 = vlaneseq
        %v946 = vshrl.u32 %v945, 7
        %v947 = vsub.s32 %v944, %v946
        %v948 = vrot.slane %v940, %v947
        %v950 = vunpack.c.l.s4 1934713408
        %v951 = vunpack.c.0.s8 %v950
        %v952 = vlaneseq
        %v953 = vshrl.u32 %v952, 7
        %v954 = vsub.s32 %v951, %v953
        %v955 = vrot.slane %v941, %v954
        %v956 = vcombine.low %v924, %v939
        %v957 = vcombine.high %v924, %v939
        %v959 = vunpack.c.l.s4 1934713408
        %v960 = vunpack.c.0.s8 %v959
        %v961 = vlaneseq
        %v962 = vshrl.u32 %v961, 7
        %v963 = vsub.s32 %v960, %v962
        %v964 = vrot.slane %v956, %v963
        %v966 = vunpack.c.l.s4 1934713408
        %v967 = vunpack.c.0.s8 %v966
        %v968 = vlaneseq
        %v969 = vshrl.u32 %v968, 7
        %v970 = vsub.s32 %v967, %v969
        %v971 = vrot.slane %v957, %v970
        %v972 = vcombine.high %v948, 0
        %v973 = vcombine.high %v955, 0
        %v974 = vcombine.high %v964, 0
        %v975 = vcombine.high %v971, 0
        %v976 = vpack.c.bf16 %v809, %v806
        %978 = vrot.lane.b32.xlu0 %v976, 120
        %v979 = vpop.permute.xlu0 %978
        %980 = vrot.lane.b32.xlu0 %v976, 112
        %v981 = vpop.permute.xlu0 %980
        %982 = vrot.lane.b32.xlu0 %v976, 104
        %v983 = vpop.permute.xlu0 %982
        %984 = vrot.lane.b32.xlu0 %v976, 96
        %v985 = vpop.permute.xlu0 %984
        %986 = vrot.lane.b32.xlu0 %v979, 96
        %v987 = vpop.permute.xlu0 %986
        %988 = vrot.lane.b32.xlu0 %v981, 96
        %v989 = vpop.permute.xlu0 %988
        %990 = vrot.lane.b32.xlu0 %v983, 96
        %v991 = vpop.permute.xlu0 %990
        %v994 = vpack.i.b16 %v987, %v985
        %v996 = vshrl.u32 %v985, 16
        %v997 = vshrl.u32 %v987, 16
        %v998 = vpack.i.b16 %v997, %v996
        %v1002 = vpack.i.b16 %v991, %v989
        %v1004 = vshrl.u32 %v989, 16
        %v1005 = vshrl.u32 %v991, 16
        %v1006 = vpack.i.b16 %v1005, %v1004
        %v1008 = vcombine.high %v994, %v839
        %v1010 = vunpack.c.l.s4 1983009808
        %v1011 = vunpack.c.0.s8 %v1010
        %v1012 = vlaneseq
        %v1013 = vshrl.u32 %v1012, 7
        %v1014 = vsub.s32 %v1011, %v1013
        %v1015 = vrot.slane %v994, %v1014
        %v1017 = vunpack.c.l.s4 1983009808
        %v1018 = vunpack.c.0.s8 %v1017
        %v1019 = vlaneseq
        %v1020 = vshrl.u32 %v1019, 7
        %v1021 = vsub.s32 %v1018, %v1020
        %v1022 = vrot.slane %v1008, %v1021
        %v1023 = vcombine.high %v1002, %v839
        %v1025 = vunpack.c.l.s4 1983009808
        %v1026 = vunpack.c.0.s8 %v1025
        %v1027 = vlaneseq
        %v1028 = vshrl.u32 %v1027, 7
        %v1029 = vsub.s32 %v1026, %v1028
        %v1030 = vrot.slane %v1002, %v1029
        %v1032 = vunpack.c.l.s4 1983009808
        %v1033 = vunpack.c.0.s8 %v1032
        %v1034 = vlaneseq
        %v1035 = vshrl.u32 %v1034, 7
        %v1036 = vsub.s32 %v1033, %v1035
        %v1037 = vrot.slane %v1023, %v1036
        %v1038 = vcombine.low %v1015, %v1030
        %v1039 = vcombine.high %v1015, %v1030
        %v1041 = vunpack.c.l.s4 1934713408
        %v1042 = vunpack.c.0.s8 %v1041
        %v1043 = vlaneseq
        %v1044 = vshrl.u32 %v1043, 7
        %v1045 = vsub.s32 %v1042, %v1044
        %v1046 = vrot.slane %v1038, %v1045
        %v1048 = vunpack.c.l.s4 1934713408
        %v1049 = vunpack.c.0.s8 %v1048
        %v1050 = vlaneseq
        %v1051 = vshrl.u32 %v1050, 7
        %v1052 = vsub.s32 %v1049, %v1051
        %v1053 = vrot.slane %v1039, %v1052
        %v1054 = vcombine.low %v1022, %v1037
        %v1055 = vcombine.high %v1022, %v1037
        %v1057 = vunpack.c.l.s4 1934713408
        %v1058 = vunpack.c.0.s8 %v1057
        %v1059 = vlaneseq
        %v1060 = vshrl.u32 %v1059, 7
        %v1061 = vsub.s32 %v1058, %v1060
        %v1062 = vrot.slane %v1054, %v1061
        %v1064 = vunpack.c.l.s4 1934713408
        %v1065 = vunpack.c.0.s8 %v1064
        %v1066 = vlaneseq
        %v1067 = vshrl.u32 %v1066, 7
        %v1068 = vsub.s32 %v1065, %v1067
        %v1069 = vrot.slane %v1055, %v1068
        %v1070 = vcombine.high %v1046, 0
        %v1071 = vcombine.high %v1053, 0
        %v1072 = vcombine.high %v1062, 0
        %v1073 = vcombine.high %v1069, 0
        %v1074 = vcombine.high %v998, %v842
        %v1076 = vunpack.c.l.s4 1983009808
        %v1077 = vunpack.c.0.s8 %v1076
        %v1078 = vlaneseq
        %v1079 = vshrl.u32 %v1078, 7
        %v1080 = vsub.s32 %v1077, %v1079
        %v1081 = vrot.slane %v998, %v1080
        %v1083 = vunpack.c.l.s4 1983009808
        %v1084 = vunpack.c.0.s8 %v1083
        %v1085 = vlaneseq
        %v1086 = vshrl.u32 %v1085, 7
        %v1087 = vsub.s32 %v1084, %v1086
        %v1088 = vrot.slane %v1074, %v1087
        %v1089 = vcombine.high %v1006, %v842
        %v1091 = vunpack.c.l.s4 1983009808
        %v1092 = vunpack.c.0.s8 %v1091
        %v1093 = vlaneseq
        %v1094 = vshrl.u32 %v1093, 7
        %v1095 = vsub.s32 %v1092, %v1094
        %v1096 = vrot.slane %v1006, %v1095
        %v1098 = vunpack.c.l.s4 1983009808
        %v1099 = vunpack.c.0.s8 %v1098
        %v1100 = vlaneseq
        %v1101 = vshrl.u32 %v1100, 7
        %v1102 = vsub.s32 %v1099, %v1101
        %v1103 = vrot.slane %v1089, %v1102
        %v1104 = vcombine.low %v1081, %v1096
        %v1105 = vcombine.high %v1081, %v1096
        %v1107 = vunpack.c.l.s4 1934713408
        %v1108 = vunpack.c.0.s8 %v1107
        %v1109 = vlaneseq
        %v1110 = vshrl.u32 %v1109, 7
        %v1111 = vsub.s32 %v1108, %v1110
        %v1112 = vrot.slane %v1104, %v1111
        %v1114 = vunpack.c.l.s4 1934713408
        %v1115 = vunpack.c.0.s8 %v1114
        %v1116 = vlaneseq
        %v1117 = vshrl.u32 %v1116, 7
        %v1118 = vsub.s32 %v1115, %v1117
        %v1119 = vrot.slane %v1105, %v1118
        %v1120 = vcombine.low %v1088, %v1103
        %v1121 = vcombine.high %v1088, %v1103
        %v1123 = vunpack.c.l.s4 1934713408
        %v1124 = vunpack.c.0.s8 %v1123
        %v1125 = vlaneseq
        %v1126 = vshrl.u32 %v1125, 7
        %v1127 = vsub.s32 %v1124, %v1126
        %v1128 = vrot.slane %v1120, %v1127
        %v1130 = vunpack.c.l.s4 1934713408
        %v1131 = vunpack.c.0.s8 %v1130
        %v1132 = vlaneseq
        %v1133 = vshrl.u32 %v1132, 7
        %v1134 = vsub.s32 %v1131, %v1133
        %v1135 = vrot.slane %v1121, %v1134
        %v1136 = vcombine.high %v1112, 0
        %v1137 = vcombine.high %v1119, 0
        %v1138 = vcombine.high %v1128, 0
        %v1139 = vcombine.high %v1135, 0
        %1140 = vrot.lane.b32.xlu0 %v976, 64
        %v1141 = vpop.permute.xlu0 %1140
        %1142 = vrot.lane.b32.xlu0 %v979, 64
        %v1143 = vpop.permute.xlu0 %1142
        %1144 = vrot.lane.b32.xlu0 %v981, 64
        %v1145 = vpop.permute.xlu0 %1144
        %1146 = vrot.lane.b32.xlu0 %v983, 64
        %v1147 = vpop.permute.xlu0 %1146
        %v1150 = vpack.i.b16 %v1143, %v1141
        %v1152 = vshrl.u32 %v1141, 16
        %v1153 = vshrl.u32 %v1143, 16
        %v1154 = vpack.i.b16 %v1153, %v1152
        %v1158 = vpack.i.b16 %v1147, %v1145
        %v1160 = vshrl.u32 %v1145, 16
        %v1161 = vshrl.u32 %v1147, 16
        %v1162 = vpack.i.b16 %v1161, %v1160
        %v1164 = vcombine.high %v1150, %v839
        %v1166 = vunpack.c.l.s4 1983009808
        %v1167 = vunpack.c.0.s8 %v1166
        %v1168 = vlaneseq
        %v1169 = vshrl.u32 %v1168, 7
        %v1170 = vsub.s32 %v1167, %v1169
        %v1171 = vrot.slane %v1150, %v1170
        %v1173 = vunpack.c.l.s4 1983009808
        %v1174 = vunpack.c.0.s8 %v1173
        %v1175 = vlaneseq
        %v1176 = vshrl.u32 %v1175, 7
        %v1177 = vsub.s32 %v1174, %v1176
        %v1178 = vrot.slane %v1164, %v1177
        %v1179 = vcombine.high %v1158, %v839
        %v1181 = vunpack.c.l.s4 1983009808
        %v1182 = vunpack.c.0.s8 %v1181
        %v1183 = vlaneseq
        %v1184 = vshrl.u32 %v1183, 7
        %v1185 = vsub.s32 %v1182, %v1184
        %v1186 = vrot.slane %v1158, %v1185
        %v1188 = vunpack.c.l.s4 1983009808
        %v1189 = vunpack.c.0.s8 %v1188
        %v1190 = vlaneseq
        %v1191 = vshrl.u32 %v1190, 7
        %v1192 = vsub.s32 %v1189, %v1191
        %v1193 = vrot.slane %v1179, %v1192
        %v1194 = vcombine.low %v1171, %v1186
        %v1195 = vcombine.high %v1171, %v1186
        %v1197 = vunpack.c.l.s4 1934713408
        %v1198 = vunpack.c.0.s8 %v1197
        %v1199 = vlaneseq
        %v1200 = vshrl.u32 %v1199, 7
        %v1201 = vsub.s32 %v1198, %v1200
        %v1202 = vrot.slane %v1194, %v1201
        %v1204 = vunpack.c.l.s4 1934713408
        %v1205 = vunpack.c.0.s8 %v1204
        %v1206 = vlaneseq
        %v1207 = vshrl.u32 %v1206, 7
        %v1208 = vsub.s32 %v1205, %v1207
        %v1209 = vrot.slane %v1195, %v1208
        %v1210 = vcombine.low %v1178, %v1193
        %v1211 = vcombine.high %v1178, %v1193
        %v1213 = vunpack.c.l.s4 1934713408
        %v1214 = vunpack.c.0.s8 %v1213
        %v1215 = vlaneseq
        %v1216 = vshrl.u32 %v1215, 7
        %v1217 = vsub.s32 %v1214, %v1216
        %v1218 = vrot.slane %v1210, %v1217
        %v1220 = vunpack.c.l.s4 1934713408
        %v1221 = vunpack.c.0.s8 %v1220
        %v1222 = vlaneseq
        %v1223 = vshrl.u32 %v1222, 7
        %v1224 = vsub.s32 %v1221, %v1223
        %v1225 = vrot.slane %v1211, %v1224
        %v1226 = vcombine.high %v1202, 0
        %v1227 = vcombine.high %v1209, 0
        %v1228 = vcombine.high %v1218, 0
        %v1229 = vcombine.high %v1225, 0
        %v1230 = vcombine.high %v1154, %v842
        %v1232 = vunpack.c.l.s4 1983009808
        %v1233 = vunpack.c.0.s8 %v1232
        %v1234 = vlaneseq
        %v1235 = vshrl.u32 %v1234, 7
        %v1236 = vsub.s32 %v1233, %v1235
        %v1237 = vrot.slane %v1154, %v1236
        %v1239 = vunpack.c.l.s4 1983009808
        %v1240 = vunpack.c.0.s8 %v1239
        %v1241 = vlaneseq
        %v1242 = vshrl.u32 %v1241, 7
        %v1243 = vsub.s32 %v1240, %v1242
        %v1244 = vrot.slane %v1230, %v1243
        %v1245 = vcombine.high %v1162, %v842
        %v1247 = vunpack.c.l.s4 1983009808
        %v1248 = vunpack.c.0.s8 %v1247
        %v1249 = vlaneseq
        %v1250 = vshrl.u32 %v1249, 7
        %v1251 = vsub.s32 %v1248, %v1250
        %v1252 = vrot.slane %v1162, %v1251
        %v1254 = vunpack.c.l.s4 1983009808
        %v1255 = vunpack.c.0.s8 %v1254
        %v1256 = vlaneseq
        %v1257 = vshrl.u32 %v1256, 7
        %v1258 = vsub.s32 %v1255, %v1257
        %v1259 = vrot.slane %v1245, %v1258
        %v1260 = vcombine.low %v1237, %v1252
        %v1261 = vcombine.high %v1237, %v1252
        %v1263 = vunpack.c.l.s4 1934713408
        %v1264 = vunpack.c.0.s8 %v1263
        %v1265 = vlaneseq
        %v1266 = vshrl.u32 %v1265, 7
        %v1267 = vsub.s32 %v1264, %v1266
        %v1268 = vrot.slane %v1260, %v1267
        %v1270 = vunpack.c.l.s4 1934713408
        %v1271 = vunpack.c.0.s8 %v1270
        %v1272 = vlaneseq
        %v1273 = vshrl.u32 %v1272, 7
        %v1274 = vsub.s32 %v1271, %v1273
        %v1275 = vrot.slane %v1261, %v1274
        %v1276 = vcombine.low %v1244, %v1259
        %v1277 = vcombine.high %v1244, %v1259
        %v1279 = vunpack.c.l.s4 1934713408
        %v1280 = vunpack.c.0.s8 %v1279
        %v1281 = vlaneseq
        %v1282 = vshrl.u32 %v1281, 7
        %v1283 = vsub.s32 %v1280, %v1282
        %v1284 = vrot.slane %v1276, %v1283
        %v1286 = vunpack.c.l.s4 1934713408
        %v1287 = vunpack.c.0.s8 %v1286
        %v1288 = vlaneseq
        %v1289 = vshrl.u32 %v1288, 7
        %v1290 = vsub.s32 %v1287, %v1289
        %v1291 = vrot.slane %v1277, %v1290
        %v1292 = vcombine.high %v1268, 0
        %v1293 = vcombine.high %v1275, 0
        %v1294 = vcombine.high %v1284, 0
        %v1295 = vcombine.high %v1291, 0
        %v1296 = vcombine.low %v882, %v889
        %v1298 = vunpack.c.l.s4 1983009808
        %v1299 = vunpack.c.0.s8 %v1298
        %v1300 = vlaneseq
        %v1301 = vshrl.u32 %v1300, 7
        %v1302 = vsub.s32 %v1299, %v1301
        %v1303 = vrot.slane %v1296, %v1302
        %v1304 = vcombine.low %v906, %v907
        %v1306 = vunpack.c.l.s4 1983009808
        %v1307 = vunpack.c.0.s8 %v1306
        %v1308 = vlaneseq
        %v1309 = vshrl.u32 %v1308, 7
        %v1310 = vsub.s32 %v1307, %v1309
        %v1311 = vrot.slane %v1304, %v1310
        %v1312 = vcombine.low %v1303, %v1311
        %v1314 = vunpack.c.l.s4 1934713408
        %v1315 = vunpack.c.0.s8 %v1314
        %v1316 = vlaneseq
        %v1317 = vshrl.u32 %v1316, 7
        %v1318 = vsub.s32 %v1315, %v1317
        %v1319 = vrot.slane %v1312, %v1318
        %v1320 = vcombine.high %v1319, 0
        %v1321 = vcombine.low %v948, %v955
        %v1323 = vunpack.c.l.s4 1983009808
        %v1324 = vunpack.c.0.s8 %v1323
        %v1325 = vlaneseq
        %v1326 = vshrl.u32 %v1325, 7
        %v1327 = vsub.s32 %v1324, %v1326
        %v1328 = vrot.slane %v1321, %v1327
        %v1329 = vcombine.low %v972, %v973
        %v1331 = vunpack.c.l.s4 1983009808
        %v1332 = vunpack.c.0.s8 %v1331
        %v1333 = vlaneseq
        %v1334 = vshrl.u32 %v1333, 7
        %v1335 = vsub.s32 %v1332, %v1334
        %v1336 = vrot.slane %v1329, %v1335
        %v1337 = vcombine.low %v1328, %v1336
        %v1339 = vunpack.c.l.s4 1934713408
        %v1340 = vunpack.c.0.s8 %v1339
        %v1341 = vlaneseq
        %v1342 = vshrl.u32 %v1341, 7
        %v1343 = vsub.s32 %v1340, %v1342
        %v1344 = vrot.slane %v1337, %v1343
        %v1345 = vcombine.high %v1344, 0
        %v1346 = vcombine.low %v898, %v905
        %v1348 = vunpack.c.l.s4 1983009808
        %v1349 = vunpack.c.0.s8 %v1348
        %v1350 = vlaneseq
        %v1351 = vshrl.u32 %v1350, 7
        %v1352 = vsub.s32 %v1349, %v1351
        %v1353 = vrot.slane %v1346, %v1352
        %v1354 = vcombine.low %v908, %v909
        %v1356 = vunpack.c.l.s4 1983009808
        %v1357 = vunpack.c.0.s8 %v1356
        %v1358 = vlaneseq
        %v1359 = vshrl.u32 %v1358, 7
        %v1360 = vsub.s32 %v1357, %v1359
        %v1361 = vrot.slane %v1354, %v1360
        %v1362 = vcombine.low %v1353, %v1361
        %v1364 = vunpack.c.l.s4 1934713408
        %v1365 = vunpack.c.0.s8 %v1364
        %v1366 = vlaneseq
        %v1367 = vshrl.u32 %v1366, 7
        %v1368 = vsub.s32 %v1365, %v1367
        %v1369 = vrot.slane %v1362, %v1368
        %v1370 = vcombine.high %v1369, 0
        %v1371 = vcombine.low %v964, %v971
        %v1373 = vunpack.c.l.s4 1983009808
        %v1374 = vunpack.c.0.s8 %v1373
        %v1375 = vlaneseq
        %v1376 = vshrl.u32 %v1375, 7
        %v1377 = vsub.s32 %v1374, %v1376
        %v1378 = vrot.slane %v1371, %v1377
        %v1379 = vcombine.low %v974, %v975
        %v1381 = vunpack.c.l.s4 1983009808
        %v1382 = vunpack.c.0.s8 %v1381
        %v1383 = vlaneseq
        %v1384 = vshrl.u32 %v1383, 7
        %v1385 = vsub.s32 %v1382, %v1384
        %v1386 = vrot.slane %v1379, %v1385
        %v1387 = vcombine.low %v1378, %v1386
        %v1389 = vunpack.c.l.s4 1934713408
        %v1390 = vunpack.c.0.s8 %v1389
        %v1391 = vlaneseq
        %v1392 = vshrl.u32 %v1391, 7
        %v1393 = vsub.s32 %v1390, %v1392
        %v1394 = vrot.slane %v1387, %v1393
        %v1395 = vcombine.high %v1394, 0
        %v1398 = vpack.i.b16 %v1344, %v1319
        %v1399 = vshrl.u32 %v1319, 16
        %v1400 = vshrl.u32 %v1344, 16
        %v1401 = vpack.i.b16 %v1400, %v1399
        %v1404 = vpack.i.b16 %v1345, %v1320
        %v1405 = vshrl.u32 %v1320, 16
        %v1406 = vshrl.u32 %v1345, 16
        %v1407 = vpack.i.b16 %v1406, %v1405
        %v1410 = vpack.i.b16 %v1394, %v1369
        %v1411 = vshrl.u32 %v1369, 16
        %v1412 = vshrl.u32 %v1394, 16
        %v1413 = vpack.i.b16 %v1412, %v1411
        %v1416 = vpack.i.b16 %v1395, %v1370
        %v1417 = vshrl.u32 %v1370, 16
        %v1418 = vshrl.u32 %v1395, 16
        %v1419 = vpack.i.b16 %v1418, %v1417
        %v1420 = vcombine.low %v1046, %v1053
        %v1422 = vunpack.c.l.s4 1983009808
        %v1423 = vunpack.c.0.s8 %v1422
        %v1424 = vlaneseq
        %v1425 = vshrl.u32 %v1424, 7
        %v1426 = vsub.s32 %v1423, %v1425
        %v1427 = vrot.slane %v1420, %v1426
        %v1428 = vcombine.low %v1070, %v1071
        %v1430 = vunpack.c.l.s4 1983009808
        %v1431 = vunpack.c.0.s8 %v1430
        %v1432 = vlaneseq
        %v1433 = vshrl.u32 %v1432, 7
        %v1434 = vsub.s32 %v1431, %v1433
        %v1435 = vrot.slane %v1428, %v1434
        %v1436 = vcombine.low %v1427, %v1435
        %v1438 = vunpack.c.l.s4 1934713408
        %v1439 = vunpack.c.0.s8 %v1438
        %v1440 = vlaneseq
        %v1441 = vshrl.u32 %v1440, 7
        %v1442 = vsub.s32 %v1439, %v1441
        %v1443 = vrot.slane %v1436, %v1442
        %v1444 = vcombine.high %v1443, 0
        %v1445 = vcombine.low %v1112, %v1119
        %v1447 = vunpack.c.l.s4 1983009808
        %v1448 = vunpack.c.0.s8 %v1447
        %v1449 = vlaneseq
        %v1450 = vshrl.u32 %v1449, 7
        %v1451 = vsub.s32 %v1448, %v1450
        %v1452 = vrot.slane %v1445, %v1451
        %v1453 = vcombine.low %v1136, %v1137
        %v1455 = vunpack.c.l.s4 1983009808
        %v1456 = vunpack.c.0.s8 %v1455
        %v1457 = vlaneseq
        %v1458 = vshrl.u32 %v1457, 7
        %v1459 = vsub.s32 %v1456, %v1458
        %v1460 = vrot.slane %v1453, %v1459
        %v1461 = vcombine.low %v1452, %v1460
        %v1463 = vunpack.c.l.s4 1934713408
        %v1464 = vunpack.c.0.s8 %v1463
        %v1465 = vlaneseq
        %v1466 = vshrl.u32 %v1465, 7
        %v1467 = vsub.s32 %v1464, %v1466
        %v1468 = vrot.slane %v1461, %v1467
        %v1469 = vcombine.high %v1468, 0
        %v1470 = vcombine.low %v1062, %v1069
        %v1472 = vunpack.c.l.s4 1983009808
        %v1473 = vunpack.c.0.s8 %v1472
        %v1474 = vlaneseq
        %v1475 = vshrl.u32 %v1474, 7
        %v1476 = vsub.s32 %v1473, %v1475
        %v1477 = vrot.slane %v1470, %v1476
        %v1478 = vcombine.low %v1072, %v1073
        %v1480 = vunpack.c.l.s4 1983009808
        %v1481 = vunpack.c.0.s8 %v1480
        %v1482 = vlaneseq
        %v1483 = vshrl.u32 %v1482, 7
        %v1484 = vsub.s32 %v1481, %v1483
        %v1485 = vrot.slane %v1478, %v1484
        %v1486 = vcombine.low %v1477, %v1485
        %v1488 = vunpack.c.l.s4 1934713408
        %v1489 = vunpack.c.0.s8 %v1488
        %v1490 = vlaneseq
        %v1491 = vshrl.u32 %v1490, 7
        %v1492 = vsub.s32 %v1489, %v1491
        %v1493 = vrot.slane %v1486, %v1492
        %v1494 = vcombine.high %v1493, 0
        %v1495 = vcombine.low %v1128, %v1135
        %v1497 = vunpack.c.l.s4 1983009808
        %v1498 = vunpack.c.0.s8 %v1497
        %v1499 = vlaneseq
        %v1500 = vshrl.u32 %v1499, 7
        %v1501 = vsub.s32 %v1498, %v1500
        %v1502 = vrot.slane %v1495, %v1501
        %v1503 = vcombine.low %v1138, %v1139
        %v1505 = vunpack.c.l.s4 1983009808
        %v1506 = vunpack.c.0.s8 %v1505
        %v1507 = vlaneseq
        %v1508 = vshrl.u32 %v1507, 7
        %v1509 = vsub.s32 %v1506, %v1508
        %v1510 = vrot.slane %v1503, %v1509
        %v1511 = vcombine.low %v1502, %v1510
        %v1513 = vunpack.c.l.s4 1934713408
        %v1514 = vunpack.c.0.s8 %v1513
        %v1515 = vlaneseq
        %v1516 = vshrl.u32 %v1515, 7
        %v1517 = vsub.s32 %v1514, %v1516
        %v1518 = vrot.slane %v1511, %v1517
        %v1519 = vcombine.high %v1518, 0
        %v1522 = vpack.i.b16 %v1468, %v1443
        %v1523 = vshrl.u32 %v1443, 16
        %v1524 = vshrl.u32 %v1468, 16
        %v1525 = vpack.i.b16 %v1524, %v1523
        %v1528 = vpack.i.b16 %v1469, %v1444
        %v1529 = vshrl.u32 %v1444, 16
        %v1530 = vshrl.u32 %v1469, 16
        %v1531 = vpack.i.b16 %v1530, %v1529
        %v1534 = vpack.i.b16 %v1518, %v1493
        %v1535 = vshrl.u32 %v1493, 16
        %v1536 = vshrl.u32 %v1518, 16
        %v1537 = vpack.i.b16 %v1536, %v1535
        %v1540 = vpack.i.b16 %v1519, %v1494
        %v1541 = vshrl.u32 %v1494, 16
        %v1542 = vshrl.u32 %v1519, 16
        %v1543 = vpack.i.b16 %v1542, %v1541
        %v1544 = vcombine.low %v1202, %v1209
        %v1546 = vunpack.c.l.s4 1983009808
        %v1547 = vunpack.c.0.s8 %v1546
        %v1548 = vlaneseq
        %v1549 = vshrl.u32 %v1548, 7
        %v1550 = vsub.s32 %v1547, %v1549
        %v1551 = vrot.slane %v1544, %v1550
        %v1552 = vcombine.low %v1226, %v1227
        %v1554 = vunpack.c.l.s4 1983009808
        %v1555 = vunpack.c.0.s8 %v1554
        %v1556 = vlaneseq
        %v1557 = vshrl.u32 %v1556, 7
        %v1558 = vsub.s32 %v1555, %v1557
        %v1559 = vrot.slane %v1552, %v1558
        %v1560 = vcombine.low %v1551, %v1559
        %v1562 = vunpack.c.l.s4 1934713408
        %v1563 = vunpack.c.0.s8 %v1562
        %v1564 = vlaneseq
        %v1565 = vshrl.u32 %v1564, 7
        %v1566 = vsub.s32 %v1563, %v1565
        %v1567 = vrot.slane %v1560, %v1566
        %v1568 = vcombine.high %v1567, 0
        %v1569 = vcombine.low %v1268, %v1275
        %v1571 = vunpack.c.l.s4 1983009808
        %v1572 = vunpack.c.0.s8 %v1571
        %v1573 = vlaneseq
        %v1574 = vshrl.u32 %v1573, 7
        %v1575 = vsub.s32 %v1572, %v1574
        %v1576 = vrot.slane %v1569, %v1575
        %v1577 = vcombine.low %v1292, %v1293
        %v1579 = vunpack.c.l.s4 1983009808
        %v1580 = vunpack.c.0.s8 %v1579
        %v1581 = vlaneseq
        %v1582 = vshrl.u32 %v1581, 7
        %v1583 = vsub.s32 %v1580, %v1582
        %v1584 = vrot.slane %v1577, %v1583
        %v1585 = vcombine.low %v1576, %v1584
        %v1587 = vunpack.c.l.s4 1934713408
        %v1588 = vunpack.c.0.s8 %v1587
        %v1589 = vlaneseq
        %v1590 = vshrl.u32 %v1589, 7
        %v1591 = vsub.s32 %v1588, %v1590
        %v1592 = vrot.slane %v1585, %v1591
        %v1593 = vcombine.high %v1592, 0
        %v1594 = vcombine.low %v1218, %v1225
        %v1596 = vunpack.c.l.s4 1983009808
        %v1597 = vunpack.c.0.s8 %v1596
        %v1598 = vlaneseq
        %v1599 = vshrl.u32 %v1598, 7
        %v1600 = vsub.s32 %v1597, %v1599
        %v1601 = vrot.slane %v1594, %v1600
        %v1602 = vcombine.low %v1228, %v1229
        %v1604 = vunpack.c.l.s4 1983009808
        %v1605 = vunpack.c.0.s8 %v1604
        %v1606 = vlaneseq
        %v1607 = vshrl.u32 %v1606, 7
        %v1608 = vsub.s32 %v1605, %v1607
        %v1609 = vrot.slane %v1602, %v1608
        %v1610 = vcombine.low %v1601, %v1609
        %v1612 = vunpack.c.l.s4 1934713408
        %v1613 = vunpack.c.0.s8 %v1612
        %v1614 = vlaneseq
        %v1615 = vshrl.u32 %v1614, 7
        %v1616 = vsub.s32 %v1613, %v1615
        %v1617 = vrot.slane %v1610, %v1616
        %v1618 = vcombine.high %v1617, 0
        %v1619 = vcombine.low %v1284, %v1291
        %v1621 = vunpack.c.l.s4 1983009808
        %v1622 = vunpack.c.0.s8 %v1621
        %v1623 = vlaneseq
        %v1624 = vshrl.u32 %v1623, 7
        %v1625 = vsub.s32 %v1622, %v1624
        %v1626 = vrot.slane %v1619, %v1625
        %v1627 = vcombine.low %v1294, %v1295
        %v1629 = vunpack.c.l.s4 1983009808
        %v1630 = vunpack.c.0.s8 %v1629
        %v1631 = vlaneseq
        %v1632 = vshrl.u32 %v1631, 7
        %v1633 = vsub.s32 %v1630, %v1632
        %v1634 = vrot.slane %v1627, %v1633
        %v1635 = vcombine.low %v1626, %v1634
        %v1637 = vunpack.c.l.s4 1934713408
        %v1638 = vunpack.c.0.s8 %v1637
        %v1639 = vlaneseq
        %v1640 = vshrl.u32 %v1639, 7
        %v1641 = vsub.s32 %v1638, %v1640
        %v1642 = vrot.slane %v1635, %v1641
        %v1643 = vcombine.high %v1642, 0
        %v1646 = vpack.i.b16 %v1592, %v1567
        %v1647 = vshrl.u32 %v1567, 16
        %v1648 = vshrl.u32 %v1592, 16
        %v1649 = vpack.i.b16 %v1648, %v1647
        %v1652 = vpack.i.b16 %v1593, %v1568
        %v1653 = vshrl.u32 %v1568, 16
        %v1654 = vshrl.u32 %v1593, 16
        %v1655 = vpack.i.b16 %v1654, %v1653
        %v1658 = vpack.i.b16 %v1642, %v1617
        %v1659 = vshrl.u32 %v1617, 16
        %v1660 = vshrl.u32 %v1642, 16
        %v1661 = vpack.i.b16 %v1660, %v1659
        %v1664 = vpack.i.b16 %v1643, %v1618
        %v1665 = vshrl.u32 %v1618, 16
        %v1666 = vshrl.u32 %v1643, 16
        %v1667 = vpack.i.b16 %v1666, %v1665
        %vm1668 = vcmask 64512
        %v1670 = vsel %vm1668, %v1398, 0
        %v1673 = vsel %vm1668, %v1522, 0
        %1675 = vmatprep.subr.bf16.mxu0 0
        %1676 = vmatpush1.bf16.xpose.msra.mxu0 %v1673
        %1677 = vmatprep.subr.bf16.mxu0 0
        %1678 = vmatpush1.bf16.xpose.msra.mxu0 0
        %1679 = vmatprep.subr.bf16.mxu0 0
        %1680 = vmatpush1.bf16.xpose.msra.mxu0 0
        %1681 = vmatprep.subr.bf16.mxu0 0
        %1682 = vmatpush1.bf16.xpose.msra.mxu0 0
        %1683 = vmatprep.subr.bf16.mxu0 0
        %1684 = vmatpush1.bf16.xpose.msra.mxu0 0
        %1685 = vmatprep.subr.bf16.mxu0 0
        %1686 = vmatpush1.bf16.xpose.msra.mxu0 0
        %1687 = vmatprep.subr.bf16.mxu0 0
        %1688 = vmatpush1.bf16.xpose.msra.mxu0 0
        %1689 = vmatprep.subr.bf16.mxu0 0
        %1690 = vmatpush1.bf16.xpose.msra.mxu0 0
        %1691 = vmatprep.subr.bf16.mxu0 0
        %1692 = vmatpush1.bf16.xpose.msra.mxu0 0
        %1693 = vmatprep.subr.bf16.mxu0 0
        %1694 = vmatpush1.bf16.xpose.msra.mxu0 0
        %1695 = vmatprep.subr.bf16.mxu0 0
        %1696 = vmatpush1.bf16.xpose.msra.mxu0 0
        %1697 = vmatprep.subr.bf16.mxu0 0
        %1698 = vmatpush1.bf16.xpose.msra.mxu0 0
        %1699 = vmatprep.subr.bf16.mxu0 0
        %1700 = vmatpush1.bf16.xpose.msra.mxu0 0
        %1701 = vmatprep.subr.bf16.mxu0 0
        %1702 = vmatpush1.bf16.xpose.msra.mxu0 0
        %1703 = vmatprep.subr.bf16.mxu0 0
        %1704 = vmatpush1.bf16.xpose.msra.mxu0 0
        %1705 = vmatprep.subr.bf16.mxu0 0
        %1706 = vmatpush1.bf16.xpose.msra.mxu0 0
        %1707 = vmatprep.mubr.bf16.mxu0 0
        %1708 = vmatmul.mubr.bf16.gmra.mrb[0].mxu0 %v1670
        %v1709 = vpop.f32.mrb[0].mxu0
        %v1710 = vadd.f32 0.0, %v1709
        %v1711 = vpop.f32.mrb[0].mxu0
        %v1712 = vpop.f32.mrb[0].mxu0
        %v1713 = vpop.f32.mrb[0].mxu0
        %1714 = vdwg.mxu0
        %v1716 = vsel %vm1668, %v1401, 0
        %v1719 = vsel %vm1668, %v1525, 0
        %1721 = vmatprep.subr.bf16.mxu0 0
        %1722 = vmatpush1.bf16.xpose.msra.mxu0 %v1719
        %1723 = vmatprep.subr.bf16.mxu0 0
        %1724 = vmatpush1.bf16.xpose.msra.mxu0 0
        %1725 = vmatprep.subr.bf16.mxu0 0
        %1726 = vmatpush1.bf16.xpose.msra.mxu0 0
        %1727 = vmatprep.subr.bf16.mxu0 0
        %1728 = vmatpush1.bf16.xpose.msra.mxu0 0
        %1729 = vmatprep.subr.bf16.mxu0 0
        %1730 = vmatpush1.bf16.xpose.msra.mxu0 0
        %1731 = vmatprep.subr.bf16.mxu0 0
        %1732 = vmatpush1.bf16.xpose.msra.mxu0 0
        %1733 = vmatprep.subr.bf16.mxu0 0
        %1734 = vmatpush1.bf16.xpose.msra.mxu0 0
        %1735 = vmatprep.subr.bf16.mxu0 0
        %1736 = vmatpush1.bf16.xpose.msra.mxu0 0
        %1737 = vmatprep.subr.bf16.mxu0 0
        %1738 = vmatpush1.bf16.xpose.msra.mxu0 0
        %1739 = vmatprep.subr.bf16.mxu0 0
        %1740 = vmatpush1.bf16.xpose.msra.mxu0 0
        %1741 = vmatprep.subr.bf16.mxu0 0
        %1742 = vmatpush1.bf16.xpose.msra.mxu0 0
        %1743 = vmatprep.subr.bf16.mxu0 0
        %1744 = vmatpush1.bf16.xpose.msra.mxu0 0
        %1745 = vmatprep.subr.bf16.mxu0 0
        %1746 = vmatpush1.bf16.xpose.msra.mxu0 0
        %1747 = vmatprep.subr.bf16.mxu0 0
        %1748 = vmatpush1.bf16.xpose.msra.mxu0 0
        %1749 = vmatprep.subr.bf16.mxu0 0
        %1750 = vmatpush1.bf16.xpose.msra.mxu0 0
        %1751 = vmatprep.subr.bf16.mxu0 0
        %1752 = vmatpush1.bf16.xpose.msra.mxu0 0
        %1753 = vmatprep.mubr.bf16.mxu0 0
        %1754 = vmatmul.mubr.bf16.gmra.mrb[0].mxu0 %v1716
        %v1755 = vpop.f32.mrb[0].mxu0
        %v1756 = vadd.f32 0.0, %v1755
        %v1757 = vpop.f32.mrb[0].mxu0
        %v1758 = vpop.f32.mrb[0].mxu0
        %v1759 = vpop.f32.mrb[0].mxu0
        %1760 = vdwg.mxu0
        %v1762 = vsel %vm1668, %v1404, 0
        %v1765 = vsel %vm1668, %v1528, 0
        %1767 = vmatprep.subr.bf16.mxu0 0
        %1768 = vmatpush1.bf16.xpose.msra.mxu0 %v1765
        %1769 = vmatprep.subr.bf16.mxu0 0
        %1770 = vmatpush1.bf16.xpose.msra.mxu0 0
        %1771 = vmatprep.subr.bf16.mxu0 0
        %1772 = vmatpush1.bf16.xpose.msra.mxu0 0
        %1773 = vmatprep.subr.bf16.mxu0 0
        %1774 = vmatpush1.bf16.xpose.msra.mxu0 0
        %1775 = vmatprep.subr.bf16.mxu0 0
        %1776 = vmatpush1.bf16.xpose.msra.mxu0 0
        %1777 = vmatprep.subr.bf16.mxu0 0
        %1778 = vmatpush1.bf16.xpose.msra.mxu0 0
        %1779 = vmatprep.subr.bf16.mxu0 0
        %1780 = vmatpush1.bf16.xpose.msra.mxu0 0
        %1781 = vmatprep.subr.bf16.mxu0 0
        %1782 = vmatpush1.bf16.xpose.msra.mxu0 0
        %1783 = vmatprep.subr.bf16.mxu0 0
        %1784 = vmatpush1.bf16.xpose.msra.mxu0 0
        %1785 = vmatprep.subr.bf16.mxu0 0
        %1786 = vmatpush1.bf16.xpose.msra.mxu0 0
        %1787 = vmatprep.subr.bf16.mxu0 0
        %1788 = vmatpush1.bf16.xpose.msra.mxu0 0
        %1789 = vmatprep.subr.bf16.mxu0 0
        %1790 = vmatpush1.bf16.xpose.msra.mxu0 0
        %1791 = vmatprep.subr.bf16.mxu0 0
        %1792 = vmatpush1.bf16.xpose.msra.mxu0 0
        %1793 = vmatprep.subr.bf16.mxu0 0
        %1794 = vmatpush1.bf16.xpose.msra.mxu0 0
        %1795 = vmatprep.subr.bf16.mxu0 0
        %1796 = vmatpush1.bf16.xpose.msra.mxu0 0
        %1797 = vmatprep.subr.bf16.mxu0 0
        %1798 = vmatpush1.bf16.xpose.msra.mxu0 0
        %1799 = vmatprep.mubr.bf16.mxu0 0
        %1800 = vmatmul.mubr.bf16.gmra.mrb[0].mxu0 %v1762
        %v1801 = vpop.f32.mrb[0].mxu0
        %v1802 = vadd.f32 0.0, %v1801
        %v1803 = vpop.f32.mrb[0].mxu0
        %v1804 = vpop.f32.mrb[0].mxu0
        %v1805 = vpop.f32.mrb[0].mxu0
        %1806 = vdwg.mxu0
        %v1808 = vsel %vm1668, %v1407, 0
        %v1811 = vsel %vm1668, %v1531, 0
        %1813 = vmatprep.subr.bf16.mxu0 0
        %1814 = vmatpush1.bf16.xpose.msra.mxu0 %v1811
        %1815 = vmatprep.subr.bf16.mxu0 0
        %1816 = vmatpush1.bf16.xpose.msra.mxu0 0
        %1817 = vmatprep.subr.bf16.mxu0 0
        %1818 = vmatpush1.bf16.xpose.msra.mxu0 0
        %1819 = vmatprep.subr.bf16.mxu0 0
        %1820 = vmatpush1.bf16.xpose.msra.mxu0 0
        %1821 = vmatprep.subr.bf16.mxu0 0
        %1822 = vmatpush1.bf16.xpose.msra.mxu0 0
        %1823 = vmatprep.subr.bf16.mxu0 0
        %1824 = vmatpush1.bf16.xpose.msra.mxu0 0
        %1825 = vmatprep.subr.bf16.mxu0 0
        %1826 = vmatpush1.bf16.xpose.msra.mxu0 0
        %1827 = vmatprep.subr.bf16.mxu0 0
        %1828 = vmatpush1.bf16.xpose.msra.mxu0 0
        %1829 = vmatprep.subr.bf16.mxu0 0
        %1830 = vmatpush1.bf16.xpose.msra.mxu0 0
        %1831 = vmatprep.subr.bf16.mxu0 0
        %1832 = vmatpush1.bf16.xpose.msra.mxu0 0
        %1833 = vmatprep.subr.bf16.mxu0 0
        %1834 = vmatpush1.bf16.xpose.msra.mxu0 0
        %1835 = vmatprep.subr.bf16.mxu0 0
        %1836 = vmatpush1.bf16.xpose.msra.mxu0 0
        %1837 = vmatprep.subr.bf16.mxu0 0
        %1838 = vmatpush1.bf16.xpose.msra.mxu0 0
        %1839 = vmatprep.subr.bf16.mxu0 0
        %1840 = vmatpush1.bf16.xpose.msra.mxu0 0
        %1841 = vmatprep.subr.bf16.mxu0 0
        %1842 = vmatpush1.bf16.xpose.msra.mxu0 0
        %1843 = vmatprep.subr.bf16.mxu0 0
        %1844 = vmatpush1.bf16.xpose.msra.mxu0 0
        %1845 = vmatprep.mubr.bf16.mxu0 0
        %1846 = vmatmul.mubr.bf16.gmra.mrb[0].mxu0 %v1808
        %v1847 = vpop.f32.mrb[0].mxu0
        %v1848 = vadd.f32 0.0, %v1847
        %v1849 = vpop.f32.mrb[0].mxu0
        %v1850 = vpop.f32.mrb[0].mxu0
        %v1851 = vpop.f32.mrb[0].mxu0
        %1852 = vdwg.mxu0
        %v1854 = vsel %vm1668, %v1410, 0
        %v1857 = vsel %vm1668, %v1534, 0
        %1859 = vmatprep.subr.bf16.mxu0 0
        %1860 = vmatpush1.bf16.xpose.msra.mxu0 %v1857
        %1861 = vmatprep.subr.bf16.mxu0 0
        %1862 = vmatpush1.bf16.xpose.msra.mxu0 0
        %1863 = vmatprep.subr.bf16.mxu0 0
        %1864 = vmatpush1.bf16.xpose.msra.mxu0 0
        %1865 = vmatprep.subr.bf16.mxu0 0
        %1866 = vmatpush1.bf16.xpose.msra.mxu0 0
        %1867 = vmatprep.subr.bf16.mxu0 0
        %1868 = vmatpush1.bf16.xpose.msra.mxu0 0
        %1869 = vmatprep.subr.bf16.mxu0 0
        %1870 = vmatpush1.bf16.xpose.msra.mxu0 0
        %1871 = vmatprep.subr.bf16.mxu0 0
        %1872 = vmatpush1.bf16.xpose.msra.mxu0 0
        %1873 = vmatprep.subr.bf16.mxu0 0
        %1874 = vmatpush1.bf16.xpose.msra.mxu0 0
        %1875 = vmatprep.subr.bf16.mxu0 0
        %1876 = vmatpush1.bf16.xpose.msra.mxu0 0
        %1877 = vmatprep.subr.bf16.mxu0 0
        %1878 = vmatpush1.bf16.xpose.msra.mxu0 0
        %1879 = vmatprep.subr.bf16.mxu0 0
        %1880 = vmatpush1.bf16.xpose.msra.mxu0 0
        %1881 = vmatprep.subr.bf16.mxu0 0
        %1882 = vmatpush1.bf16.xpose.msra.mxu0 0
        %1883 = vmatprep.subr.bf16.mxu0 0
        %1884 = vmatpush1.bf16.xpose.msra.mxu0 0
        %1885 = vmatprep.subr.bf16.mxu0 0
        %1886 = vmatpush1.bf16.xpose.msra.mxu0 0
        %1887 = vmatprep.subr.bf16.mxu0 0
        %1888 = vmatpush1.bf16.xpose.msra.mxu0 0
        %1889 = vmatprep.subr.bf16.mxu0 0
        %1890 = vmatpush1.bf16.xpose.msra.mxu0 0
        %1891 = vmatprep.mubr.bf16.mxu0 0
        %1892 = vmatmul.mubr.bf16.gmra.mrb[0].mxu0 %v1854
        %v1893 = vpop.f32.mrb[0].mxu0
        %v1894 = vadd.f32 0.0, %v1893
        %v1895 = vpop.f32.mrb[0].mxu0
        %v1896 = vpop.f32.mrb[0].mxu0
        %v1897 = vpop.f32.mrb[0].mxu0
        %1898 = vdwg.mxu0
        %v1900 = vsel %vm1668, %v1413, 0
        %v1903 = vsel %vm1668, %v1537, 0
        %1905 = vmatprep.subr.bf16.mxu0 0
        %1906 = vmatpush1.bf16.xpose.msra.mxu0 %v1903
        %1907 = vmatprep.subr.bf16.mxu0 0
        %1908 = vmatpush1.bf16.xpose.msra.mxu0 0
        %1909 = vmatprep.subr.bf16.mxu0 0
        %1910 = vmatpush1.bf16.xpose.msra.mxu0 0
        %1911 = vmatprep.subr.bf16.mxu0 0
        %1912 = vmatpush1.bf16.xpose.msra.mxu0 0
        %1913 = vmatprep.subr.bf16.mxu0 0
        %1914 = vmatpush1.bf16.xpose.msra.mxu0 0
        %1915 = vmatprep.subr.bf16.mxu0 0
        %1916 = vmatpush1.bf16.xpose.msra.mxu0 0
        %1917 = vmatprep.subr.bf16.mxu0 0
        %1918 = vmatpush1.bf16.xpose.msra.mxu0 0
        %1919 = vmatprep.subr.bf16.mxu0 0
        %1920 = vmatpush1.bf16.xpose.msra.mxu0 0
        %1921 = vmatprep.subr.bf16.mxu0 0
        %1922 = vmatpush1.bf16.xpose.msra.mxu0 0
        %1923 = vmatprep.subr.bf16.mxu0 0
        %1924 = vmatpush1.bf16.xpose.msra.mxu0 0
        %1925 = vmatprep.subr.bf16.mxu0 0
        %1926 = vmatpush1.bf16.xpose.msra.mxu0 0
        %1927 = vmatprep.subr.bf16.mxu0 0
        %1928 = vmatpush1.bf16.xpose.msra.mxu0 0
        %1929 = vmatprep.subr.bf16.mxu0 0
        %1930 = vmatpush1.bf16.xpose.msra.mxu0 0
        %1931 = vmatprep.subr.bf16.mxu0 0
        %1932 = vmatpush1.bf16.xpose.msra.mxu0 0
        %1933 = vmatprep.subr.bf16.mxu0 0
        %1934 = vmatpush1.bf16.xpose.msra.mxu0 0
        %1935 = vmatprep.subr.bf16.mxu0 0
        %1936 = vmatpush1.bf16.xpose.msra.mxu0 0
        %1937 = vmatprep.mubr.bf16.mxu0 0
        %1938 = vmatmul.mubr.bf16.gmra.mrb[0].mxu0 %v1900
        %v1939 = vpop.f32.mrb[0].mxu0
        %v1940 = vadd.f32 0.0, %v1939
        %v1941 = vpop.f32.mrb[0].mxu0
        %v1942 = vpop.f32.mrb[0].mxu0
        %v1943 = vpop.f32.mrb[0].mxu0
        %1944 = vdwg.mxu0
        %v1946 = vsel %vm1668, %v1416, 0
        %v1949 = vsel %vm1668, %v1540, 0
        %1951 = vmatprep.subr.bf16.mxu0 0
        %1952 = vmatpush1.bf16.xpose.msra.mxu0 %v1949
        %1953 = vmatprep.subr.bf16.mxu0 0
        %1954 = vmatpush1.bf16.xpose.msra.mxu0 0
        %1955 = vmatprep.subr.bf16.mxu0 0
        %1956 = vmatpush1.bf16.xpose.msra.mxu0 0
        %1957 = vmatprep.subr.bf16.mxu0 0
        %1958 = vmatpush1.bf16.xpose.msra.mxu0 0
        %1959 = vmatprep.subr.bf16.mxu0 0
        %1960 = vmatpush1.bf16.xpose.msra.mxu0 0
        %1961 = vmatprep.subr.bf16.mxu0 0
        %1962 = vmatpush1.bf16.xpose.msra.mxu0 0
        %1963 = vmatprep.subr.bf16.mxu0 0
        %1964 = vmatpush1.bf16.xpose.msra.mxu0 0
        %1965 = vmatprep.subr.bf16.mxu0 0
        %1966 = vmatpush1.bf16.xpose.msra.mxu0 0
        %1967 = vmatprep.subr.bf16.mxu0 0
        %1968 = vmatpush1.bf16.xpose.msra.mxu0 0
        %1969 = vmatprep.subr.bf16.mxu0 0
        %1970 = vmatpush1.bf16.xpose.msra.mxu0 0
        %1971 = vmatprep.subr.bf16.mxu0 0
        %1972 = vmatpush1.bf16.xpose.msra.mxu0 0
        %1973 = vmatprep.subr.bf16.mxu0 0
        %1974 = vmatpush1.bf16.xpose.msra.mxu0 0
        %1975 = vmatprep.subr.bf16.mxu0 0
        %1976 = vmatpush1.bf16.xpose.msra.mxu0 0
        %1977 = vmatprep.subr.bf16.mxu0 0
        %1978 = vmatpush1.bf16.xpose.msra.mxu0 0
        %1979 = vmatprep.subr.bf16.mxu0 0
        %1980 = vmatpush1.bf16.xpose.msra.mxu0 0
        %1981 = vmatprep.subr.bf16.mxu0 0
        %1982 = vmatpush1.bf16.xpose.msra.mxu0 0
        %1983 = vmatprep.mubr.bf16.mxu0 0
        %1984 = vmatmul.mubr.bf16.gmra.mrb[0].mxu0 %v1946
        %v1985 = vpop.f32.mrb[0].mxu0
        %v1986 = vadd.f32 0.0, %v1985
        %v1987 = vpop.f32.mrb[0].mxu0
        %v1988 = vpop.f32.mrb[0].mxu0
        %v1989 = vpop.f32.mrb[0].mxu0
        %1990 = vdwg.mxu0
        %v1992 = vsel %vm1668, %v1419, 0
        %v1995 = vsel %vm1668, %v1543, 0
        %1997 = vmatprep.subr.bf16.mxu0 0
        %1998 = vmatpush1.bf16.xpose.msra.mxu0 %v1995
        %1999 = vmatprep.subr.bf16.mxu0 0
        %2000 = vmatpush1.bf16.xpose.msra.mxu0 0
        %2001 = vmatprep.subr.bf16.mxu0 0
        %2002 = vmatpush1.bf16.xpose.msra.mxu0 0
        %2003 = vmatprep.subr.bf16.mxu0 0
        %2004 = vmatpush1.bf16.xpose.msra.mxu0 0
        %2005 = vmatprep.subr.bf16.mxu0 0
        %2006 = vmatpush1.bf16.xpose.msra.mxu0 0
        %2007 = vmatprep.subr.bf16.mxu0 0
        %2008 = vmatpush1.bf16.xpose.msra.mxu0 0
        %2009 = vmatprep.subr.bf16.mxu0 0
        %2010 = vmatpush1.bf16.xpose.msra.mxu0 0
        %2011 = vmatprep.subr.bf16.mxu0 0
        %2012 = vmatpush1.bf16.xpose.msra.mxu0 0
        %2013 = vmatprep.subr.bf16.mxu0 0
        %2014 = vmatpush1.bf16.xpose.msra.mxu0 0
        %2015 = vmatprep.subr.bf16.mxu0 0
        %2016 = vmatpush1.bf16.xpose.msra.mxu0 0
        %2017 = vmatprep.subr.bf16.mxu0 0
        %2018 = vmatpush1.bf16.xpose.msra.mxu0 0
        %2019 = vmatprep.subr.bf16.mxu0 0
        %2020 = vmatpush1.bf16.xpose.msra.mxu0 0
        %2021 = vmatprep.subr.bf16.mxu0 0
        %2022 = vmatpush1.bf16.xpose.msra.mxu0 0
        %2023 = vmatprep.subr.bf16.mxu0 0
        %2024 = vmatpush1.bf16.xpose.msra.mxu0 0
        %2025 = vmatprep.subr.bf16.mxu0 0
        %2026 = vmatpush1.bf16.xpose.msra.mxu0 0
        %2027 = vmatprep.subr.bf16.mxu0 0
        %2028 = vmatpush1.bf16.xpose.msra.mxu0 0
        %2029 = vmatprep.mubr.bf16.mxu0 0
        %2030 = vmatmul.mubr.bf16.gmra.mrb[0].mxu0 %v1992
        %v2031 = vpop.f32.mrb[0].mxu0
        %v2032 = vadd.f32 0.0, %v2031
        %v2033 = vpop.f32.mrb[0].mxu0
        %v2034 = vpop.f32.mrb[0].mxu0
        %v2035 = vpop.f32.mrb[0].mxu0
        %2036 = vdwg.mxu0
        %v2037 = vlaneseq
        %v2038 = vshrl.u32 %v2037, 7
        %v2039 = vlaneseq
        %v2040 = vand.u32 %v2039, 127
        %vm2041 = vcmp.gt.s32.totalorder %v2040, %v2038
        %v2042 = vsel %vm2041, -1e+30, 0.0
        %v2043 = vld [vmem:[%s679] sm:$0x1]
        %v2044 = vld [vmem:[%s679 + $0x1] sm:$0x1]
        %v2045 = vadd.f32 %v1710, %v2042
        %v2046 = vadd.f32 %v1756, %v2042
        %v2047 = vadd.f32 %v1802, %v2042
        %v2048 = vadd.f32 %v1848, %v2042
        %v2049 = vadd.f32 %v1894, %v2042
        %v2050 = vadd.f32 %v1940, %v2042
        %v2051 = vadd.f32 %v1986, %v2042
        %v2052 = vadd.f32 %v2032, %v2042
        %v2055 = vlaneseq
        %v2056 = vshrl.u32 %v2055, 7
        %v2057 = vsub.s32 0, %v2056
        %v2058 = vrot.slane %v2043, %v2057
        %v2059 = vlaneseq
        %v2060 = vshrl.u32 %v2059, 7
        %v2061 = vsub.s32 0, %v2060
        %v2062 = vrot.slane %v2044, %v2061
        %v2065 = vadd.f32 %v2045, %v2058
        %v2066 = vadd.f32 %v2046, %v2058
        %v2067 = vadd.f32 %v2047, %v2058
        %v2068 = vadd.f32 %v2048, %v2058
        %v2069 = vadd.f32 %v2049, %v2062
        %v2070 = vadd.f32 %v2050, %v2062
        %v2071 = vadd.f32 %v2051, %v2062
        %v2072 = vadd.f32 %v2052, %v2062
        %v2073 = vsel %vm1668, %v2065, -inf
        %2074 = vmax.xlane.f32.xlu0 %v2073
        %v2075 = vpop.xlane.xlu0 %2074
        %v2076 = vsel %vm1668, %v2066, -inf
        %2077 = vmax.xlane.f32.xlu0 %v2076
        %v2078 = vpop.xlane.xlu0 %2077
        %v2079 = vsel %vm1668, %v2067, -inf
        %2080 = vmax.xlane.f32.xlu0 %v2079
        %v2081 = vpop.xlane.xlu0 %2080
        %v2082 = vsel %vm1668, %v2068, -inf
        %2083 = vmax.xlane.f32.xlu0 %v2082
        %v2084 = vpop.xlane.xlu0 %2083
        %v2085 = vsel %vm1668, %v2069, -inf
        %2086 = vmax.xlane.f32.xlu0 %v2085
        %v2087 = vpop.xlane.xlu0 %2086
        %v2088 = vsel %vm1668, %v2070, -inf
        %2089 = vmax.xlane.f32.xlu0 %v2088
        %v2090 = vpop.xlane.xlu0 %2089
        %v2091 = vsel %vm1668, %v2071, -inf
        %2092 = vmax.xlane.f32.xlu0 %v2091
        %v2093 = vpop.xlane.xlu0 %2092
        %v2094 = vsel %vm1668, %v2072, -inf
        %2095 = vmax.xlane.f32.xlu0 %v2094
        %v2096 = vpop.xlane.xlu0 %2095
        %v2097 = vsub.f32 %v2065, %v2075
        %v2098 = vsub.f32 %v2066, %v2078
        %v2099 = vsub.f32 %v2067, %v2081
        %v2100 = vsub.f32 %v2068, %v2084
        %v2101 = vsub.f32 %v2069, %v2087
        %v2102 = vsub.f32 %v2070, %v2090
        %v2103 = vsub.f32 %v2071, %v2093
        %v2104 = vsub.f32 %v2072, %v2096
        %v2105 = vmul.f32 %v2097, 1.442695
        %v2106 = vpow.pop %v2105
        %v2107 = vmul.f32 %v2098, 1.442695
        %v2108 = vpow.pop %v2107
        %v2109 = vmul.f32 %v2099, 1.442695
        %v2110 = vpow.pop %v2109
        %v2111 = vmul.f32 %v2100, 1.442695
        %v2112 = vpow.pop %v2111
        %v2113 = vmul.f32 %v2101, 1.442695
        %v2114 = vpow.pop %v2113
        %v2115 = vmul.f32 %v2102, 1.442695
        %v2116 = vpow.pop %v2115
        %v2117 = vmul.f32 %v2103, 1.442695
        %v2118 = vpow.pop %v2117
        %v2119 = vmul.f32 %v2104, 1.442695
        %v2120 = vpow.pop %v2119
        %v2121 = vsel %vm1668, %v2106, 0.0
        %2122 = vadd.xlane.f32.xlu0 %v2121
        %v2123 = vpop.xlane.xlu0 %2122
        %v2124 = vsel %vm1668, %v2108, 0.0
        %2125 = vadd.xlane.f32.xlu0 %v2124
        %v2126 = vpop.xlane.xlu0 %2125
        %v2127 = vsel %vm1668, %v2110, 0.0
        %2128 = vadd.xlane.f32.xlu0 %v2127
        %v2129 = vpop.xlane.xlu0 %2128
        %v2130 = vsel %vm1668, %v2112, 0.0
        %2131 = vadd.xlane.f32.xlu0 %v2130
        %v2132 = vpop.xlane.xlu0 %2131
        %v2133 = vsel %vm1668, %v2114, 0.0
        %2134 = vadd.xlane.f32.xlu0 %v2133
        %v2135 = vpop.xlane.xlu0 %2134
        %v2136 = vsel %vm1668, %v2116, 0.0
        %2137 = vadd.xlane.f32.xlu0 %v2136
        %v2138 = vpop.xlane.xlu0 %2137
        %v2139 = vsel %vm1668, %v2118, 0.0
        %2140 = vadd.xlane.f32.xlu0 %v2139
        %v2141 = vpop.xlane.xlu0 %2140
        %v2142 = vsel %vm1668, %v2120, 0.0
        %2143 = vadd.xlane.f32.xlu0 %v2142
        %v2144 = vpop.xlane.xlu0 %2143
        %v2145 = vrcp.pop %v2123
        %v2146 = vrcp.pop %v2126
        %v2147 = vrcp.pop %v2129
        %v2148 = vrcp.pop %v2132
        %v2149 = vrcp.pop %v2135
        %v2150 = vrcp.pop %v2138
        %v2151 = vrcp.pop %v2141
        %v2152 = vrcp.pop %v2144
        %v2153 = vmul.f32 %v2106, %v2145
        %v2154 = vmul.f32 %v2108, %v2146
        %v2155 = vmul.f32 %v2110, %v2147
        %v2156 = vmul.f32 %v2112, %v2148
        %v2157 = vmul.f32 %v2114, %v2149
        %v2158 = vmul.f32 %v2116, %v2150
        %v2159 = vmul.f32 %v2118, %v2151
        %v2160 = vmul.f32 %v2120, %v2152
        %v2161 = vpack.c.bf16 %v2153, %v2153
        %v2162 = vpack.c.bf16 %v2154, %v2154
        %v2163 = vpack.c.bf16 %v2155, %v2155
        %v2164 = vpack.c.bf16 %v2156, %v2156
        %v2165 = vpack.c.bf16 %v2157, %v2157
        %v2166 = vpack.c.bf16 %v2158, %v2158
        %v2167 = vpack.c.bf16 %v2159, %v2159
        %v2168 = vpack.c.bf16 %v2160, %v2160
        %v2170 = vsel %vm1668, %v2161, 0
        %vm2172 = vcmask 1043456
        %v2174 = vsel %vm2172, %v1646, 0
        %2176 = vmatprep.subr.bf16.mxu0 0
        %2177 = vmatpush1.bf16.msra.mxu0 %v2174
        %2178 = vmatprep.subr.bf16.mxu0 0
        %2179 = vmatpush1.bf16.msra.mxu0 0
        %2180 = vmatprep.subr.bf16.mxu0 0
        %2181 = vmatpush1.bf16.msra.mxu0 0
        %2182 = vmatprep.subr.bf16.mxu0 0
        %2183 = vmatpush1.bf16.msra.mxu0 0
        %2184 = vmatprep.subr.bf16.mxu0 0
        %2185 = vmatpush1.bf16.msra.mxu0 0
        %2186 = vmatprep.subr.bf16.mxu0 0
        %2187 = vmatpush1.bf16.msra.mxu0 0
        %2188 = vmatprep.subr.bf16.mxu0 0
        %2189 = vmatpush1.bf16.msra.mxu0 0
        %2190 = vmatprep.subr.bf16.mxu0 0
        %2191 = vmatpush1.bf16.msra.mxu0 0
        %2192 = vmatprep.subr.bf16.mxu0 0
        %2193 = vmatpush1.bf16.msra.mxu0 0
        %2194 = vmatprep.subr.bf16.mxu0 0
        %2195 = vmatpush1.bf16.msra.mxu0 0
        %2196 = vmatprep.subr.bf16.mxu0 0
        %2197 = vmatpush1.bf16.msra.mxu0 0
        %2198 = vmatprep.subr.bf16.mxu0 0
        %2199 = vmatpush1.bf16.msra.mxu0 0
        %2200 = vmatprep.subr.bf16.mxu0 0
        %2201 = vmatpush1.bf16.msra.mxu0 0
        %2202 = vmatprep.subr.bf16.mxu0 0
        %2203 = vmatpush1.bf16.msra.mxu0 0
        %2204 = vmatprep.subr.bf16.mxu0 0
        %2205 = vmatpush1.bf16.msra.mxu0 0
        %2206 = vmatprep.subr.bf16.mxu0 0
        %2207 = vmatpush1.bf16.msra.mxu0 0
        %2208 = vmatprep.mubr.bf16.mxu0 0
        %2209 = vmatmul.mubr.bf16.gmra.mrb[0].mxu0 %v2170
        %v2210 = vpop.f32.mrb[0].mxu0
        %v2211 = vadd.f32 0.0, %v2210
        %v2212 = vpop.f32.mrb[0].mxu0
        %v2213 = vpop.f32.mrb[0].mxu0
        %v2214 = vpop.f32.mrb[0].mxu0
        %2215 = vdwg.mxu0
        %v2217 = vsel %vm1668, %v2162, 0
        %v2220 = vsel %vm2172, %v1649, 0
        %2222 = vmatprep.subr.bf16.mxu0 0
        %2223 = vmatpush1.bf16.msra.mxu0 %v2220
        %2224 = vmatprep.subr.bf16.mxu0 0
        %2225 = vmatpush1.bf16.msra.mxu0 0
        %2226 = vmatprep.subr.bf16.mxu0 0
        %2227 = vmatpush1.bf16.msra.mxu0 0
        %2228 = vmatprep.subr.bf16.mxu0 0
        %2229 = vmatpush1.bf16.msra.mxu0 0
        %2230 = vmatprep.subr.bf16.mxu0 0
        %2231 = vmatpush1.bf16.msra.mxu0 0
        %2232 = vmatprep.subr.bf16.mxu0 0
        %2233 = vmatpush1.bf16.msra.mxu0 0
        %2234 = vmatprep.subr.bf16.mxu0 0
        %2235 = vmatpush1.bf16.msra.mxu0 0
        %2236 = vmatprep.subr.bf16.mxu0 0
        %2237 = vmatpush1.bf16.msra.mxu0 0
        %2238 = vmatprep.subr.bf16.mxu0 0
        %2239 = vmatpush1.bf16.msra.mxu0 0
        %2240 = vmatprep.subr.bf16.mxu0 0
        %2241 = vmatpush1.bf16.msra.mxu0 0
        %2242 = vmatprep.subr.bf16.mxu0 0
        %2243 = vmatpush1.bf16.msra.mxu0 0
        %2244 = vmatprep.subr.bf16.mxu0 0
        %2245 = vmatpush1.bf16.msra.mxu0 0
        %2246 = vmatprep.subr.bf16.mxu0 0
        %2247 = vmatpush1.bf16.msra.mxu0 0
        %2248 = vmatprep.subr.bf16.mxu0 0
        %2249 = vmatpush1.bf16.msra.mxu0 0
        %2250 = vmatprep.subr.bf16.mxu0 0
        %2251 = vmatpush1.bf16.msra.mxu0 0
        %2252 = vmatprep.subr.bf16.mxu0 0
        %2253 = vmatpush1.bf16.msra.mxu0 0
        %2254 = vmatprep.mubr.bf16.mxu0 0
        %2255 = vmatmul.mubr.bf16.gmra.mrb[0].mxu0 %v2217
        %v2256 = vpop.f32.mrb[0].mxu0
        %v2257 = vadd.f32 0.0, %v2256
        %v2258 = vpop.f32.mrb[0].mxu0
        %v2259 = vpop.f32.mrb[0].mxu0
        %v2260 = vpop.f32.mrb[0].mxu0
        %2261 = vdwg.mxu0
        %v2263 = vsel %vm1668, %v2163, 0
        %v2266 = vsel %vm2172, %v1652, 0
        %2268 = vmatprep.subr.bf16.mxu0 0
        %2269 = vmatpush1.bf16.msra.mxu0 %v2266
        %2270 = vmatprep.subr.bf16.mxu0 0
        %2271 = vmatpush1.bf16.msra.mxu0 0
        %2272 = vmatprep.subr.bf16.mxu0 0
        %2273 = vmatpush1.bf16.msra.mxu0 0
        %2274 = vmatprep.subr.bf16.mxu0 0
        %2275 = vmatpush1.bf16.msra.mxu0 0
        %2276 = vmatprep.subr.bf16.mxu0 0
        %2277 = vmatpush1.bf16.msra.mxu0 0
        %2278 = vmatprep.subr.bf16.mxu0 0
        %2279 = vmatpush1.bf16.msra.mxu0 0
        %2280 = vmatprep.subr.bf16.mxu0 0
        %2281 = vmatpush1.bf16.msra.mxu0 0
        %2282 = vmatprep.subr.bf16.mxu0 0
        %2283 = vmatpush1.bf16.msra.mxu0 0
        %2284 = vmatprep.subr.bf16.mxu0 0
        %2285 = vmatpush1.bf16.msra.mxu0 0
        %2286 = vmatprep.subr.bf16.mxu0 0
        %2287 = vmatpush1.bf16.msra.mxu0 0
        %2288 = vmatprep.subr.bf16.mxu0 0
        %2289 = vmatpush1.bf16.msra.mxu0 0
        %2290 = vmatprep.subr.bf16.mxu0 0
        %2291 = vmatpush1.bf16.msra.mxu0 0
        %2292 = vmatprep.subr.bf16.mxu0 0
        %2293 = vmatpush1.bf16.msra.mxu0 0
        %2294 = vmatprep.subr.bf16.mxu0 0
        %2295 = vmatpush1.bf16.msra.mxu0 0
        %2296 = vmatprep.subr.bf16.mxu0 0
        %2297 = vmatpush1.bf16.msra.mxu0 0
        %2298 = vmatprep.subr.bf16.mxu0 0
        %2299 = vmatpush1.bf16.msra.mxu0 0
        %2300 = vmatprep.mubr.bf16.mxu0 0
        %2301 = vmatmul.mubr.bf16.gmra.mrb[0].mxu0 %v2263
        %v2302 = vpop.f32.mrb[0].mxu0
        %v2303 = vadd.f32 0.0, %v2302
        %v2304 = vpop.f32.mrb[0].mxu0
        %v2305 = vpop.f32.mrb[0].mxu0
        %v2306 = vpop.f32.mrb[0].mxu0
        %2307 = vdwg.mxu0
        %v2309 = vsel %vm1668, %v2164, 0
        %v2312 = vsel %vm2172, %v1655, 0
        %2314 = vmatprep.subr.bf16.mxu0 0
        %2315 = vmatpush1.bf16.msra.mxu0 %v2312
        %2316 = vmatprep.subr.bf16.mxu0 0
        %2317 = vmatpush1.bf16.msra.mxu0 0
        %2318 = vmatprep.subr.bf16.mxu0 0
        %2319 = vmatpush1.bf16.msra.mxu0 0
        %2320 = vmatprep.subr.bf16.mxu0 0
        %2321 = vmatpush1.bf16.msra.mxu0 0
        %2322 = vmatprep.subr.bf16.mxu0 0
        %2323 = vmatpush1.bf16.msra.mxu0 0
        %2324 = vmatprep.subr.bf16.mxu0 0
        %2325 = vmatpush1.bf16.msra.mxu0 0
        %2326 = vmatprep.subr.bf16.mxu0 0
        %2327 = vmatpush1.bf16.msra.mxu0 0
        %2328 = vmatprep.subr.bf16.mxu0 0
        %2329 = vmatpush1.bf16.msra.mxu0 0
        %2330 = vmatprep.subr.bf16.mxu0 0
        %2331 = vmatpush1.bf16.msra.mxu0 0
        %2332 = vmatprep.subr.bf16.mxu0 0
        %2333 = vmatpush1.bf16.msra.mxu0 0
        %2334 = vmatprep.subr.bf16.mxu0 0
        %2335 = vmatpush1.bf16.msra.mxu0 0
        %2336 = vmatprep.subr.bf16.mxu0 0
        %2337 = vmatpush1.bf16.msra.mxu0 0
        %2338 = vmatprep.subr.bf16.mxu0 0
        %2339 = vmatpush1.bf16.msra.mxu0 0
        %2340 = vmatprep.subr.bf16.mxu0 0
        %2341 = vmatpush1.bf16.msra.mxu0 0
        %2342 = vmatprep.subr.bf16.mxu0 0
        %2343 = vmatpush1.bf16.msra.mxu0 0
        %2344 = vmatprep.subr.bf16.mxu0 0
        %2345 = vmatpush1.bf16.msra.mxu0 0
        %2346 = vmatprep.mubr.bf16.mxu0 0
        %2347 = vmatmul.mubr.bf16.gmra.mrb[0].mxu0 %v2309
        %v2348 = vpop.f32.mrb[0].mxu0
        %v2349 = vadd.f32 0.0, %v2348
        %v2350 = vpop.f32.mrb[0].mxu0
        %v2351 = vpop.f32.mrb[0].mxu0
        %v2352 = vpop.f32.mrb[0].mxu0
        %2353 = vdwg.mxu0
        %v2355 = vsel %vm1668, %v2165, 0
        %v2358 = vsel %vm2172, %v1658, 0
        %2360 = vmatprep.subr.bf16.mxu0 0
        %2361 = vmatpush1.bf16.msra.mxu0 %v2358
        %2362 = vmatprep.subr.bf16.mxu0 0
        %2363 = vmatpush1.bf16.msra.mxu0 0
        %2364 = vmatprep.subr.bf16.mxu0 0
        %2365 = vmatpush1.bf16.msra.mxu0 0
        %2366 = vmatprep.subr.bf16.mxu0 0
        %2367 = vmatpush1.bf16.msra.mxu0 0
        %2368 = vmatprep.subr.bf16.mxu0 0
        %2369 = vmatpush1.bf16.msra.mxu0 0
        %2370 = vmatprep.subr.bf16.mxu0 0
        %2371 = vmatpush1.bf16.msra.mxu0 0
        %2372 = vmatprep.subr.bf16.mxu0 0
        %2373 = vmatpush1.bf16.msra.mxu0 0
        %2374 = vmatprep.subr.bf16.mxu0 0
        %2375 = vmatpush1.bf16.msra.mxu0 0
        %2376 = vmatprep.subr.bf16.mxu0 0
        %2377 = vmatpush1.bf16.msra.mxu0 0
        %2378 = vmatprep.subr.bf16.mxu0 0
        %2379 = vmatpush1.bf16.msra.mxu0 0
        %2380 = vmatprep.subr.bf16.mxu0 0
        %2381 = vmatpush1.bf16.msra.mxu0 0
        %2382 = vmatprep.subr.bf16.mxu0 0
        %2383 = vmatpush1.bf16.msra.mxu0 0
        %2384 = vmatprep.subr.bf16.mxu0 0
        %2385 = vmatpush1.bf16.msra.mxu0 0
        %2386 = vmatprep.subr.bf16.mxu0 0
        %2387 = vmatpush1.bf16.msra.mxu0 0
        %2388 = vmatprep.subr.bf16.mxu0 0
        %2389 = vmatpush1.bf16.msra.mxu0 0
        %2390 = vmatprep.subr.bf16.mxu0 0
        %2391 = vmatpush1.bf16.msra.mxu0 0
        %2392 = vmatprep.mubr.bf16.mxu0 0
        %2393 = vmatmul.mubr.bf16.gmra.mrb[0].mxu0 %v2355
        %v2394 = vpop.f32.mrb[0].mxu0
        %v2395 = vadd.f32 0.0, %v2394
        %v2396 = vpop.f32.mrb[0].mxu0
        %v2397 = vpop.f32.mrb[0].mxu0
        %v2398 = vpop.f32.mrb[0].mxu0
        %2399 = vdwg.mxu0
        %v2401 = vsel %vm1668, %v2166, 0
        %v2404 = vsel %vm2172, %v1661, 0
        %2406 = vmatprep.subr.bf16.mxu0 0
        %2407 = vmatpush1.bf16.msra.mxu0 %v2404
        %2408 = vmatprep.subr.bf16.mxu0 0
        %2409 = vmatpush1.bf16.msra.mxu0 0
        %2410 = vmatprep.subr.bf16.mxu0 0
        %2411 = vmatpush1.bf16.msra.mxu0 0
        %2412 = vmatprep.subr.bf16.mxu0 0
        %2413 = vmatpush1.bf16.msra.mxu0 0
        %2414 = vmatprep.subr.bf16.mxu0 0
        %2415 = vmatpush1.bf16.msra.mxu0 0
        %2416 = vmatprep.subr.bf16.mxu0 0
        %2417 = vmatpush1.bf16.msra.mxu0 0
        %2418 = vmatprep.subr.bf16.mxu0 0
        %2419 = vmatpush1.bf16.msra.mxu0 0
        %2420 = vmatprep.subr.bf16.mxu0 0
        %2421 = vmatpush1.bf16.msra.mxu0 0
        %2422 = vmatprep.subr.bf16.mxu0 0
        %2423 = vmatpush1.bf16.msra.mxu0 0
        %2424 = vmatprep.subr.bf16.mxu0 0
        %2425 = vmatpush1.bf16.msra.mxu0 0
        %2426 = vmatprep.subr.bf16.mxu0 0
        %2427 = vmatpush1.bf16.msra.mxu0 0
        %2428 = vmatprep.subr.bf16.mxu0 0
        %2429 = vmatpush1.bf16.msra.mxu0 0
        %2430 = vmatprep.subr.bf16.mxu0 0
        %2431 = vmatpush1.bf16.msra.mxu0 0
        %2432 = vmatprep.subr.bf16.mxu0 0
        %2433 = vmatpush1.bf16.msra.mxu0 0
        %2434 = vmatprep.subr.bf16.mxu0 0
        %2435 = vmatpush1.bf16.msra.mxu0 0
        %2436 = vmatprep.subr.bf16.mxu0 0
        %2437 = vmatpush1.bf16.msra.mxu0 0
        %2438 = vmatprep.mubr.bf16.mxu0 0
        %2439 = vmatmul.mubr.bf16.gmra.mrb[0].mxu0 %v2401
        %v2440 = vpop.f32.mrb[0].mxu0
        %v2441 = vadd.f32 0.0, %v2440
        %v2442 = vpop.f32.mrb[0].mxu0
        %v2443 = vpop.f32.mrb[0].mxu0
        %v2444 = vpop.f32.mrb[0].mxu0
        %2445 = vdwg.mxu0
        %v2447 = vsel %vm1668, %v2167, 0
        %v2450 = vsel %vm2172, %v1664, 0
        %2452 = vmatprep.subr.bf16.mxu0 0
        %2453 = vmatpush1.bf16.msra.mxu0 %v2450
        %2454 = vmatprep.subr.bf16.mxu0 0
        %2455 = vmatpush1.bf16.msra.mxu0 0
        %2456 = vmatprep.subr.bf16.mxu0 0
        %2457 = vmatpush1.bf16.msra.mxu0 0
        %2458 = vmatprep.subr.bf16.mxu0 0
        %2459 = vmatpush1.bf16.msra.mxu0 0
        %2460 = vmatprep.subr.bf16.mxu0 0
        %2461 = vmatpush1.bf16.msra.mxu0 0
        %2462 = vmatprep.subr.bf16.mxu0 0
        %2463 = vmatpush1.bf16.msra.mxu0 0
        %2464 = vmatprep.subr.bf16.mxu0 0
        %2465 = vmatpush1.bf16.msra.mxu0 0
        %2466 = vmatprep.subr.bf16.mxu0 0
        %2467 = vmatpush1.bf16.msra.mxu0 0
        %2468 = vmatprep.subr.bf16.mxu0 0
        %2469 = vmatpush1.bf16.msra.mxu0 0
        %2470 = vmatprep.subr.bf16.mxu0 0
        %2471 = vmatpush1.bf16.msra.mxu0 0
        %2472 = vmatprep.subr.bf16.mxu0 0
        %2473 = vmatpush1.bf16.msra.mxu0 0
        %2474 = vmatprep.subr.bf16.mxu0 0
        %2475 = vmatpush1.bf16.msra.mxu0 0
        %2476 = vmatprep.subr.bf16.mxu0 0
        %2477 = vmatpush1.bf16.msra.mxu0 0
        %2478 = vmatprep.subr.bf16.mxu0 0
        %2479 = vmatpush1.bf16.msra.mxu0 0
        %2480 = vmatprep.subr.bf16.mxu0 0
        %2481 = vmatpush1.bf16.msra.mxu0 0
        %2482 = vmatprep.subr.bf16.mxu0 0
        %2483 = vmatpush1.bf16.msra.mxu0 0
        %2484 = vmatprep.mubr.bf16.mxu0 0
        %2485 = vmatmul.mubr.bf16.gmra.mrb[0].mxu0 %v2447
        %v2486 = vpop.f32.mrb[0].mxu0
        %v2487 = vadd.f32 0.0, %v2486
        %v2488 = vpop.f32.mrb[0].mxu0
        %v2489 = vpop.f32.mrb[0].mxu0
        %v2490 = vpop.f32.mrb[0].mxu0
        %2491 = vdwg.mxu0
        %v2493 = vsel %vm1668, %v2168, 0
        %v2496 = vsel %vm2172, %v1667, 0
        %2498 = vmatprep.subr.bf16.mxu0 0
        %2499 = vmatpush1.bf16.msra.mxu0 %v2496
        %2500 = vmatprep.subr.bf16.mxu0 0
        %2501 = vmatpush1.bf16.msra.mxu0 0
        %2502 = vmatprep.subr.bf16.mxu0 0
        %2503 = vmatpush1.bf16.msra.mxu0 0
        %2504 = vmatprep.subr.bf16.mxu0 0
        %2505 = vmatpush1.bf16.msra.mxu0 0
        %2506 = vmatprep.subr.bf16.mxu0 0
        %2507 = vmatpush1.bf16.msra.mxu0 0
        %2508 = vmatprep.subr.bf16.mxu0 0
        %2509 = vmatpush1.bf16.msra.mxu0 0
        %2510 = vmatprep.subr.bf16.mxu0 0
        %2511 = vmatpush1.bf16.msra.mxu0 0
        %2512 = vmatprep.subr.bf16.mxu0 0
        %2513 = vmatpush1.bf16.msra.mxu0 0
        %2514 = vmatprep.subr.bf16.mxu0 0
        %2515 = vmatpush1.bf16.msra.mxu0 0
        %2516 = vmatprep.subr.bf16.mxu0 0
        %2517 = vmatpush1.bf16.msra.mxu0 0
        %2518 = vmatprep.subr.bf16.mxu0 0
        %2519 = vmatpush1.bf16.msra.mxu0 0
        %2520 = vmatprep.subr.bf16.mxu0 0
        %2521 = vmatpush1.bf16.msra.mxu0 0
        %2522 = vmatprep.subr.bf16.mxu0 0
        %2523 = vmatpush1.bf16.msra.mxu0 0
        %2524 = vmatprep.subr.bf16.mxu0 0
        %2525 = vmatpush1.bf16.msra.mxu0 0
        %2526 = vmatprep.subr.bf16.mxu0 0
        %2527 = vmatpush1.bf16.msra.mxu0 0
        %2528 = vmatprep.subr.bf16.mxu0 0
        %2529 = vmatpush1.bf16.msra.mxu0 0
        %2530 = vmatprep.mubr.bf16.mxu0 0
        %2531 = vmatmul.mubr.bf16.gmra.mrb[0].mxu0 %v2493
        %v2532 = vpop.f32.mrb[0].mxu0
        %v2533 = vadd.f32 0.0, %v2532
        %v2534 = vpop.f32.mrb[0].mxu0
        %v2535 = vpop.f32.mrb[0].mxu0
        %v2536 = vpop.f32.mrb[0].mxu0
        %2537 = vdwg.mxu0
        %v2538 = vld [vmem:[%s684] sm:$0x1]
        %v2539 = vld [vmem:[%s684 + $0x1] sm:$0x1]
        %v2540 = vsub.f32 1.0, %v2538
        %v2541 = vsub.f32 1.0, %v2539
        %v2544 = vlaneseq
        %v2545 = vshrl.u32 %v2544, 7
        %v2546 = vsub.s32 0, %v2545
        %v2547 = vrot.slane %v2540, %v2546
        %v2548 = vlaneseq
        %v2549 = vshrl.u32 %v2548, 7
        %v2550 = vsub.s32 0, %v2549
        %v2551 = vrot.slane %v2541, %v2550
        %2552 = vset.pattern.permute.xlu0 0
        %2553 = vperm.xlu0 %2552, %v2547
        %v2554 = vpop.permute.xlu0 %2553
        %2556 = vset.pattern.permute.xlu0 0
        %2557 = vperm.xlu0 %2556, %v2551
        %v2558 = vpop.permute.xlu0 %2557
        %v2560 = vmul.f32 %v2211, %v2554
        %v2561 = vmul.f32 %v2257, %v2554
        %v2562 = vmul.f32 %v2303, %v2554
        %v2563 = vmul.f32 %v2349, %v2554
        %v2564 = vmul.f32 %v2395, %v2558
        %v2565 = vmul.f32 %v2441, %v2558
        %v2566 = vmul.f32 %v2487, %v2558
        %v2567 = vmul.f32 %v2533, %v2558
        %v2568 = vcombine.low %v2560, %v2562
        %v2569 = vcombine.high %v2560, %v2562
        %v2571 = vunpack.c.l.s4 1983009808
        %v2572 = vunpack.c.0.s8 %v2571
        %v2573 = vlaneseq
        %v2574 = vshrl.u32 %v2573, 7
        %v2575 = vsub.s32 %v2572, %v2574
        %v2576 = vrot.slane %v2568, %v2575
        %v2578 = vunpack.c.l.s4 1983009808
        %v2579 = vunpack.c.0.s8 %v2578
        %v2580 = vlaneseq
        %v2581 = vshrl.u32 %v2580, 7
        %v2582 = vsub.s32 %v2579, %v2581
        %v2583 = vrot.slane %v2569, %v2582
        %v2584 = vcombine.low %v2561, %v2563
        %v2585 = vcombine.high %v2561, %v2563
        %v2587 = vunpack.c.l.s4 1983009808
        %v2588 = vunpack.c.0.s8 %v2587
        %v2589 = vlaneseq
        %v2590 = vshrl.u32 %v2589, 7
        %v2591 = vsub.s32 %v2588, %v2590
        %v2592 = vrot.slane %v2584, %v2591
        %v2594 = vunpack.c.l.s4 1983009808
        %v2595 = vunpack.c.0.s8 %v2594
        %v2596 = vlaneseq
        %v2597 = vshrl.u32 %v2596, 7
        %v2598 = vsub.s32 %v2595, %v2597
        %v2599 = vrot.slane %v2585, %v2598
        %v2600 = vcombine.low %v2576, %v2592
        %v2601 = vcombine.high %v2576, %v2592
        %v2603 = vunpack.c.l.s4 1934713408
        %v2604 = vunpack.c.0.s8 %v2603
        %v2605 = vlaneseq
        %v2606 = vshrl.u32 %v2605, 7
        %v2607 = vsub.s32 %v2604, %v2606
        %v2608 = vrot.slane %v2600, %v2607
        %v2610 = vunpack.c.l.s4 1934713408
        %v2611 = vunpack.c.0.s8 %v2610
        %v2612 = vlaneseq
        %v2613 = vshrl.u32 %v2612, 7
        %v2614 = vsub.s32 %v2611, %v2613
        %v2615 = vrot.slane %v2601, %v2614
        %v2616 = vcombine.low %v2583, %v2599
        %v2617 = vcombine.high %v2583, %v2599
        %v2619 = vunpack.c.l.s4 1934713408
        %v2620 = vunpack.c.0.s8 %v2619
        %v2621 = vlaneseq
        %v2622 = vshrl.u32 %v2621, 7
        %v2623 = vsub.s32 %v2620, %v2622
        %v2624 = vrot.slane %v2616, %v2623
        %v2626 = vunpack.c.l.s4 1934713408
        %v2627 = vunpack.c.0.s8 %v2626
        %v2628 = vlaneseq
        %v2629 = vshrl.u32 %v2628, 7
        %v2630 = vsub.s32 %v2627, %v2629
        %v2631 = vrot.slane %v2617, %v2630
        %v2632 = vcombine.high %v2608, 0.0
        %v2633 = vcombine.high %v2615, 0.0
        %v2634 = vcombine.high %v2624, 0.0
        %v2635 = vcombine.high %v2631, 0.0
        %v2636 = vcombine.low %v2564, %v2566
        %v2637 = vcombine.high %v2564, %v2566
        %v2639 = vunpack.c.l.s4 1983009808
        %v2640 = vunpack.c.0.s8 %v2639
        %v2641 = vlaneseq
        %v2642 = vshrl.u32 %v2641, 7
        %v2643 = vsub.s32 %v2640, %v2642
        %v2644 = vrot.slane %v2636, %v2643
        %v2646 = vunpack.c.l.s4 1983009808
        %v2647 = vunpack.c.0.s8 %v2646
        %v2648 = vlaneseq
        %v2649 = vshrl.u32 %v2648, 7
        %v2650 = vsub.s32 %v2647, %v2649
        %v2651 = vrot.slane %v2637, %v2650
        %v2652 = vcombine.low %v2565, %v2567
        %v2653 = vcombine.high %v2565, %v2567
        %v2655 = vunpack.c.l.s4 1983009808
        %v2656 = vunpack.c.0.s8 %v2655
        %v2657 = vlaneseq
        %v2658 = vshrl.u32 %v2657, 7
        %v2659 = vsub.s32 %v2656, %v2658
        %v2660 = vrot.slane %v2652, %v2659
        %v2662 = vunpack.c.l.s4 1983009808
        %v2663 = vunpack.c.0.s8 %v2662
        %v2664 = vlaneseq
        %v2665 = vshrl.u32 %v2664, 7
        %v2666 = vsub.s32 %v2663, %v2665
        %v2667 = vrot.slane %v2653, %v2666
        %v2668 = vcombine.low %v2644, %v2660
        %v2669 = vcombine.high %v2644, %v2660
        %v2671 = vunpack.c.l.s4 1934713408
        %v2672 = vunpack.c.0.s8 %v2671
        %v2673 = vlaneseq
        %v2674 = vshrl.u32 %v2673, 7
        %v2675 = vsub.s32 %v2672, %v2674
        %v2676 = vrot.slane %v2668, %v2675
        %v2678 = vunpack.c.l.s4 1934713408
        %v2679 = vunpack.c.0.s8 %v2678
        %v2680 = vlaneseq
        %v2681 = vshrl.u32 %v2680, 7
        %v2682 = vsub.s32 %v2679, %v2681
        %v2683 = vrot.slane %v2669, %v2682
        %v2684 = vcombine.low %v2651, %v2667
        %v2685 = vcombine.high %v2651, %v2667
        %v2687 = vunpack.c.l.s4 1934713408
        %v2688 = vunpack.c.0.s8 %v2687
        %v2689 = vlaneseq
        %v2690 = vshrl.u32 %v2689, 7
        %v2691 = vsub.s32 %v2688, %v2690
        %v2692 = vrot.slane %v2684, %v2691
        %v2694 = vunpack.c.l.s4 1934713408
        %v2695 = vunpack.c.0.s8 %v2694
        %v2696 = vlaneseq
        %v2697 = vshrl.u32 %v2696, 7
        %v2698 = vsub.s32 %v2695, %v2697
        %v2699 = vrot.slane %v2685, %v2698
        %v2700 = vcombine.high %v2676, 0.0
        %v2701 = vcombine.high %v2683, 0.0
        %v2702 = vcombine.high %v2692, 0.0
        %v2703 = vcombine.high %v2699, 0.0
        %v2704 = vcombine.low %v2608, %v2615
        %v2706 = vunpack.c.l.s4 1983009808
        %v2707 = vunpack.c.0.s8 %v2706
        %v2708 = vlaneseq
        %v2709 = vshrl.u32 %v2708, 7
        %v2710 = vsub.s32 %v2707, %v2709
        %v2711 = vrot.slane %v2704, %v2710
        %v2712 = vcombine.low %v2632, %v2633
        %v2714 = vunpack.c.l.s4 1983009808
        %v2715 = vunpack.c.0.s8 %v2714
        %v2716 = vlaneseq
        %v2717 = vshrl.u32 %v2716, 7
        %v2718 = vsub.s32 %v2715, %v2717
        %v2719 = vrot.slane %v2712, %v2718
        %v2720 = vcombine.low %v2624, %v2631
        %v2722 = vunpack.c.l.s4 1983009808
        %v2723 = vunpack.c.0.s8 %v2722
        %v2724 = vlaneseq
        %v2725 = vshrl.u32 %v2724, 7
        %v2726 = vsub.s32 %v2723, %v2725
        %v2727 = vrot.slane %v2720, %v2726
        %v2728 = vcombine.low %v2634, %v2635
        %v2730 = vunpack.c.l.s4 1983009808
        %v2731 = vunpack.c.0.s8 %v2730
        %v2732 = vlaneseq
        %v2733 = vshrl.u32 %v2732, 7
        %v2734 = vsub.s32 %v2731, %v2733
        %v2735 = vrot.slane %v2728, %v2734
        %v2736 = vcombine.low %v2711, %v2719
        %v2737 = vcombine.high %v2711, %v2719
        %v2739 = vunpack.c.l.s4 1934713408
        %v2740 = vunpack.c.0.s8 %v2739
        %v2741 = vlaneseq
        %v2742 = vshrl.u32 %v2741, 7
        %v2743 = vsub.s32 %v2740, %v2742
        %v2744 = vrot.slane %v2736, %v2743
        %v2746 = vunpack.c.l.s4 1934713408
        %v2747 = vunpack.c.0.s8 %v2746
        %v2748 = vlaneseq
        %v2749 = vshrl.u32 %v2748, 7
        %v2750 = vsub.s32 %v2747, %v2749
        %v2751 = vrot.slane %v2737, %v2750
        %v2752 = vcombine.low %v2727, %v2735
        %v2753 = vcombine.high %v2727, %v2735
        %v2755 = vunpack.c.l.s4 1934713408
        %v2756 = vunpack.c.0.s8 %v2755
        %v2757 = vlaneseq
        %v2758 = vshrl.u32 %v2757, 7
        %v2759 = vsub.s32 %v2756, %v2758
        %v2760 = vrot.slane %v2752, %v2759
        %v2762 = vunpack.c.l.s4 1934713408
        %v2763 = vunpack.c.0.s8 %v2762
        %v2764 = vlaneseq
        %v2765 = vshrl.u32 %v2764, 7
        %v2766 = vsub.s32 %v2763, %v2765
        %v2767 = vrot.slane %v2753, %v2766
        %v2768 = vcombine.low %v2744, %v2760
        %v2769 = vcombine.high %v2744, %v2760
        %v2770 = vcombine.low %v2751, %v2767
        %v2771 = vcombine.high %v2751, %v2767
        %v2772 = vcombine.low %v2676, %v2683
        %v2774 = vunpack.c.l.s4 1983009808
        %v2775 = vunpack.c.0.s8 %v2774
        %v2776 = vlaneseq
        %v2777 = vshrl.u32 %v2776, 7
        %v2778 = vsub.s32 %v2775, %v2777
        %v2779 = vrot.slane %v2772, %v2778
        %v2780 = vcombine.low %v2700, %v2701
        %v2782 = vunpack.c.l.s4 1983009808
        %v2783 = vunpack.c.0.s8 %v2782
        %v2784 = vlaneseq
        %v2785 = vshrl.u32 %v2784, 7
        %v2786 = vsub.s32 %v2783, %v2785
        %v2787 = vrot.slane %v2780, %v2786
        %v2788 = vcombine.low %v2692, %v2699
        %v2790 = vunpack.c.l.s4 1983009808
        %v2791 = vunpack.c.0.s8 %v2790
        %v2792 = vlaneseq
        %v2793 = vshrl.u32 %v2792, 7
        %v2794 = vsub.s32 %v2791, %v2793
        %v2795 = vrot.slane %v2788, %v2794
        %v2796 = vcombine.low %v2702, %v2703
        %v2798 = vunpack.c.l.s4 1983009808
        %v2799 = vunpack.c.0.s8 %v2798
        %v2800 = vlaneseq
        %v2801 = vshrl.u32 %v2800, 7
        %v2802 = vsub.s32 %v2799, %v2801
        %v2803 = vrot.slane %v2796, %v2802
        %v2804 = vcombine.low %v2779, %v2787
        %v2805 = vcombine.high %v2779, %v2787
        %v2807 = vunpack.c.l.s4 1934713408
        %v2808 = vunpack.c.0.s8 %v2807
        %v2809 = vlaneseq
        %v2810 = vshrl.u32 %v2809, 7
        %v2811 = vsub.s32 %v2808, %v2810
        %v2812 = vrot.slane %v2804, %v2811
        %v2814 = vunpack.c.l.s4 1934713408
        %v2815 = vunpack.c.0.s8 %v2814
        %v2816 = vlaneseq
        %v2817 = vshrl.u32 %v2816, 7
        %v2818 = vsub.s32 %v2815, %v2817
        %v2819 = vrot.slane %v2805, %v2818
        %v2820 = vcombine.low %v2795, %v2803
        %v2821 = vcombine.high %v2795, %v2803
        %v2823 = vunpack.c.l.s4 1934713408
        %v2824 = vunpack.c.0.s8 %v2823
        %v2825 = vlaneseq
        %v2826 = vshrl.u32 %v2825, 7
        %v2827 = vsub.s32 %v2824, %v2826
        %v2828 = vrot.slane %v2820, %v2827
        %v2830 = vunpack.c.l.s4 1934713408
        %v2831 = vunpack.c.0.s8 %v2830
        %v2832 = vlaneseq
        %v2833 = vshrl.u32 %v2832, 7
        %v2834 = vsub.s32 %v2831, %v2833
        %v2835 = vrot.slane %v2821, %v2834
        %v2836 = vcombine.low %v2812, %v2828
        %v2837 = vcombine.high %v2812, %v2828
        %v2838 = vcombine.low %v2819, %v2835
        %v2839 = vcombine.high %v2819, %v2835
        %2842 = vrot.lane.b32.xlu0 %v2769, 8
        %v2843 = vpop.permute.xlu0 %2842
        %2844 = vrot.lane.b32.xlu0 %v2837, 8
        %v2845 = vpop.permute.xlu0 %2844
        %2850 = vrot.lane.b32.xlu0 %v2770, 16
        %v2851 = vpop.permute.xlu0 %2850
        %2852 = vrot.lane.b32.xlu0 %v2838, 16
        %v2853 = vpop.permute.xlu0 %2852
        %2858 = vrot.lane.b32.xlu0 %v2771, 24
        %v2859 = vpop.permute.xlu0 %2858
        %2860 = vrot.lane.b32.xlu0 %v2839, 24
        %v2861 = vpop.permute.xlu0 %2860
        %v2864 = vsel %vm1668, %v2768, %v2843
        %v2865 = vsel %vm1668, %v2836, %v2845
        %vm2866 = vcmask 130048
        %v2867 = vsel %vm2866, %v2864, %v2851
        %v2868 = vsel %vm2866, %v2865, %v2853
        %vm2869 = vcmask 195584
        %v2870 = vsel %vm2869, %v2867, %v2859
        %v2871 = vsel %vm2869, %v2868, %v2861
        %v2872 = vpack.c.bf16 %v2871, %v2870
        %v2873 = vld [vmem:[%s698] sm:$0xf]
        %v2874 = vld [vmem:[%s698 + $0x4] sm:$0xf]
        %v2875 = vld [vmem:[%s698 + $0x8] sm:$0xf]
        %v2876 = vld [vmem:[%s698 + $0xc] sm:$0xf]
        %v2877 = vld [vmem:[%s701] sm:$0x1]
        %v2879 = vlaneseq
        %v2880 = vshrl.u32 %v2879, 7
        %v2881 = vsub.s32 0, %v2880
        %v2882 = vrot.slane %v2877, %v2881
        %v2888 = vunpack.c.l.b16 %v2873
        %v2889 = vunpack.c.l.b16 %v2874
        %v2890 = vunpack.c.l.b16 %v2875
        %v2891 = vunpack.c.l.b16 %v2876
        %v2892 = vpack.c.b16 %v2889, %v2888
        %v2893 = vpack.c.b16 %v2891, %v2890
        %v2897 = vsel %vm767, %v2872, 0
        %2899 = vmatprep.subr.bf16.mxu0 0
        %2900 = vmatpush1.bf16.msra.mxu0 %v2892
        %2901 = vmatprep.subr.bf16.mxu0 0
        %2902 = vmatpush1.bf16.msra.mxu0 %v2893
        %2903 = vmatprep.subr.bf16.mxu0 0
        %2904 = vmatpush1.bf16.msra.mxu0 0
        %2905 = vmatprep.subr.bf16.mxu0 0
        %2906 = vmatpush1.bf16.msra.mxu0 0
        %2907 = vmatprep.subr.bf16.mxu0 0
        %2908 = vmatpush1.bf16.msra.mxu0 0
        %2909 = vmatprep.subr.bf16.mxu0 0
        %2910 = vmatpush1.bf16.msra.mxu0 0
        %2911 = vmatprep.subr.bf16.mxu0 0
        %2912 = vmatpush1.bf16.msra.mxu0 0
        %2913 = vmatprep.subr.bf16.mxu0 0
        %2914 = vmatpush1.bf16.msra.mxu0 0
        %2915 = vmatprep.subr.bf16.mxu0 0
        %2916 = vmatpush1.bf16.msra.mxu0 0
        %2917 = vmatprep.subr.bf16.mxu0 0
        %2918 = vmatpush1.bf16.msra.mxu0 0
        %2919 = vmatprep.subr.bf16.mxu0 0
        %2920 = vmatpush1.bf16.msra.mxu0 0
        %2921 = vmatprep.subr.bf16.mxu0 0
        %2922 = vmatpush1.bf16.msra.mxu0 0
        %2923 = vmatprep.subr.bf16.mxu0 0
        %2924 = vmatpush1.bf16.msra.mxu0 0
        %2925 = vmatprep.subr.bf16.mxu0 0
        %2926 = vmatpush1.bf16.msra.mxu0 0
        %2927 = vmatprep.subr.bf16.mxu0 0
        %2928 = vmatpush1.bf16.msra.mxu0 0
        %2929 = vmatprep.subr.bf16.mxu0 0
        %2930 = vmatpush1.bf16.msra.mxu0 0
        %2931 = vmatprep.mubr.bf16.mxu0 0
        %2932 = vmatmul.mubr.bf16.gmra.mrb[0].mxu0 %v2897
        %v2933 = vpop.f32.mrb[0].mxu0
        %v2934 = vadd.f32 %v2882, %v2933
        %v2935 = vpop.f32.mrb[0].mxu0
        %v2936 = vpop.f32.mrb[0].mxu0
        %v2937 = vadd.f32 %v2882, %v2936
        %v2938 = vpop.f32.mrb[0].mxu0
        %2939 = vdwg.mxu0
        %v2940 = vadd.f32 %v741, %v2934
        %v2941 = vadd.f32 %v742, %v2937
        %v2942 = vld [vmem:[%s704] sm:$0x1]
        %v2943 = vld [vmem:[%s707] sm:$0x1]
        %v2944 = vsel %vm767, %v2940, 0.0
        %2945 = vadd.xlane.f32.xlu0 %v2944
        %v2946 = vpop.xlane.xlu0 %2945
        %v2947 = vsel %vm767, %v2941, 0.0
        %2948 = vadd.xlane.f32.xlu0 %v2947
        %v2949 = vpop.xlane.xlu0 %2948
        %v2950 = vrcp.pop 32.0
        %v2951 = vmul.f32 %v2946, %v2950
        %v2952 = vmul.f32 %v2949, %v2950
        %v2953 = vsub.f32 %v2940, %v2951
        %v2954 = vsub.f32 %v2941, %v2952
        %v2955 = vmul.f32 %v2953, %v2953
        %v2956 = vmul.f32 %v2954, %v2954
        %v2957 = vsel %vm767, %v2955, 0.0
        %2958 = vadd.xlane.f32.xlu0 %v2957
        %v2959 = vpop.xlane.xlu0 %2958
        %v2960 = vsel %vm767, %v2956, 0.0
        %2961 = vadd.xlane.f32.xlu0 %v2960
        %v2962 = vpop.xlane.xlu0 %2961
        %v2963 = vmul.f32 %v2959, %v2950
        %v2964 = vmul.f32 %v2962, %v2950
        %v2965 = vadd.f32 %v2963, 1e-05
        %v2966 = vadd.f32 %v2964, 1e-05
        %v2967 = vrsqrt.pop %v2965
        %v2968 = vrsqrt.pop %v2966
        %v2969 = vmul.f32 %v2953, %v2967
        %v2970 = vmul.f32 %v2954, %v2968
        %v2972 = vlaneseq
        %v2973 = vshrl.u32 %v2972, 7
        %v2974 = vsub.s32 0, %v2973
        %v2975 = vrot.slane %v2942, %v2974
        %v2977 = vmul.f32 %v2969, %v2975
        %v2978 = vmul.f32 %v2970, %v2975
        %v2980 = vlaneseq
        %v2981 = vshrl.u32 %v2980, 7
        %v2982 = vsub.s32 0, %v2981
        %v2983 = vrot.slane %v2943, %v2982
        %v2985 = vadd.f32 %v2977, %v2983
        %v2986 = vadd.f32 %v2978, %v2983
        %v2987 = vpack.c.bf16 %v2986, %v2985
        %v2988 = vld [vmem:[%s712] sm:$0xf]
        %v2989 = vld [vmem:[%s712 + $0x4] sm:$0xf]
        %v2990 = vld [vmem:[%s712 + $0x8] sm:$0xf]
        %v2991 = vld [vmem:[%s712 + $0xc] sm:$0xf]
        %v2992 = vld [vmem:[%s715] sm:$0x1]
        %v2994 = vlaneseq
        %v2995 = vshrl.u32 %v2994, 7
        %v2996 = vsub.s32 0, %v2995
        %v2997 = vrot.slane %v2992, %v2996
        %v3003 = vunpack.c.l.b16 %v2988
        %v3004 = vunpack.c.l.b16 %v2989
        %v3005 = vunpack.c.l.b16 %v2990
        %v3006 = vunpack.c.l.b16 %v2991
        %v3007 = vpack.c.b16 %v3004, %v3003
        %v3008 = vpack.c.b16 %v3006, %v3005
        %v3012 = vsel %vm767, %v2987, 0
        %3014 = vmatprep.subr.bf16.mxu0 0
        %3015 = vmatpush1.bf16.msra.mxu0 %v3007
        %3016 = vmatprep.subr.bf16.mxu0 0
        %3017 = vmatpush1.bf16.msra.mxu0 %v3008
        %3018 = vmatprep.subr.bf16.mxu0 0
        %3019 = vmatpush1.bf16.msra.mxu0 0
        %3020 = vmatprep.subr.bf16.mxu0 0
        %3021 = vmatpush1.bf16.msra.mxu0 0
        %3022 = vmatprep.subr.bf16.mxu0 0
        %3023 = vmatpush1.bf16.msra.mxu0 0
        %3024 = vmatprep.subr.bf16.mxu0 0
        %3025 = vmatpush1.bf16.msra.mxu0 0
        %3026 = vmatprep.subr.bf16.mxu0 0
        %3027 = vmatpush1.bf16.msra.mxu0 0
        %3028 = vmatprep.subr.bf16.mxu0 0
        %3029 = vmatpush1.bf16.msra.mxu0 0
        %3030 = vmatprep.subr.bf16.mxu0 0
        %3031 = vmatpush1.bf16.msra.mxu0 0
        %3032 = vmatprep.subr.bf16.mxu0 0
        %3033 = vmatpush1.bf16.msra.mxu0 0
        %3034 = vmatprep.subr.bf16.mxu0 0
        %3035 = vmatpush1.bf16.msra.mxu0 0
        %3036 = vmatprep.subr.bf16.mxu0 0
        %3037 = vmatpush1.bf16.msra.mxu0 0
        %3038 = vmatprep.subr.bf16.mxu0 0
        %3039 = vmatpush1.bf16.msra.mxu0 0
        %3040 = vmatprep.subr.bf16.mxu0 0
        %3041 = vmatpush1.bf16.msra.mxu0 0
        %3042 = vmatprep.subr.bf16.mxu0 0
        %3043 = vmatpush1.bf16.msra.mxu0 0
        %3044 = vmatprep.subr.bf16.mxu0 0
        %3045 = vmatpush1.bf16.msra.mxu0 0
        %3046 = vmatprep.mubr.bf16.mxu0 0
        %3047 = vmatmul.mubr.bf16.gmra.mrb[0].mxu0 %v3012
        %v3048 = vpop.f32.mrb[0].mxu0
        %v3049 = vadd.f32 %v2997, %v3048
        %v3050 = vpop.f32.mrb[0].mxu0
        %v3051 = vpop.f32.mrb[0].mxu0
        %v3052 = vadd.f32 %v2997, %v3051
        %v3053 = vpop.f32.mrb[0].mxu0
        %3054 = vdwg.mxu0
        %v3055 = vmul.f32 %v3049, 0.5
        %v3056 = vmul.f32 %v3052, 0.5
        %v3057 = vmul.f32 %v3049, %v3049
        %v3058 = vmul.f32 %v3052, %v3052
        %v3059 = vmul.f32 %v3049, %v3057
        %v3060 = vmul.f32 %v3052, %v3058
        %v3061 = vmul.f32 %v3059, 0.044715
        %v3062 = vmul.f32 %v3060, 0.044715
        %v3063 = vadd.f32 %v3049, %v3061
        %v3064 = vadd.f32 %v3052, %v3062
        %v3065 = vmul.f32 %v3063, 0.7978846
        %v3066 = vmul.f32 %v3064, 0.7978846
        %v3067 = vtanh.pop %v3065
        %v3068 = vtanh.pop %v3066
        %v3069 = vadd.f32 %v3067, 1.0
        %v3070 = vadd.f32 %v3068, 1.0
        %v3071 = vmul.f32 %v3055, %v3069
        %v3072 = vmul.f32 %v3056, %v3070
        %v3073 = vpack.c.bf16 %v3072, %v3071
        %v3074 = vld [vmem:[%s720] sm:$0xf]
        %v3075 = vld [vmem:[%s720 + $0x4] sm:$0xf]
        %v3076 = vld [vmem:[%s720 + $0x8] sm:$0xf]
        %v3077 = vld [vmem:[%s720 + $0xc] sm:$0xf]
        %v3078 = vld [vmem:[%s720 + $0x10] sm:$0xf]
        %v3079 = vld [vmem:[%s720 + $0x14] sm:$0xf]
        %v3080 = vld [vmem:[%s720 + $0x18] sm:$0xf]
        %v3081 = vld [vmem:[%s720 + $0x1c] sm:$0xf]
        %v3082 = vld [vmem:[%s720 + $0x20] sm:$0xf]
        %v3083 = vld [vmem:[%s720 + $0x24] sm:$0xf]
        %v3084 = vld [vmem:[%s720 + $0x28] sm:$0xf]
        %v3085 = vld [vmem:[%s720 + $0x2c] sm:$0xf]
        %v3086 = vld [vmem:[%s720 + $0x30] sm:$0xf]
        %v3087 = vld [vmem:[%s720 + $0x34] sm:$0xf]
        %v3088 = vld [vmem:[%s720 + $0x38] sm:$0xf]
        %v3089 = vld [vmem:[%s720 + $0x3c] sm:$0xf]
        %v3090 = vld [vmem:[%s723] sm:$0x1]
        %v3092 = vlaneseq
        %v3093 = vshrl.u32 %v3092, 7
        %v3094 = vsub.s32 0, %v3093
        %v3095 = vrot.slane %v3090, %v3094
        %v3113 = vunpack.c.l.b16 %v3074
        %v3114 = vunpack.c.l.b16 %v3075
        %v3115 = vunpack.c.l.b16 %v3076
        %v3116 = vunpack.c.l.b16 %v3077
        %v3117 = vunpack.c.l.b16 %v3078
        %v3118 = vunpack.c.l.b16 %v3079
        %v3119 = vunpack.c.l.b16 %v3080
        %v3120 = vunpack.c.l.b16 %v3081
        %v3121 = vunpack.c.l.b16 %v3082
        %v3122 = vunpack.c.l.b16 %v3083
        %v3123 = vunpack.c.l.b16 %v3084
        %v3124 = vunpack.c.l.b16 %v3085
        %v3125 = vunpack.c.l.b16 %v3086
        %v3126 = vunpack.c.l.b16 %v3087
        %v3127 = vunpack.c.l.b16 %v3088
        %v3128 = vunpack.c.l.b16 %v3089
        %v3129 = vpack.c.b16 %v3114, %v3113
        %v3130 = vpack.c.b16 %v3116, %v3115
        %v3131 = vpack.c.b16 %v3118, %v3117
        %v3132 = vpack.c.b16 %v3120, %v3119
        %v3133 = vpack.c.b16 %v3122, %v3121
        %v3134 = vpack.c.b16 %v3124, %v3123
        %v3135 = vpack.c.b16 %v3126, %v3125
        %v3136 = vpack.c.b16 %v3128, %v3127
        %3145 = vmatprep.subr.bf16.mxu0 0
        %3146 = vmatpush1.bf16.msra.mxu0 %v3129
        %3147 = vmatprep.subr.bf16.mxu0 0
        %3148 = vmatpush1.bf16.msra.mxu0 %v3130
        %3149 = vmatprep.subr.bf16.mxu0 0
        %3150 = vmatpush1.bf16.msra.mxu0 %v3131
        %3151 = vmatprep.subr.bf16.mxu0 0
        %3152 = vmatpush1.bf16.msra.mxu0 %v3132
        %3153 = vmatprep.subr.bf16.mxu0 0
        %3154 = vmatpush1.bf16.msra.mxu0 %v3133
        %3155 = vmatprep.subr.bf16.mxu0 0
        %3156 = vmatpush1.bf16.msra.mxu0 %v3134
        %3157 = vmatprep.subr.bf16.mxu0 0
        %3158 = vmatpush1.bf16.msra.mxu0 %v3135
        %3159 = vmatprep.subr.bf16.mxu0 0
        %3160 = vmatpush1.bf16.msra.mxu0 %v3136
        %3161 = vmatprep.subr.bf16.mxu0 0
        %3162 = vmatpush1.bf16.msra.mxu0 0
        %3163 = vmatprep.subr.bf16.mxu0 0
        %3164 = vmatpush1.bf16.msra.mxu0 0
        %3165 = vmatprep.subr.bf16.mxu0 0
        %3166 = vmatpush1.bf16.msra.mxu0 0
        %3167 = vmatprep.subr.bf16.mxu0 0
        %3168 = vmatpush1.bf16.msra.mxu0 0
        %3169 = vmatprep.subr.bf16.mxu0 0
        %3170 = vmatpush1.bf16.msra.mxu0 0
        %3171 = vmatprep.subr.bf16.mxu0 0
        %3172 = vmatpush1.bf16.msra.mxu0 0
        %3173 = vmatprep.subr.bf16.mxu0 0
        %3174 = vmatpush1.bf16.msra.mxu0 0
        %3175 = vmatprep.subr.bf16.mxu0 0
        %3176 = vmatpush1.bf16.msra.mxu0 0
        %3177 = vmatprep.mubr.bf16.mxu0 0
        %3178 = vmatmul.mubr.bf16.gmra.mrb[0].mxu0 %v3073
        %v3179 = vpop.f32.mrb[0].mxu0
        %v3180 = vadd.f32 %v3095, %v3179
        %v3181 = vpop.f32.mrb[0].mxu0
        %v3182 = vpop.f32.mrb[0].mxu0
        %v3183 = vadd.f32 %v3095, %v3182
        %v3184 = vpop.f32.mrb[0].mxu0
        %3185 = vdwg.mxu0
        %v3186 = vadd.f32 %v2985, %v3180
        %v3187 = vadd.f32 %v2986, %v3183
        %v3188 = vld [vmem:[%s726] sm:$0x1]
        %v3189 = vld [vmem:[%s729] sm:$0x1]
        %v3190 = vsel %vm767, %v3186, 0.0
        %3191 = vadd.xlane.f32.xlu0 %v3190
        %v3192 = vpop.xlane.xlu0 %3191
        %v3193 = vsel %vm767, %v3187, 0.0
        %3194 = vadd.xlane.f32.xlu0 %v3193
        %v3195 = vpop.xlane.xlu0 %3194
        %v3196 = vmul.f32 %v3192, %v2950
        %v3197 = vmul.f32 %v3195, %v2950
        %v3198 = vsub.f32 %v3186, %v3196
        %v3199 = vsub.f32 %v3187, %v3197
        %v3200 = vmul.f32 %v3198, %v3198
        %v3201 = vmul.f32 %v3199, %v3199
        %v3202 = vsel %vm767, %v3200, 0.0
        %3203 = vadd.xlane.f32.xlu0 %v3202
        %v3204 = vpop.xlane.xlu0 %3203
        %v3205 = vsel %vm767, %v3201, 0.0
        %3206 = vadd.xlane.f32.xlu0 %v3205
        %v3207 = vpop.xlane.xlu0 %3206
        %v3208 = vmul.f32 %v3204, %v2950
        %v3209 = vmul.f32 %v3207, %v2950
        %v3210 = vadd.f32 %v3208, 1e-05
        %v3211 = vadd.f32 %v3209, 1e-05
        %v3212 = vrsqrt.pop %v3210
        %v3213 = vrsqrt.pop %v3211
        %v3214 = vmul.f32 %v3198, %v3212
        %v3215 = vmul.f32 %v3199, %v3213
        %v3217 = vlaneseq
        %v3218 = vshrl.u32 %v3217, 7
        %v3219 = vsub.s32 0, %v3218
        %v3220 = vrot.slane %v3188, %v3219
        %v3222 = vmul.f32 %v3214, %v3220
        %v3223 = vmul.f32 %v3215, %v3220
        %v3225 = vlaneseq
        %v3226 = vshrl.u32 %v3225, 7
        %v3227 = vsub.s32 0, %v3226
        %v3228 = vrot.slane %v3189, %v3227
        %v3230 = vadd.f32 %v3222, %v3228
        %v3231 = vadd.f32 %v3223, %v3228
        %3232 = vst.msk [vmem:[#allocation2] sm:$0xff] %vm767, %v3230
        %3233 = vst.msk [vmem:[#allocation2 + $0x8] sm:$0xff] %vm767, %v3231
        %p3234 = scmp.eq.s32.totalorder %s32, 1
        // Predicated region
        $region85: #{tpu_custom_call.1} parent=79 // pred_check
          %p3235 = pneg %p3234
        $region86: #{tpu_custom_call.1} parent=79 // pred_check_branch
          %3237 = sbr.rel (%p3235) target = $region88
        $region87: #{tpu_custom_call.1} parent=79 // pred_region
          %3238 = vst.msk [vmem:[#allocation3] sm:$0xff] %vm767, %v3230
          %3239 = vst.msk [vmem:[#allocation3 + $0x8] sm:$0xff] %vm767, %v3231
        $region88: #{tpu_custom_call.1} parent=79 // pred_fallthru
          _
        // Predicated region
        $region89: #{tpu_custom_call.1} parent=79 // pred_check
          %p3240 = pneg %p447
        $region90: #{tpu_custom_call.1} parent=79 // pred_check_branch
          %3242 = sbr.rel (%p3240) target = $region92
        $region91: #{tpu_custom_call.1} parent=79 // pred_region
          %s3243 = smul.u32 2, %s31
          %s3245 = ssub.s32 256, 256
          %3246 = vsyncadd [#allocation4], %s3245
          %s3247 = smul.addr %s3243, 128
          %s3248 = scalar_lea.hbm %s15, %s3247
          %s3249 = sshll.u32 [#allocation3], 4
          %s3250 = int_to_ptr.vmem [resolvable:$true] %s3249
          %3255 = dma.vmem_to_hbm [thread:$0]  %s3250, 256, %s3248, [#allocation4], 128, 128, 8
        $region92: #{tpu_custom_call.1} parent=79 // pred_fallthru
          _
        // Predicated region
        $region93: #{tpu_custom_call.1} parent=79 // pred_check
          %p3256 = pneg %p447
        $region94: #{tpu_custom_call.1} parent=79 // pred_check_branch
          %3258 = sbr.rel (%p3256) target = $region96
        $region95: #{tpu_custom_call.1} parent=79 // pred_region
          %3259 = dma.done [#allocation4], 256
        $region96: #{tpu_custom_call.1} parent=79 // pred_fallthru
          _
      $region80: #{tpu_custom_call.1} parent=5 // pred_fallthru
        _
      %p3260 = scmp.le.s32.totalorder 2, %s22
      // Predicated region
      $region97: #{tpu_custom_call.1} parent=5 // pred_check
        %p3261 = pneg %p3260
      $region98: #{tpu_custom_call.1} parent=5 // pred_check_branch
        %3263 = sbr.rel (%p3261) target = $region100
      $region99: #{tpu_custom_call.1} parent=5 // pred_region
        %s3264 = ssub.s32 %s22, 2
      $region100: #{tpu_custom_call.1} parent=5 // pred_fallthru
        _
    $region6: #{tpu_custom_call.1} parent=1 // loop_footer
      %s26 = sadd.s32 1, %s22
    $region7: #{tpu_custom_call.1} parent=1 // loop_footer_branch
      %21 = sbr.rel target = $region3
    $region8: #{tpu_custom_call.1} parent=1 // loop_exit
      _
    %3265 = vsyncpa [#allocation4], 1
    %s3266 = scalar_lea.sflag [#allocation4], 1
    %3267 = vsyncpa %s3266, 1

</llo_original>
